<compile_context>
chip_gen: v7x
topology: tpu7x:2x2x1
jax: 0.10.0
libtpu: 0.0.40
codegen_flags: <defaults>
</compile_context>

<pallas_src>
import numpy as np
import jax
import jax.numpy as jnp
from jax.experimental import pallas as pl
from jax.experimental.pallas import tpu as pltpu

BN_EPS = 1e-5


def _round_up(x, m):
    return ((x + m - 1) // m) * m


def _vmem_limit_bytes():
    # Generation-aware VMEM budget: ~48 MiB on v7x (64 MiB physical), ~100 MiB on v5e/v6e.
    try:
        cap = int(pltpu.get_tpu_info().vmem_capacity_bytes)
    except Exception:
        cap = 64 * 1024 * 1024
    return int(max(32 * 1024 * 1024, min(cap - 16 * 1024 * 1024, 100 * 1024 * 1024)))


def _pick_tile(mp, halo, cinp, coutp, vmem_limit):
    """Largest lane tile (multiple of 128) such that (a) the +-halo window is covered by
    prev/cur/next neighbour blocks, (b) nt >= 2 so both v7x TensorCores get work on the
    single 'parallel' axis, (c) the double-buffered blocked operands fit the VMEM budget."""
    tm_min = max(128, _round_up(halo, 128))
    tm_split = _round_up(-(-mp // 2), 128)                       # keeps nt >= 2 when mp > 128
    per_lane = 2 * (3 * cinp * 2 + coutp * 2 + coutp * 4 + 8)    # double-buffered bytes / lane
    tm_budget = max(128, ((vmem_limit // 2) // per_lane) // 128 * 128)
    return max(tm_min, min(tm_split, tm_budget, 16384))


def _make_layout(N, D, H, W, cinp_max, coutp_max, vmem_limit):
    Dp, Hp, Wp = D + 2, H + 2, W + 2
    mp = N * Dp * Hp * Wp                      # flattened zero-padded volume
    halo = Hp * Wp + Wp + 1                    # max |flat offset| of a 3x3x3 tap
    tm = _pick_tile(mp, halo, cinp_max, coutp_max, vmem_limit)
    assert tm >= halo
    nt = -(-mp // tm)
    lm = nt * tm
    offs = [(kd - 1) * Hp * Wp + (kh - 1) * Wp + (kw - 1)
            for kd in range(3) for kh in range(3) for kw in range(3)]
    # Interior mask: 1 on real output voxels, 0 on spatial padding and tail lanes.
    m = np.zeros((N, Dp, Hp, Wp), np.float32)
    m[:, 1:-1, 1:-1, 1:-1] = 1.0
    mask = np.zeros((1, lm), np.float32)
    mask[0, :mp] = m.reshape(-1)
    return dict(N=N, D=D, H=H, W=W, Dp=Dp, Hp=Hp, Wp=Wp, mp=mp, tm=tm, nt=nt, lm=lm,
                offs=offs, mask=jnp.asarray(mask), count=float(N * D * H * W))


# ---------------------------------------------------------------------------
# Kernel 1: in-kernel im2col (27 static lane-offset slices of [prev|cur|next]) +
# folded-K matmul + per-tile BN partial sums. Output is lane-dense in the flat
# spatial axis; padding lanes are zeroed via the mask.
# ---------------------------------------------------------------------------
def _conv_kernel(offs, tm):
    def kernel(xp_ref, xc_ref, xn_ref, w_ref, m_ref, y_ref, s1_ref, s2_ref):
        xcat = jnp.concatenate([xp_ref[...], xc_ref[...], xn_ref[...]], axis=-1)   # (Cinp, 3*TM)
        patch = jnp.concatenate([xcat[:, tm + o: 2 * tm + o] for o in offs], axis=0)  # (27*Cinp, TM)
        # Memory-bound at these channel counts: only Coutp(<=16) MXU output rows are live.
        y = jnp.dot(w_ref[...], patch, preferred_element_type=jnp.float32)          # (Coutp, TM)
        y = y * m_ref[...]                         # zero spatial-padding / tail lanes
        y_ref[...] = y.astype(y_ref.dtype)         # bf16 inter-pass activation
        s1_ref[...] = jnp.broadcast_to(jnp.sum(y, axis=-1, keepdims=True), s1_ref.shape)
        s2_ref[...] = jnp.broadcast_to(jnp.sum(y * y, axis=-1, keepdims=True), s2_ref.shape)
    return kernel


# ---------------------------------------------------------------------------
# Kernel 2: BatchNorm (folded to per-channel scale/shift) + ReLU + interior mask.
# ---------------------------------------------------------------------------
def _bn_relu_kernel(y_ref, a_ref, c_ref, m_ref, o_ref):
    y = y_ref[...].astype(jnp.float32)
    o = jnp.maximum(y * a_ref[...] + c_ref[...], 0.0) * m_ref[...]
    o_ref[...] = o.astype(o_ref.dtype)


# ---------------------------------------------------------------------------
# Conv3d(3x3x3, pad=1, no bias) + training-mode BatchNorm3d + ReLU, operating on the
# canonical padded-flat layout (C, LM). Output is in the same layout (masked), so it
# can feed the next conv directly.
# ---------------------------------------------------------------------------
def conv3d_bn_relu_flat(x, w, gamma, beta, lay, out_dtype, vmem_limit):
    cinp = x.shape[0]
    cout, cin = w.shape[0], w.shape[1]
    coutp = _round_up(cout, 16)                     # bf16 sublane tile is 16 rows

    # Fold the 27 taps into the contraction dim: (Coutp, 27*Cinp), tap-major / cin-minor.
    wk = jnp.transpose(w, (0, 2, 3, 4, 1)).reshape(cout, 27, cin)
    wk = jnp.pad(wk, ((0, coutp - cout), (0, 0), (0, cinp - cin)))
    wk = wk.reshape(coutp, 27 * cinp).astype(jnp.bfloat16)

    gam = jnp.pad(gamma.astype(jnp.float32), (0, coutp - cout))
    bet = jnp.pad(beta.astype(jnp.float32), (0, coutp - cout))

    tm, nt, lm = lay["tm"], lay["nt"], lay["lm"]
    mask, offs, count = lay["mask"], lay["offs"], lay["count"]

    y, s1, s2 = pl.pallas_call(
        _conv_kernel(offs, tm),
        out_shape=(
            jax.ShapeDtypeStruct((coutp, lm), jnp.bfloat16),
            jax.ShapeDtypeStruct((coutp, nt * 128), jnp.float32),
            jax.ShapeDtypeStruct((coutp, nt * 128), jnp.float32),
        ),
        grid_spec=pltpu.PrefetchScalarGridSpec(
            num_scalar_prefetch=0,
            grid=(nt,),
            in_specs=[
                pl.BlockSpec((cinp, tm), lambda i: (0, jnp.maximum(i - 1, 0))),        # prev halo
                pl.BlockSpec((cinp, tm), lambda i: (0, i)),                            # current
                pl.BlockSpec((cinp, tm), lambda i: (0, jnp.minimum(i + 1, nt - 1))),   # next halo
                pl.BlockSpec((coutp, 27 * cinp), lambda i: (0, 0)),                    # weights resident
                pl.BlockSpec((1, tm), lambda i: (0, i)),                               # interior mask
            ],
            out_specs=[
                pl.BlockSpec((coutp, tm), lambda i: (0, i)),
                pl.BlockSpec((coutp, 128), lambda i: (0, i)),
                pl.BlockSpec((coutp, 128), lambda i: (0, i)),
            ],
        ),
        compiler_params=pltpu.CompilerParams(
            dimension_semantics=("parallel",),
            vmem_limit_bytes=vmem_limit,
        ),
    )(x, x, x, wk, mask)

    # Finalize BN statistics (tiny per-channel vectors). Each tile's sum is broadcast
    # across 128 lanes, so a plain lane sum / 128 avoids any strided host-side gather.
    sum_y = jnp.sum(s1, axis=-1) / 128.0
    sum_y2 = jnp.sum(s2, axis=-1) / 128.0
    mean = sum_y / count
    var = jnp.maximum(sum_y2 / count - mean * mean, 0.0)      # biased variance (torch training mode)
    inv = jax.lax.rsqrt(var + BN_EPS)
    a = (gam * inv).reshape(coutp, 1)
    c = (bet - mean * gam * inv).reshape(coutp, 1)

    out = pl.pallas_call(
        _bn_relu_kernel,
        out_shape=jax.ShapeDtypeStruct((coutp, lm), out_dtype),
        grid_spec=pltpu.PrefetchScalarGridSpec(
            num_scalar_prefetch=0,
            grid=(nt,),
            in_specs=[
                pl.BlockSpec((coutp, tm), lambda i: (0, i)),
                pl.BlockSpec((coutp, 1), lambda i: (0, 0)),
                pl.BlockSpec((coutp, 1), lambda i: (0, 0)),
                pl.BlockSpec((1, tm), lambda i: (0, i)),
            ],
            out_specs=pl.BlockSpec((coutp, tm), lambda i: (0, i)),
        ),
        compiler_params=pltpu.CompilerParams(
            dimension_semantics=("parallel",),
            vmem_limit_bytes=vmem_limit,
        ),
    )(y, a, c, mask)
    # TODO(synk): fuse conv+stats and bn_relu of consecutive convs into one pallas_call
    # (stats finalized at a grid-axis boundary) to shave the remaining call overhead.
    return out


# ---------------------------------------------------------------------------
# Glue: gather-free trilinear 2x upsample (align_corners=True), faithful F.pad, concat,
# and the padded-flat layout build.
# ---------------------------------------------------------------------------
def _interp_matrix_2x_ac(in_size):
    out_size = 2 * in_size
    if in_size == 1:
        return jnp.ones((out_size, 1), jnp.float32)
    pos = np.arange(out_size, dtype=np.float64) * (in_size - 1) / (out_size - 1)
    lo = np.clip(np.floor(pos).astype(np.int64), 0, in_size - 1)
    hi = np.minimum(lo + 1, in_size - 1)
    whi = pos - lo
    m = np.zeros((out_size, in_size), dtype=np.float64)
    m[np.arange(out_size), lo] += 1.0 - whi
    m[np.arange(out_size), hi] += whi
    return jnp.asarray(m, dtype=jnp.float32)


def upsample_trilinear2x_ac(x):
    """x: (N, C, D, H, W). 2x trilinear, align_corners=True (as in the module), via
    static interpolation matrices (three small contractions, no gathers)."""
    N, C, D, H, W = x.shape
    x = jnp.einsum('od,ncdhw->ncohw', _interp_matrix_2x_ac(D), x)
    x = jnp.einsum('oh,ncdhw->ncdow', _interp_matrix_2x_ac(H), x)
    x = jnp.einsum('ow,ncdhw->ncdho', _interp_matrix_2x_ac(W), x)
    return x


def _to_canonical(t, lay):
    """(N, C, D, H, W) -> (C, LM) bf16 padded-flat layout (zeros in halo / tail lanes)."""
    C = t.shape[1]
    tp = jnp.pad(t.astype(jnp.bfloat16), ((0, 0), (0, 0), (1, 1), (1, 1), (1, 1)))
    tp = jnp.transpose(tp, (1, 0, 2, 3, 4)).reshape(C, lay["mp"])
    return jnp.pad(tp, ((0, 0), (0, lay["lm"] - lay["mp"])))


def multi_up_forward(params, x1, x2, x3, x4):
    """All tensors NCDHW (torch layout). Returns NCDHW float32."""
    x1u = upsample_trilinear2x_ac(x1)

    # Faithful to the source quirk: diffY/diffX come from the D/H dims of x2 vs x1,
    # but F.pad applies them to the last two torch dims (W gets diffX, H gets diffY).
    diffY = x2.shape[2] - x1u.shape[2]
    diffX = x2.shape[3] - x1u.shape[3]
    x1u = jnp.pad(
        x1u,
        ((0, 0), (0, 0), (0, 0),
         (diffY // 2, diffY - diffY // 2),
         (diffX // 2, diffX - diffX // 2)))

    pieces = [x4, x3, x2, x1u]                      # torch.cat([x4, x3, x2, x1], dim=1)
    N, _, D, H, W = pieces[0].shape

    cin = sum(int(p.shape[1]) for p in pieces)
    mid = int(params["w1"].shape[0])
    cout = int(params["w2"].shape[0])
    cinp = _round_up(cin, 16)
    vmem_limit = _vmem_limit_bytes()
    lay = _make_layout(N, D, H, W,
                       cinp_max=max(cinp, _round_up(mid, 16)),
                       coutp_max=_round_up(max(mid, cout), 16),
                       vmem_limit=vmem_limit)

    # bf16 concat in the canonical layout (halves HBM traffic of the conv1 input).
    x = jnp.concatenate([_to_canonical(p, lay) for p in pieces], axis=0)
    if cinp != cin:
        x = jnp.pad(x, ((0, cinp - cin), (0, 0)))

    # Conv bias is intentionally omitted: with training-mode BatchNorm directly after,
    # the per-channel bias is absorbed exactly by the batch mean (identical output).
    h = conv3d_bn_relu_flat(x, params["w1"], params["g1"], params["be1"],
                            lay, jnp.bfloat16, vmem_limit)       # bf16 intermediate
    h = conv3d_bn_relu_flat(h, params["w2"], params["g2"], params["be2"],
                            lay, jnp.float32, vmem_limit)

    # TODO(synk): for very large volumes (padded flat input >> VMEM-friendly), add
    # spatial halo tiling of the canonical layout instead of the prev/cur/next blocks.
    out = h[:cout, :lay["mp"]].reshape(cout, N, lay["Dp"], lay["Hp"], lay["Wp"])
    out = out[:, :, 1:-1, 1:-1, 1:-1]
    return jnp.transpose(out, (1, 0, 2, 3, 4))


# ---------------------------------------------------------------------------
# Deterministic parameter init (shapes per module __init__)
# ---------------------------------------------------------------------------
def init_conv_params(key, cin, cout):
    k1, k2 = jax.random.split(key)
    fan_in = cin * 27
    bound = 1.0 / (fan_in ** 0.5)
    w = jax.random.uniform(k1, (cout, cin, 3, 3, 3), jnp.float32, -bound, bound)
    b = jax.random.uniform(k2, (cout,), jnp.float32, -bound, bound)
    return w, b


if __name__ == "__main__":
    key = jax.random.PRNGKey(0)
    ks = jax.random.split(key, 6)

    in_channels, out_channels = 16, 8
    mid_channels = in_channels // 2                 # DoubleConv mid
    N = 2

    # NCDHW inputs: x1 is the coarse feature (upsampled 2x -> 8^3), skips are 8^3.
    x1 = jax.random.normal(ks[0], (N, 4, 4, 4, 4), jnp.float32)
    x2 = jax.random.normal(ks[1], (N, 4, 8, 8, 8), jnp.float32)
    x3 = jax.random.normal(ks[2], (N, 4, 8, 8, 8), jnp.float32)
    x4 = jax.random.normal(ks[3], (N, 4, 8, 8, 8), jnp.float32)

    w1, b1 = init_conv_params(ks[4], in_channels, mid_channels)
    w2, b2 = init_conv_params(ks[5], mid_channels, out_channels)
    params = dict(
        w1=w1, b1=b1,  # b1/b2 kept for interface parity; absorbed by training-mode BN
        g1=jnp.ones((mid_channels,), jnp.float32),
        be1=jnp.zeros((mid_channels,), jnp.float32),
        w2=w2, b2=b2,
        g2=jnp.ones((out_channels,), jnp.float32),
        be2=jnp.zeros((out_channels,), jnp.float32),
    )

    fwd = jax.jit(multi_up_forward)
    out = fwd(params, x1, x2, x3, x4)
    jax.block_until_ready(out)
    assert out.shape == (N, out_channels, 8, 8, 8)
    assert bool(jnp.all(jnp.isfinite(out)))
    print("KERNEL_OK")
</pallas_src>

<mosaic_0001>
module attributes {stable_mosaic.version = 11 : i64} {
  func.func @kernel(%arg0: i32, %arg1: memref<16x1024xbf16, #tpu.memory_space<vmem>>, %arg2: memref<16x1024xbf16, #tpu.memory_space<vmem>>, %arg3: memref<16x1024xbf16, #tpu.memory_space<vmem>>, %arg4: memref<16x432xbf16, #tpu.memory_space<vmem>>, %arg5: memref<1x1024xf32, #tpu.memory_space<vmem>>, %arg6: memref<16x1024xbf16, #tpu.memory_space<vmem>>, %arg7: memref<16x128xf32, #tpu.memory_space<vmem>>, %arg8: memref<16x128xf32, #tpu.memory_space<vmem>>) attributes {dimension_semantics = [#tpu.dimension_semantics<parallel>], iteration_bounds = array<i64: 2>, scalar_prefetch = 0 : i64, scratch_operands = 0 : i64, tpu.core_type = #tpu.core_type<tc>, window_params = [{transform_indices = @transform_0, window_bounds = array<i64: 16, 1024>}, {transform_indices = @transform_1, window_bounds = array<i64: 16, 1024>}, {transform_indices = @transform_2, window_bounds = array<i64: 16, 1024>}, {pipeline_mode = #tpu.pipeline_mode<synchronous>, transform_indices = @transform_3, window_bounds = array<i64: 16, 432>}, {transform_indices = @transform_4, window_bounds = array<i64: 1, 1024>}, {transform_indices = @transform_5, window_bounds = array<i64: 16, 1024>}, {transform_indices = @transform_6, window_bounds = array<i64: 16, 128>}, {transform_indices = @transform_7, window_bounds = array<i64: 16, 128>}]} {
    %c0 = arith.constant 0 : index
    %c0_0 = arith.constant 0 : index
    %0 = vector.load %arg1[%c0, %c0_0] : memref<16x1024xbf16, #tpu.memory_space<vmem>>, vector<16x1024xbf16>
    %c0_1 = arith.constant 0 : index
    %c0_2 = arith.constant 0 : index
    %1 = vector.load %arg2[%c0_1, %c0_2] : memref<16x1024xbf16, #tpu.memory_space<vmem>>, vector<16x1024xbf16>
    %c0_3 = arith.constant 0 : index
    %c0_4 = arith.constant 0 : index
    %2 = vector.load %arg3[%c0_3, %c0_4] : memref<16x1024xbf16, #tpu.memory_space<vmem>>, vector<16x1024xbf16>
    %3 = tpu.concatenate %0, %1, %2 in 1 : vector<16x1024xbf16>, vector<16x1024xbf16>, vector<16x1024xbf16> -> vector<16x3072xbf16>
    %4 = vector.extract_strided_slice %3 {offsets = [0, 913], sizes = [16, 1024], strides = [1, 1]} : vector<16x3072xbf16> to vector<16x1024xbf16>
    %5 = vector.extract_strided_slice %3 {offsets = [0, 914], sizes = [16, 1024], strides = [1, 1]} : vector<16x3072xbf16> to vector<16x1024xbf16>
    %6 = vector.extract_strided_slice %3 {offsets = [0, 915], sizes = [16, 1024], strides = [1, 1]} : vector<16x3072xbf16> to vector<16x1024xbf16>
    %7 = vector.extract_strided_slice %3 {offsets = [0, 923], sizes = [16, 1024], strides = [1, 1]} : vector<16x3072xbf16> to vector<16x1024xbf16>
    %8 = vector.extract_strided_slice %3 {offsets = [0, 924], sizes = [16, 1024], strides = [1, 1]} : vector<16x3072xbf16> to vector<16x1024xbf16>
    %9 = vector.extract_strided_slice %3 {offsets = [0, 925], sizes = [16, 1024], strides = [1, 1]} : vector<16x3072xbf16> to vector<16x1024xbf16>
    %10 = vector.extract_strided_slice %3 {offsets = [0, 933], sizes = [16, 1024], strides = [1, 1]} : vector<16x3072xbf16> to vector<16x1024xbf16>
    %11 = vector.extract_strided_slice %3 {offsets = [0, 934], sizes = [16, 1024], strides = [1, 1]} : vector<16x3072xbf16> to vector<16x1024xbf16>
    %12 = vector.extract_strided_slice %3 {offsets = [0, 935], sizes = [16, 1024], strides = [1, 1]} : vector<16x3072xbf16> to vector<16x1024xbf16>
    %13 = vector.extract_strided_slice %3 {offsets = [0, 1013], sizes = [16, 1024], strides = [1, 1]} : vector<16x3072xbf16> to vector<16x1024xbf16>
    %14 = vector.extract_strided_slice %3 {offsets = [0, 1014], sizes = [16, 1024], strides = [1, 1]} : vector<16x3072xbf16> to vector<16x1024xbf16>
    %15 = vector.extract_strided_slice %3 {offsets = [0, 1015], sizes = [16, 1024], strides = [1, 1]} : vector<16x3072xbf16> to vector<16x1024xbf16>
    %16 = vector.extract_strided_slice %3 {offsets = [0, 1023], sizes = [16, 1024], strides = [1, 1]} : vector<16x3072xbf16> to vector<16x1024xbf16>
    %17 = vector.extract_strided_slice %3 {offsets = [0, 1024], sizes = [16, 1024], strides = [1, 1]} : vector<16x3072xbf16> to vector<16x1024xbf16>
    %18 = vector.extract_strided_slice %3 {offsets = [0, 1025], sizes = [16, 1024], strides = [1, 1]} : vector<16x3072xbf16> to vector<16x1024xbf16>
    %19 = vector.extract_strided_slice %3 {offsets = [0, 1033], sizes = [16, 1024], strides = [1, 1]} : vector<16x3072xbf16> to vector<16x1024xbf16>
    %20 = vector.extract_strided_slice %3 {offsets = [0, 1034], sizes = [16, 1024], strides = [1, 1]} : vector<16x3072xbf16> to vector<16x1024xbf16>
    %21 = vector.extract_strided_slice %3 {offsets = [0, 1035], sizes = [16, 1024], strides = [1, 1]} : vector<16x3072xbf16> to vector<16x1024xbf16>
    %22 = vector.extract_strided_slice %3 {offsets = [0, 1113], sizes = [16, 1024], strides = [1, 1]} : vector<16x3072xbf16> to vector<16x1024xbf16>
    %23 = vector.extract_strided_slice %3 {offsets = [0, 1114], sizes = [16, 1024], strides = [1, 1]} : vector<16x3072xbf16> to vector<16x1024xbf16>
    %24 = vector.extract_strided_slice %3 {offsets = [0, 1115], sizes = [16, 1024], strides = [1, 1]} : vector<16x3072xbf16> to vector<16x1024xbf16>
    %25 = vector.extract_strided_slice %3 {offsets = [0, 1123], sizes = [16, 1024], strides = [1, 1]} : vector<16x3072xbf16> to vector<16x1024xbf16>
    %26 = vector.extract_strided_slice %3 {offsets = [0, 1124], sizes = [16, 1024], strides = [1, 1]} : vector<16x3072xbf16> to vector<16x1024xbf16>
    %27 = vector.extract_strided_slice %3 {offsets = [0, 1125], sizes = [16, 1024], strides = [1, 1]} : vector<16x3072xbf16> to vector<16x1024xbf16>
    %28 = vector.extract_strided_slice %3 {offsets = [0, 1133], sizes = [16, 1024], strides = [1, 1]} : vector<16x3072xbf16> to vector<16x1024xbf16>
    %29 = vector.extract_strided_slice %3 {offsets = [0, 1134], sizes = [16, 1024], strides = [1, 1]} : vector<16x3072xbf16> to vector<16x1024xbf16>
    %30 = vector.extract_strided_slice %3 {offsets = [0, 1135], sizes = [16, 1024], strides = [1, 1]} : vector<16x3072xbf16> to vector<16x1024xbf16>
    %31 = tpu.concatenate %4, %5, %6, %7, %8, %9, %10, %11, %12, %13, %14, %15, %16, %17, %18, %19 in 0 : vector<16x1024xbf16>, vector<16x1024xbf16>, vector<16x1024xbf16>, vector<16x1024xbf16>, vector<16x1024xbf16>, vector<16x1024xbf16>, vector<16x1024xbf16>, vector<16x1024xbf16>, vector<16x1024xbf16>, vector<16x1024xbf16>, vector<16x1024xbf16>, vector<16x1024xbf16>, vector<16x1024xbf16>, vector<16x1024xbf16>, vector<16x1024xbf16>, vector<16x1024xbf16> -> vector<256x1024xbf16>
    %32 = tpu.concatenate %20, %21, %22, %23, %24, %25, %26, %27, %28, %29, %30 in 0 : vector<16x1024xbf16>, vector<16x1024xbf16>, vector<16x1024xbf16>, vector<16x1024xbf16>, vector<16x1024xbf16>, vector<16x1024xbf16>, vector<16x1024xbf16>, vector<16x1024xbf16>, vector<16x1024xbf16>, vector<16x1024xbf16>, vector<16x1024xbf16> -> vector<176x1024xbf16>
    %33 = tpu.concatenate %31, %32 in 0 : vector<256x1024xbf16>, vector<176x1024xbf16> -> vector<432x1024xbf16>
    %c0_5 = arith.constant 0 : index
    %c0_6 = arith.constant 0 : index
    %34 = vector.load %arg4[%c0_5, %c0_6] : memref<16x432xbf16, #tpu.memory_space<vmem>>, vector<16x432xbf16>
    %cst = arith.constant dense<0.000000e+00> : vector<16x1024xf32>
    %35 = tpu.matmul %34, %33, %cst {dimension_numbers = #tpu.dot_dimension_numbers<[1], [0], [0], [1], [0, 0, 1, 1], [], []>} : vector<16x432xbf16>, vector<432x1024xbf16>, vector<16x1024xf32> -> vector<16x1024xf32>
    %c0_7 = arith.constant 0 : index
    %c0_8 = arith.constant 0 : index
    %36 = vector.load %arg5[%c0_7, %c0_8] : memref<1x1024xf32, #tpu.memory_space<vmem>>, vector<1x1024xf32>
    %37 = vector.broadcast %36 : vector<1x1024xf32> to vector<16x1024xf32>
    %38 = arith.mulf %35, %37 : vector<16x1024xf32>
    %39 = arith.truncf %38 : vector<16x1024xf32> to vector<16x1024xbf16>
    %c0_9 = arith.constant 0 : index
    %c0_10 = arith.constant 0 : index
    %40 = vector.load %arg6[%c0_9, %c0_10] : memref<16x1024xbf16, #tpu.memory_space<vmem>>, vector<16x1024xbf16>
    tpu.vector_store %arg6[%c0_9, %c0_10], %39 {strides = array<i32>} : memref<16x1024xbf16, #tpu.memory_space<vmem>>, vector<16x1024xbf16>,
    %cst_11 = arith.constant dense<0.000000e+00> : vector<16xf32>
    %41 = vector.multi_reduction <add>, %38, %cst_11 [1] : vector<16x1024xf32> to vector<16xf32>
    %42 = vector.shape_cast %41 : vector<16xf32> to vector<16x1xf32>
    %43 = vector.shape_cast %42 : vector<16x1xf32> to vector<16x1xf32>
    %44 = vector.broadcast %43 : vector<16x1xf32> to vector<16x128xf32>
    %c0_12 = arith.constant 0 : index
    %c0_13 = arith.constant 0 : index
    %45 = vector.load %arg7[%c0_12, %c0_13] : memref<16x128xf32, #tpu.memory_space<vmem>>, vector<16x128xf32>
    tpu.vector_store %arg7[%c0_12, %c0_13], %44 {strides = array<i32>} : memref<16x128xf32, #tpu.memory_space<vmem>>, vector<16x128xf32>,
    %46 = arith.mulf %38, %38 : vector<16x1024xf32>
    %cst_14 = arith.constant dense<0.000000e+00> : vector<16xf32>
    %47 = vector.multi_reduction <add>, %46, %cst_14 [1] : vector<16x1024xf32> to vector<16xf32>
    %48 = vector.shape_cast %47 : vector<16xf32> to vector<16x1xf32>
    %49 = vector.shape_cast %48 : vector<16x1xf32> to vector<16x1xf32>
    %50 = vector.broadcast %49 : vector<16x1xf32> to vector<16x128xf32>
    %c0_15 = arith.constant 0 : index
    %c0_16 = arith.constant 0 : index
    %51 = vector.load %arg8[%c0_15, %c0_16] : memref<16x128xf32, #tpu.memory_space<vmem>>, vector<16x128xf32>
    tpu.vector_store %arg8[%c0_15, %c0_16], %50 {strides = array<i32>} : memref<16x128xf32, #tpu.memory_space<vmem>>, vector<16x128xf32>,
    return
  }
  func.func @transform_0(%arg0: i32) -> (i32, i32) {
    %c1_i32 = arith.constant 1 : i32
    %0 = arith.subi %arg0, %c1_i32 : i32
    %c0_i32 = arith.constant 0 : i32
    %1 = arith.maxsi %0, %c0_i32 : i32
    %c0_i32_0 = arith.constant 0 : i32
    %c0_i32_1 = arith.constant 0 : i32
    return %c0_i32_0, %1 : i32, i32
  }
  func.func @transform_1(%arg0: i32) -> (i32, i32) {
    %c0_i32 = arith.constant 0 : i32
    %c0_i32_0 = arith.constant 0 : i32
    return %c0_i32, %arg0 : i32, i32
  }
  func.func @transform_2(%arg0: i32) -> (i32, i32) {
    %c1_i32 = arith.constant 1 : i32
    %0 = arith.addi %arg0, %c1_i32 : i32
    %c1_i32_0 = arith.constant 1 : i32
    %1 = arith.minsi %0, %c1_i32_0 : i32
    %c0_i32 = arith.constant 0 : i32
    %c0_i32_1 = arith.constant 0 : i32
    return %c0_i32, %1 : i32, i32
  }
  func.func @transform_3(%arg0: i32) -> (i32, i32) {
    %c0_i32 = arith.constant 0 : i32
    %c0_i32_0 = arith.constant 0 : i32
    %c0_i32_1 = arith.constant 0 : i32
    return %c0_i32, %c0_i32_0 : i32, i32
  }
  func.func @transform_4(%arg0: i32) -> (i32, i32) {
    %c0_i32 = arith.constant 0 : i32
    %c0_i32_0 = arith.constant 0 : i32
    return %c0_i32, %arg0 : i32, i32
  }
  func.func @transform_5(%arg0: i32) -> (i32, i32) {
    %c0_i32 = arith.constant 0 : i32
    %c0_i32_0 = arith.constant 0 : i32
    return %c0_i32, %arg0 : i32, i32
  }
  func.func @transform_6(%arg0: i32) -> (i32, i32) {
    %c0_i32 = arith.constant 0 : i32
    %c0_i32_0 = arith.constant 0 : i32
    return %c0_i32, %arg0 : i32, i32
  }
  func.func @transform_7(%arg0: i32) -> (i32, i32) {
    %c0_i32 = arith.constant 0 : i32
    %c0_i32_0 = arith.constant 0 : i32
    return %c0_i32, %arg0 : i32, i32
  }
}

module attributes {stable_mosaic.version = 11 : i64} {
  func.func @_bn_relu_kernel(%arg0: i32, %arg1: memref<16x1024xbf16, #tpu.memory_space<vmem>>, %arg2: memref<16x1xf32, #tpu.memory_space<vmem>>, %arg3: memref<16x1xf32, #tpu.memory_space<vmem>>, %arg4: memref<1x1024xf32, #tpu.memory_space<vmem>>, %arg5: memref<16x1024xbf16, #tpu.memory_space<vmem>>) attributes {dimension_semantics = [#tpu.dimension_semantics<parallel>], iteration_bounds = array<i64: 2>, scalar_prefetch = 0 : i64, scratch_operands = 0 : i64, tpu.core_type = #tpu.core_type<tc>, window_params = [{transform_indices = @transform_0, window_bounds = array<i64: 16, 1024>}, {pipeline_mode = #tpu.pipeline_mode<synchronous>, transform_indices = @transform_1, window_bounds = array<i64: 16, 1>}, {pipeline_mode = #tpu.pipeline_mode<synchronous>, transform_indices = @transform_2, window_bounds = array<i64: 16, 1>}, {transform_indices = @transform_3, window_bounds = array<i64: 1, 1024>}, {transform_indices = @transform_4, window_bounds = array<i64: 16, 1024>}]} {
    %c0 = arith.constant 0 : index
    %c0_0 = arith.constant 0 : index
    %0 = vector.load %arg1[%c0, %c0_0] : memref<16x1024xbf16, #tpu.memory_space<vmem>>, vector<16x1024xbf16>
    %1 = arith.extf %0 : vector<16x1024xbf16> to vector<16x1024xf32>
    %c0_1 = arith.constant 0 : index
    %c0_2 = arith.constant 0 : index
    %2 = vector.load %arg2[%c0_1, %c0_2] : memref<16x1xf32, #tpu.memory_space<vmem>>, vector<16x1xf32>
    %3 = vector.broadcast %2 : vector<16x1xf32> to vector<16x1024xf32>
    %4 = arith.mulf %1, %3 : vector<16x1024xf32>
    %c0_3 = arith.constant 0 : index
    %c0_4 = arith.constant 0 : index
    %5 = vector.load %arg3[%c0_3, %c0_4] : memref<16x1xf32, #tpu.memory_space<vmem>>, vector<16x1xf32>
    %6 = vector.broadcast %5 : vector<16x1xf32> to vector<16x1024xf32>
    %7 = arith.addf %4, %6 : vector<16x1024xf32>
    %cst = arith.constant 0.000000e+00 : f32
    %8 = vector.broadcast %cst : f32 to vector<16x1024xf32>
    %9 = arith.maximumf %7, %8 : vector<16x1024xf32>
    %c0_5 = arith.constant 0 : index
    %c0_6 = arith.constant 0 : index
    %10 = vector.load %arg4[%c0_5, %c0_6] : memref<1x1024xf32, #tpu.memory_space<vmem>>, vector<1x1024xf32>
    %11 = vector.broadcast %10 : vector<1x1024xf32> to vector<16x1024xf32>
    %12 = arith.mulf %9, %11 : vector<16x1024xf32>
    %13 = arith.truncf %12 : vector<16x1024xf32> to vector<16x1024xbf16>
    %c0_7 = arith.constant 0 : index
    %c0_8 = arith.constant 0 : index
    %14 = vector.load %arg5[%c0_7, %c0_8] : memref<16x1024xbf16, #tpu.memory_space<vmem>>, vector<16x1024xbf16>
    tpu.vector_store %arg5[%c0_7, %c0_8], %13 {strides = array<i32>} : memref<16x1024xbf16, #tpu.memory_space<vmem>>, vector<16x1024xbf16>,
    return
  }
  func.func @transform_0(%arg0: i32) -> (i32, i32) {
    %c0_i32 = arith.constant 0 : i32
    %c0_i32_0 = arith.constant 0 : i32
    return %c0_i32, %arg0 : i32, i32
  }
  func.func @transform_1(%arg0: i32) -> (i32, i32) {
    %c0_i32 = arith.constant 0 : i32
    %c0_i32_0 = arith.constant 0 : i32
    %c0_i32_1 = arith.constant 0 : i32
    return %c0_i32, %c0_i32_0 : i32, i32
  }
  func.func @transform_2(%arg0: i32) -> (i32, i32) {
    %c0_i32 = arith.constant 0 : i32
    %c0_i32_0 = arith.constant 0 : i32
    %c0_i32_1 = arith.constant 0 : i32
    return %c0_i32, %c0_i32_0 : i32, i32
  }
  func.func @transform_3(%arg0: i32) -> (i32, i32) {
    %c0_i32 = arith.constant 0 : i32
    %c0_i32_0 = arith.constant 0 : i32
    return %c0_i32, %arg0 : i32, i32
  }
  func.func @transform_4(%arg0: i32) -> (i32, i32) {
    %c0_i32 = arith.constant 0 : i32
    %c0_i32_0 = arith.constant 0 : i32
    return %c0_i32, %arg0 : i32, i32
  }
}

module attributes {stable_mosaic.version = 11 : i64} {
  func.func @_bn_relu_kernel(%arg0: i32, %arg1: memref<16x1024xbf16, #tpu.memory_space<vmem>>, %arg2: memref<16x1xf32, #tpu.memory_space<vmem>>, %arg3: memref<16x1xf32, #tpu.memory_space<vmem>>, %arg4: memref<1x1024xf32, #tpu.memory_space<vmem>>, %arg5: memref<16x1024xf32, #tpu.memory_space<vmem>>) attributes {dimension_semantics = [#tpu.dimension_semantics<parallel>], iteration_bounds = array<i64: 2>, scalar_prefetch = 0 : i64, scratch_operands = 0 : i64, tpu.core_type = #tpu.core_type<tc>, window_params = [{transform_indices = @transform_0, window_bounds = array<i64: 16, 1024>}, {pipeline_mode = #tpu.pipeline_mode<synchronous>, transform_indices = @transform_1, window_bounds = array<i64: 16, 1>}, {pipeline_mode = #tpu.pipeline_mode<synchronous>, transform_indices = @transform_2, window_bounds = array<i64: 16, 1>}, {transform_indices = @transform_3, window_bounds = array<i64: 1, 1024>}, {transform_indices = @transform_4, window_bounds = array<i64: 16, 1024>}]} {
    %c0 = arith.constant 0 : index
    %c0_0 = arith.constant 0 : index
    %0 = vector.load %arg1[%c0, %c0_0] : memref<16x1024xbf16, #tpu.memory_space<vmem>>, vector<16x1024xbf16>
    %1 = arith.extf %0 : vector<16x1024xbf16> to vector<16x1024xf32>
    %c0_1 = arith.constant 0 : index
    %c0_2 = arith.constant 0 : index
    %2 = vector.load %arg2[%c0_1, %c0_2] : memref<16x1xf32, #tpu.memory_space<vmem>>, vector<16x1xf32>
    %3 = vector.broadcast %2 : vector<16x1xf32> to vector<16x1024xf32>
    %4 = arith.mulf %1, %3 : vector<16x1024xf32>
    %c0_3 = arith.constant 0 : index
    %c0_4 = arith.constant 0 : index
    %5 = vector.load %arg3[%c0_3, %c0_4] : memref<16x1xf32, #tpu.memory_space<vmem>>, vector<16x1xf32>
    %6 = vector.broadcast %5 : vector<16x1xf32> to vector<16x1024xf32>
    %7 = arith.addf %4, %6 : vector<16x1024xf32>
    %cst = arith.constant 0.000000e+00 : f32
    %8 = vector.broadcast %cst : f32 to vector<16x1024xf32>
    %9 = arith.maximumf %7, %8 : vector<16x1024xf32>
    %c0_5 = arith.constant 0 : index
    %c0_6 = arith.constant 0 : index
    %10 = vector.load %arg4[%c0_5, %c0_6] : memref<1x1024xf32, #tpu.memory_space<vmem>>, vector<1x1024xf32>
    %11 = vector.broadcast %10 : vector<1x1024xf32> to vector<16x1024xf32>
    %12 = arith.mulf %9, %11 : vector<16x1024xf32>
    %c0_7 = arith.constant 0 : index
    %c0_8 = arith.constant 0 : index
    %13 = vector.load %arg5[%c0_7, %c0_8] : memref<16x1024xf32, #tpu.memory_space<vmem>>, vector<16x1024xf32>
    tpu.vector_store %arg5[%c0_7, %c0_8], %12 {strides = array<i32>} : memref<16x1024xf32, #tpu.memory_space<vmem>>, vector<16x1024xf32>,
    return
  }
  func.func @transform_0(%arg0: i32) -> (i32, i32) {
    %c0_i32 = arith.constant 0 : i32
    %c0_i32_0 = arith.constant 0 : i32
    return %c0_i32, %arg0 : i32, i32
  }
  func.func @transform_1(%arg0: i32) -> (i32, i32) {
    %c0_i32 = arith.constant 0 : i32
    %c0_i32_0 = arith.constant 0 : i32
    %c0_i32_1 = arith.constant 0 : i32
    return %c0_i32, %c0_i32_0 : i32, i32
  }
  func.func @transform_2(%arg0: i32) -> (i32, i32) {
    %c0_i32 = arith.constant 0 : i32
    %c0_i32_0 = arith.constant 0 : i32
    %c0_i32_1 = arith.constant 0 : i32
    return %c0_i32, %c0_i32_0 : i32, i32
  }
  func.func @transform_3(%arg0: i32) -> (i32, i32) {
    %c0_i32 = arith.constant 0 : i32
    %c0_i32_0 = arith.constant 0 : i32
    return %c0_i32, %arg0 : i32, i32
  }
  func.func @transform_4(%arg0: i32) -> (i32, i32) {
    %c0_i32 = arith.constant 0 : i32
    %c0_i32_0 = arith.constant 0 : i32
    return %c0_i32, %arg0 : i32, i32
  }
}

</mosaic_0001>

<llo_original>
// kernel: multi_up_forward.7
$region0: #{multi_up_forward.7}
  #allocation0 [shape = 'u32[]', space=smem, size = 0x4, offset = 0x4, fixed_abs, tag = 'smem constant byte address 0x4 - core index']
  #allocation1 [shape = 'u32[144,128]{1,0:T(1,128)}', space=vmem, size = 0x12000, scoped, tag = 'internal scratch']
  %s0 = inlined_call_operand.vmem [shape: bf16[16,2048], index: 0, kind: input, shape index: {}]
  %s1 = inlined_call_operand.vmem [shape: f32[16,1], index: 1, kind: input, shape index: {}]
  %s2 = inlined_call_operand.vmem [shape: f32[16,1], index: 2, kind: input, shape index: {}]
  %s3 = inlined_call_operand.vmem [shape: f32[1,2048], index: 3, kind: input, shape index: {}]
  %s4 = inlined_call_operand.vmem [shape: f32[16,2048], index: 4, kind: output, shape index: {}]
  %s5 = sld [smem:[#allocation0]]
  $region91: #{multi_up_forward.7} parent=0
    _
  %s7 = ssub.s32 1, %s5
  %s8 = scalar_select 0, %s7, %s5
  $region1: #{multi_up_forward.7} parent=0
    #allocation2 [shape = 'u8[65536]{0}', space=vmem, size = 0x10000, scoped, tag = 'input window, operand 0']
    #allocation3 [shape = 'u8[131072]{0}', space=vmem, size = 0x20000, scoped, tag = 'output window, operand 0']
    loop: start=0, step=1, limit=4
    $region2: #{multi_up_forward.7} parent=1 // loop_pre_header
      _
    $region3: #{multi_up_forward.7} parent=1 // loop_header
      %s10 = sphi 0, %s14
      %p11 = scmp.ge.s32.totalorder %s10, 4
      %s20 = sphi 0, %s22
      %s23 = sphi 0, %s20
      %s24 = sphi 0, %s23
      %s40 = sphi 0, %s24
      %s44 = sphi 0, %s44
      %s46 = sphi 0, %s44
      %s47 = sphi 0, %s46
      %s61 = sphi 0, %s47
      %s65 = sphi 0, %s65
      %s67 = sphi 0, %s65
      %s68 = sphi 0, %s67
      %s82 = sphi 0, %s68
      %s88 = sphi 0, %s90
      %s91 = sphi 0, %s88
      %s92 = sphi 0, %s91
      %s108 = sphi 0, %s92
      %s114 = sphi 0, %s116
      %s117 = sphi 0, %s114
      %s118 = sphi 0, %s117
      %s134 = sphi 0, %s118
    $region4: #{multi_up_forward.7} parent=1 // loop_header_branch
      %13 = sbr.rel (%p11) target = $region8
    $region5: #{multi_up_forward.7} parent=1 // loop_body
      %s15 = ssub.s32 %s10, 1
      %s16 = ssub.s32 %s10, 2
      %s17 = sadd.s32 %s10, 1
      %s18 = ssub.s32 %s10, %s17
      %p19 = scmp.eq.s32.totalorder %s18, 0
      %s21 = sadd.s32 %s20, 1
      %s22 = scalar_select %p19, %s20, %s21
      %p25 = pneg %p19
      %p26 = scmp.eq.s32.totalorder %s10, 1
      %p27 = por %p25, %p26
      %p28 = scmp.ne.s32.totalorder %s20, %s23
      %p29 = scmp.eq.s32.totalorder %s10, 0
      %p30 = por %p28, %p29
      %p31 = scmp.ne.s32.totalorder %s20, %s23
      %p32 = scmp.eq.s32.totalorder %s15, 1
      %p33 = por %p31, %p32
      %p34 = scmp.ne.s32.totalorder %s23, %s24
      %p35 = scmp.eq.s32.totalorder %s15, 0
      %p36 = por %p34, %p35
      %p37 = scmp.ne.s32.totalorder %s23, %s24
      %p38 = scmp.eq.s32.totalorder %s16, 1
      %p39 = por %p37, %p38
      %p41 = scmp.ne.s32.totalorder %s24, %s40
      %p42 = scmp.eq.s32.totalorder %s16, 0
      %p43 = por %p41, %p42
      %s45 = sadd.s32 %s44, 1
      %p48 = scmp.eq.s32.totalorder %s10, 1
      %p49 = scmp.ne.s32.totalorder %s44, %s46
      %p50 = scmp.eq.s32.totalorder %s10, 0
      %p51 = por %p49, %p50
      %p52 = scmp.ne.s32.totalorder %s44, %s46
      %p53 = scmp.eq.s32.totalorder %s15, 1
      %p54 = por %p52, %p53
      %p55 = scmp.ne.s32.totalorder %s46, %s47
      %p56 = scmp.eq.s32.totalorder %s15, 0
      %p57 = por %p55, %p56
      %p58 = scmp.ne.s32.totalorder %s46, %s47
      %p59 = scmp.eq.s32.totalorder %s16, 1
      %p60 = por %p58, %p59
      %p62 = scmp.ne.s32.totalorder %s47, %s61
      %p63 = scmp.eq.s32.totalorder %s16, 0
      %p64 = por %p62, %p63
      %s66 = sadd.s32 %s65, 1
      %p69 = scmp.eq.s32.totalorder %s10, 1
      %p70 = scmp.ne.s32.totalorder %s65, %s67
      %p71 = scmp.eq.s32.totalorder %s10, 0
      %p72 = por %p70, %p71
      %p73 = scmp.ne.s32.totalorder %s65, %s67
      %p74 = scmp.eq.s32.totalorder %s15, 1
      %p75 = por %p73, %p74
      %p76 = scmp.ne.s32.totalorder %s67, %s68
      %p77 = scmp.eq.s32.totalorder %s15, 0
      %p78 = por %p76, %p77
      %p79 = scmp.ne.s32.totalorder %s67, %s68
      %p80 = scmp.eq.s32.totalorder %s16, 1
      %p81 = por %p79, %p80
      %p83 = scmp.ne.s32.totalorder %s68, %s82
      %p84 = scmp.eq.s32.totalorder %s16, 0
      %p85 = por %p83, %p84
      %s86 = ssub.s32 %s10, %s17
      %p87 = scmp.eq.s32.totalorder %s86, 0
      %s89 = sadd.s32 %s88, 1
      %s90 = scalar_select %p87, %s88, %s89
      %p93 = pneg %p87
      %p94 = scmp.eq.s32.totalorder %s10, 1
      %p95 = por %p93, %p94
      %p96 = scmp.ne.s32.totalorder %s88, %s91
      %p97 = scmp.eq.s32.totalorder %s10, 0
      %p98 = por %p96, %p97
      %p99 = scmp.ne.s32.totalorder %s88, %s91
      %p100 = scmp.eq.s32.totalorder %s15, 1
      %p101 = por %p99, %p100
      %p102 = scmp.ne.s32.totalorder %s91, %s92
      %p103 = scmp.eq.s32.totalorder %s15, 0
      %p104 = por %p102, %p103
      %p105 = scmp.ne.s32.totalorder %s91, %s92
      %p106 = scmp.eq.s32.totalorder %s16, 1
      %p107 = por %p105, %p106
      %p109 = scmp.ne.s32.totalorder %s92, %s108
      %p110 = scmp.eq.s32.totalorder %s16, 0
      %p111 = por %p109, %p110
      %s112 = ssub.s32 %s10, %s17
      %p113 = scmp.eq.s32.totalorder %s112, 0
      %s115 = sadd.s32 %s114, 1
      %s116 = scalar_select %p113, %s114, %s115
      %p119 = pneg %p113
      %p120 = scmp.eq.s32.totalorder %s10, 1
      %p121 = por %p119, %p120
      %p122 = scmp.ne.s32.totalorder %s114, %s117
      %p123 = scmp.eq.s32.totalorder %s10, 0
      %p124 = por %p122, %p123
      %p125 = scmp.ne.s32.totalorder %s114, %s117
      %p126 = scmp.eq.s32.totalorder %s15, 1
      %p127 = por %p125, %p126
      %p128 = scmp.ne.s32.totalorder %s117, %s118
      %p129 = scmp.eq.s32.totalorder %s15, 0
      %p130 = por %p128, %p129
      %p131 = scmp.ne.s32.totalorder %s117, %s118
      %p132 = scmp.eq.s32.totalorder %s16, 1
      %p133 = por %p131, %p132
      %p135 = scmp.ne.s32.totalorder %s118, %s134
      %p136 = scmp.eq.s32.totalorder %s16, 0
      %p137 = por %p135, %p136
      %p138 = scmp.le.s32.totalorder 1, %s10
      %p139 = scmp.lt.s32.totalorder %s10, 3
      %p140 = pnand %p138, %p139
      %p141 = pneg %p140
      // Predicated region
      $region9: #{multi_up_forward.7} parent=5 // pred_check
        _
      $region10: #{multi_up_forward.7} parent=5 // pred_check_branch
        %143 = sbr.rel (%p140) target = $region12
      $region11: #{multi_up_forward.7} parent=5 // pred_region
        %s144 = ssub.s32 %s10, 1
        // Predicated region
        $region13: #{multi_up_forward.7} parent=11 // pred_check
          %p145 = pneg %p57
        $region14: #{multi_up_forward.7} parent=11 // pred_check_branch
          %147 = sbr.rel (%p145) target = $region16
        $region15: #{multi_up_forward.7} parent=11 // pred_region
          _
        $region16: #{multi_up_forward.7} parent=11 // pred_fallthru
          _
        // Predicated region
        $region17: #{multi_up_forward.7} parent=11 // pred_check
          %p148 = pneg %p78
        $region18: #{multi_up_forward.7} parent=11 // pred_check_branch
          %150 = sbr.rel (%p148) target = $region20
        $region19: #{multi_up_forward.7} parent=11 // pred_region
          _
        $region20: #{multi_up_forward.7} parent=11 // pred_fallthru
          _
      $region12: #{multi_up_forward.7} parent=5 // pred_fallthru
        _
      %p151 = scmp.lt.s32.totalorder %s10, 2
      // Predicated region
      $region21: #{multi_up_forward.7} parent=5 // pred_check
        %p152 = pneg %p151
      $region22: #{multi_up_forward.7} parent=5 // pred_check_branch
        %154 = sbr.rel (%p152) target = $region24
      $region23: #{multi_up_forward.7} parent=5 // pred_region
        // Predicated region
        $region25: #{multi_up_forward.7} parent=23 // pred_check
          %p155 = pneg %p30
        $region26: #{multi_up_forward.7} parent=23 // pred_check_branch
          %157 = sbr.rel (%p155) target = $region28
        $region27: #{multi_up_forward.7} parent=23 // pred_region
          %s158 = sand.u32 %s20, 1
          %s159 = sand.u32 %s20, 1
          %s160 = smul.addr %s159, 64
          %s161 = scalar_lea.vmem [#allocation2], %s160
          %s162 = smul.u32 8, %s10
          %s163 = smul.addr %s162, 4
          %s164 = scalar_lea.vmem %s0, %s163
          // Predicated region
          $region29: #{multi_up_forward.7} parent=27 // pred_check
            _
          $region30: #{multi_up_forward.7} parent=27 // pred_check_branch
            %166 = sbr.rel (0) target = $region32
          $region31: #{multi_up_forward.7} parent=27 // pred_region
            // Predicated region
            $region33: #{multi_up_forward.7} parent=31 // pred_check
              _
            $region34: #{multi_up_forward.7} parent=31 // pred_check_branch
              %168 = sbr.rel (0) target = $region36
            $region35: #{multi_up_forward.7} parent=31 // pred_region
              loop: start=0, step=1, limit=1
              $region37: #{multi_up_forward.7} parent=35 // loop_pre_header
                _
              $region38: #{multi_up_forward.7} parent=35 // loop_header
                %s170 = sphi 0, %s174
                %p171 = scmp.ge.s32.totalorder %s170, 1
                %s175 = sphi %s164, %s164
                %s176 = sphi %s161, %s161
              $region39: #{multi_up_forward.7} parent=35 // loop_header_branch
                %173 = sbr.rel (%p171) target = $region43
              $region40: #{multi_up_forward.7} parent=35 // loop_body
                %v177 = vld [vmem:[%s175] sm:$0xff]
                %178 = vst [vmem:[%s176] sm:$0xff] %v177
                %v179 = vld [vmem:[%s175 + $0x8] sm:$0xff]
                %180 = vst [vmem:[%s176 + $0x8] sm:$0xff] %v179
                %v181 = vld [vmem:[%s175 + $0x10] sm:$0xff]
                %182 = vst [vmem:[%s176 + $0x10] sm:$0xff] %v181
                %v183 = vld [vmem:[%s175 + $0x18] sm:$0xff]
                %184 = vst [vmem:[%s176 + $0x18] sm:$0xff] %v183
                %v185 = vld [vmem:[%s175 + $0x40] sm:$0xff]
                %186 = vst [vmem:[%s176 + $0x20] sm:$0xff] %v185
                %v187 = vld [vmem:[%s175 + $0x48] sm:$0xff]
                %188 = vst [vmem:[%s176 + $0x28] sm:$0xff] %v187
                %v189 = vld [vmem:[%s175 + $0x50] sm:$0xff]
                %190 = vst [vmem:[%s176 + $0x30] sm:$0xff] %v189
                %v191 = vld [vmem:[%s175 + $0x58] sm:$0xff]
                %192 = vst [vmem:[%s176 + $0x38] sm:$0xff] %v191
              $region41: #{multi_up_forward.7} parent=35 // loop_footer
                %s174 = sadd.s32 1, %s170
              $region42: #{multi_up_forward.7} parent=35 // loop_footer_branch
                %169 = sbr.rel target = $region38
              $region43: #{multi_up_forward.7} parent=35 // loop_exit
                _
            $region36: #{multi_up_forward.7} parent=31 // pred_fallthru
              _
            // Predicated region
            $region44: #{multi_up_forward.7} parent=31 // pred_check
              _
            $region45: #{multi_up_forward.7} parent=31 // pred_check_branch
              %194 = sbr.rel target = $region47
            $region46: #{multi_up_forward.7} parent=31 // pred_region
              _
            $region47: #{multi_up_forward.7} parent=31 // pred_fallthru
              _
          $region32: #{multi_up_forward.7} parent=27 // pred_fallthru
            _
          %195 = vnop
        $region28: #{multi_up_forward.7} parent=23 // pred_fallthru
          _
        // Predicated region
        $region48: #{multi_up_forward.7} parent=23 // pred_check
          %p196 = pneg %p98
        $region49: #{multi_up_forward.7} parent=23 // pred_check_branch
          %198 = sbr.rel (%p196) target = $region51
        $region50: #{multi_up_forward.7} parent=23 // pred_region
          %s199 = smul.u32 8, %s10
          %p200 = scmp.lt.s32.totalorder %s199, 15
          %s201 = scalar_select %p200, %s199, 15
          %s202 = scalar_lea.vmem %s3, %s201
          %s203 = smul.u32 8, %s10
        $region51: #{multi_up_forward.7} parent=23 // pred_fallthru
          _
      $region24: #{multi_up_forward.7} parent=5 // pred_fallthru
        _
      %p204 = scmp.le.s32.totalorder 1, %s10
      %p205 = scmp.lt.s32.totalorder %s10, 3
      %p206 = pnand %p204, %p205
      %p207 = pneg %p206
      // Predicated region
      $region52: #{multi_up_forward.7} parent=5 // pred_check
        _
      $region53: #{multi_up_forward.7} parent=5 // pred_check_branch
        %209 = sbr.rel (%p206) target = $region55
      $region54: #{multi_up_forward.7} parent=5 // pred_region
        %s210 = ssub.s32 %s10, 1
        %s211 = sand.u32 %s23, 1
        %s212 = sand.u32 %s23, 1
        %s213 = smul.addr %s212, 64
        %s214 = scalar_lea.vmem [#allocation2], %s213
        // Predicated region
        $region56: #{multi_up_forward.7} parent=54 // pred_check
          %p215 = pneg %p36
        $region57: #{multi_up_forward.7} parent=54 // pred_check_branch
          %217 = sbr.rel (%p215) target = $region59
        $region58: #{multi_up_forward.7} parent=54 // pred_region
          _
        $region59: #{multi_up_forward.7} parent=54 // pred_fallthru
          _
        %s218 = sand.u32 %s23, 1
        %s219 = sand.u32 %s23, 1
        %s220 = smul.addr %s219, 64
        %s221 = scalar_lea.vmem [#allocation2], %s220
        %p222 = pneg %p36
        %p223 = pneg %p33
        %p224 = pneg %p57
        %p225 = pneg %p54
        %p226 = pneg %p78
        %p227 = pneg %p75
        %s228 = smul.u32 8, %s15
        %p229 = scmp.lt.s32.totalorder %s228, 15
        %s230 = scalar_select %p229, %s228, 15
        %s231 = scalar_lea.vmem %s3, %s230
        %p232 = pneg %p104
        %p233 = pneg %p101
        %p234 = pneg %p130
        %p235 = pneg %p127
        %s236 = sand.u32 %s117, 1
        %s237 = sand.u32 %s117, 1
        %s238 = smul.addr %s237, 128
        %s239 = scalar_lea.vmem [#allocation3], %s238
        %s240 = smul.u32 8, %s15
        %s241 = smul.u32 8, %s15
        %p242 = scmp.lt.s32.totalorder %s241, 15
        %s243 = scalar_select %p242, %s241, 15
        %s244 = scalar_lea.vmem %s3, %s243
        %s245 = smul.u32 8, %s15
        %s246 = smul.u32 8, %s15
        %v247 = vld [vmem:[%s214] sm:$0xff]
        %v248 = vld [vmem:[%s214 + $0x8] sm:$0xff]
        %v249 = vld [vmem:[%s214 + $0x10] sm:$0xff]
        %v250 = vld [vmem:[%s214 + $0x18] sm:$0xff]
        %v251 = vld [vmem:[%s214 + $0x20] sm:$0xff]
        %v252 = vld [vmem:[%s214 + $0x28] sm:$0xff]
        %v253 = vld [vmem:[%s214 + $0x30] sm:$0xff]
        %v254 = vld [vmem:[%s214 + $0x38] sm:$0xff]
        %v255 = vunpack.c.l.bf16 %v247
        %v256 = vunpack.c.h.bf16 %v247
        %v257 = vunpack.c.l.bf16 %v248
        %v258 = vunpack.c.h.bf16 %v248
        %v259 = vunpack.c.l.bf16 %v249
        %v260 = vunpack.c.h.bf16 %v249
        %v261 = vunpack.c.l.bf16 %v250
        %v262 = vunpack.c.h.bf16 %v250
        %v263 = vunpack.c.l.bf16 %v251
        %v264 = vunpack.c.h.bf16 %v251
        %v265 = vunpack.c.l.bf16 %v252
        %v266 = vunpack.c.h.bf16 %v252
        %v267 = vunpack.c.l.bf16 %v253
        %v268 = vunpack.c.h.bf16 %v253
        %v269 = vunpack.c.l.bf16 %v254
        %v270 = vunpack.c.h.bf16 %v254
        %v271 = vld [vmem:[%s1] sm:$0xff]
        %v272 = vld [vmem:[%s1 + $0x8] sm:$0xff]
        %274 = vset.pattern.permute.xlu0 0
        %275 = vperm.xlu0 %274, %v271
        %v276 = vpop.permute.xlu0 %275
        %279 = vset.pattern.permute.xlu0 0
        %280 = vperm.xlu0 %279, %v272
        %v281 = vpop.permute.xlu0 %280
        %v283 = vmul.f32 %v255, %v276
        %v284 = vmul.f32 %v256, %v276
        %v285 = vmul.f32 %v257, %v276
        %v286 = vmul.f32 %v258, %v276
        %v287 = vmul.f32 %v259, %v276
        %v288 = vmul.f32 %v260, %v276
        %v289 = vmul.f32 %v261, %v276
        %v290 = vmul.f32 %v262, %v276
        %v291 = vmul.f32 %v263, %v281
        %v292 = vmul.f32 %v264, %v281
        %v293 = vmul.f32 %v265, %v281
        %v294 = vmul.f32 %v266, %v281
        %v295 = vmul.f32 %v267, %v281
        %v296 = vmul.f32 %v268, %v281
        %v297 = vmul.f32 %v269, %v281
        %v298 = vmul.f32 %v270, %v281
        %v299 = vld [vmem:[%s2] sm:$0xff]
        %v300 = vld [vmem:[%s2 + $0x8] sm:$0xff]
        %302 = vset.pattern.permute.xlu0 0
        %303 = vperm.xlu0 %302, %v299
        %v304 = vpop.permute.xlu0 %303
        %307 = vset.pattern.permute.xlu0 0
        %308 = vperm.xlu0 %307, %v300
        %v309 = vpop.permute.xlu0 %308
        %v311 = vadd.f32 %v283, %v304
        %v312 = vadd.f32 %v284, %v304
        %v313 = vadd.f32 %v285, %v304
        %v314 = vadd.f32 %v286, %v304
        %v315 = vadd.f32 %v287, %v304
        %v316 = vadd.f32 %v288, %v304
        %v317 = vadd.f32 %v289, %v304
        %v318 = vadd.f32 %v290, %v304
        %v319 = vadd.f32 %v291, %v309
        %v320 = vadd.f32 %v292, %v309
        %v321 = vadd.f32 %v293, %v309
        %v322 = vadd.f32 %v294, %v309
        %v323 = vadd.f32 %v295, %v309
        %v324 = vadd.f32 %v296, %v309
        %v325 = vadd.f32 %v297, %v309
        %v326 = vadd.f32 %v298, %v309
        %v327 = vmax.f32 %v311, 0.0
        %v328 = vmax.f32 %v312, 0.0
        %v329 = vmax.f32 %v313, 0.0
        %v330 = vmax.f32 %v314, 0.0
        %v331 = vmax.f32 %v315, 0.0
        %v332 = vmax.f32 %v316, 0.0
        %v333 = vmax.f32 %v317, 0.0
        %v334 = vmax.f32 %v318, 0.0
        %v335 = vmax.f32 %v319, 0.0
        %v336 = vmax.f32 %v320, 0.0
        %v337 = vmax.f32 %v321, 0.0
        %v338 = vmax.f32 %v322, 0.0
        %v339 = vmax.f32 %v323, 0.0
        %v340 = vmax.f32 %v324, 0.0
        %v341 = vmax.f32 %v325, 0.0
        %v342 = vmax.f32 %v326, 0.0
        %v343 = vld [vmem:[%s244] sm:$0xff]
        %v345 = vlaneseq
        %v346 = vshrl.u32 %v345, 7
        %v347 = vsub.s32 0, %v346
        %v348 = vrot.slane %v343, %v347
        %v349 = vlaneseq
        %v350 = vshrl.u32 %v349, 7
        %v351 = vsub.s32 1, %v350
        %v352 = vrot.slane %v343, %v351
        %v353 = vlaneseq
        %v354 = vshrl.u32 %v353, 7
        %v355 = vsub.s32 2, %v354
        %v356 = vrot.slane %v343, %v355
        %v357 = vlaneseq
        %v358 = vshrl.u32 %v357, 7
        %v359 = vsub.s32 3, %v358
        %v360 = vrot.slane %v343, %v359
        %v361 = vlaneseq
        %v362 = vshrl.u32 %v361, 7
        %v363 = vsub.s32 4, %v362
        %v364 = vrot.slane %v343, %v363
        %v365 = vlaneseq
        %v366 = vshrl.u32 %v365, 7
        %v367 = vsub.s32 5, %v366
        %v368 = vrot.slane %v343, %v367
        %v369 = vlaneseq
        %v370 = vshrl.u32 %v369, 7
        %v371 = vsub.s32 6, %v370
        %v372 = vrot.slane %v343, %v371
        %v373 = vlaneseq
        %v374 = vshrl.u32 %v373, 7
        %v375 = vsub.s32 7, %v374
        %v376 = vrot.slane %v343, %v375
        %v385 = vmul.f32 %v327, %v348
        %v386 = vmul.f32 %v328, %v352
        %v387 = vmul.f32 %v329, %v356
        %v388 = vmul.f32 %v330, %v360
        %v389 = vmul.f32 %v331, %v364
        %v390 = vmul.f32 %v332, %v368
        %v391 = vmul.f32 %v333, %v372
        %v392 = vmul.f32 %v334, %v376
        %v393 = vmul.f32 %v335, %v348
        %v394 = vmul.f32 %v336, %v352
        %v395 = vmul.f32 %v337, %v356
        %v396 = vmul.f32 %v338, %v360
        %v397 = vmul.f32 %v339, %v364
        %v398 = vmul.f32 %v340, %v368
        %v399 = vmul.f32 %v341, %v372
        %v400 = vmul.f32 %v342, %v376
        %401 = vst [vmem:[%s239] sm:$0xff] %v385
        %402 = vst [vmem:[%s239 + $0x8] sm:$0xff] %v386
        %403 = vst [vmem:[%s239 + $0x10] sm:$0xff] %v387
        %404 = vst [vmem:[%s239 + $0x18] sm:$0xff] %v388
        %405 = vst [vmem:[%s239 + $0x20] sm:$0xff] %v389
        %406 = vst [vmem:[%s239 + $0x28] sm:$0xff] %v390
        %407 = vst [vmem:[%s239 + $0x30] sm:$0xff] %v391
        %408 = vst [vmem:[%s239 + $0x38] sm:$0xff] %v392
        %409 = vst [vmem:[%s239 + $0x40] sm:$0xff] %v393
        %410 = vst [vmem:[%s239 + $0x48] sm:$0xff] %v394
        %411 = vst [vmem:[%s239 + $0x50] sm:$0xff] %v395
        %412 = vst [vmem:[%s239 + $0x58] sm:$0xff] %v396
        %413 = vst [vmem:[%s239 + $0x60] sm:$0xff] %v397
        %414 = vst [vmem:[%s239 + $0x68] sm:$0xff] %v398
        %415 = vst [vmem:[%s239 + $0x70] sm:$0xff] %v399
        %416 = vst [vmem:[%s239 + $0x78] sm:$0xff] %v400
        %s417 = sand.u32 %s117, 1
        %s418 = sand.u32 %s117, 1
        %s419 = smul.addr %s418, 128
        %s420 = scalar_lea.vmem [#allocation3], %s419
        // Predicated region
        $region60: #{multi_up_forward.7} parent=54 // pred_check
          %p421 = pneg %p127
        $region61: #{multi_up_forward.7} parent=54 // pred_check_branch
          %423 = sbr.rel (%p421) target = $region63
        $region62: #{multi_up_forward.7} parent=54 // pred_region
          %s424 = smul.u32 8, %s15
          %s425 = smul.addr %s424, 8
          %s426 = scalar_lea.vmem %s4, %s425
          // Predicated region
          $region64: #{multi_up_forward.7} parent=62 // pred_check
            _
          $region65: #{multi_up_forward.7} parent=62 // pred_check_branch
            %428 = sbr.rel (0) target = $region67
          $region66: #{multi_up_forward.7} parent=62 // pred_region
            // Predicated region
            $region68: #{multi_up_forward.7} parent=66 // pred_check
              _
            $region69: #{multi_up_forward.7} parent=66 // pred_check_branch
              %430 = sbr.rel (0) target = $region71
            $region70: #{multi_up_forward.7} parent=66 // pred_region
              loop: start=0, step=1, limit=1
              $region72: #{multi_up_forward.7} parent=70 // loop_pre_header
                _
              $region73: #{multi_up_forward.7} parent=70 // loop_header
                %s432 = sphi 0, %s436
                %p433 = scmp.ge.s32.totalorder %s432, 1
                %s437 = sphi %s420, %s420
                %s438 = sphi %s426, %s426
              $region74: #{multi_up_forward.7} parent=70 // loop_header_branch
                %435 = sbr.rel (%p433) target = $region78
              $region75: #{multi_up_forward.7} parent=70 // loop_body
                %v439 = vld [vmem:[%s437] sm:$0xff]
                %440 = vst [vmem:[%s438] sm:$0xff] %v439
                %v441 = vld [vmem:[%s437 + $0x8] sm:$0xff]
                %442 = vst [vmem:[%s438 + $0x8] sm:$0xff] %v441
                %v443 = vld [vmem:[%s437 + $0x10] sm:$0xff]
                %444 = vst [vmem:[%s438 + $0x10] sm:$0xff] %v443
                %v445 = vld [vmem:[%s437 + $0x18] sm:$0xff]
                %446 = vst [vmem:[%s438 + $0x18] sm:$0xff] %v445
                %v447 = vld [vmem:[%s437 + $0x20] sm:$0xff]
                %448 = vst [vmem:[%s438 + $0x20] sm:$0xff] %v447
                %v449 = vld [vmem:[%s437 + $0x28] sm:$0xff]
                %450 = vst [vmem:[%s438 + $0x28] sm:$0xff] %v449
                %v451 = vld [vmem:[%s437 + $0x30] sm:$0xff]
                %452 = vst [vmem:[%s438 + $0x30] sm:$0xff] %v451
                %v453 = vld [vmem:[%s437 + $0x38] sm:$0xff]
                %454 = vst [vmem:[%s438 + $0x38] sm:$0xff] %v453
                %v455 = vld [vmem:[%s437 + $0x40] sm:$0xff]
                %456 = vst [vmem:[%s438 + $0x80] sm:$0xff] %v455
                %v457 = vld [vmem:[%s437 + $0x48] sm:$0xff]
                %458 = vst [vmem:[%s438 + $0x88] sm:$0xff] %v457
                %v459 = vld [vmem:[%s437 + $0x50] sm:$0xff]
                %460 = vst [vmem:[%s438 + $0x90] sm:$0xff] %v459
                %v461 = vld [vmem:[%s437 + $0x58] sm:$0xff]
                %462 = vst [vmem:[%s438 + $0x98] sm:$0xff] %v461
                %v463 = vld [vmem:[%s437 + $0x60] sm:$0xff]
                %464 = vst [vmem:[%s438 + $0xa0] sm:$0xff] %v463
                %v465 = vld [vmem:[%s437 + $0x68] sm:$0xff]
                %466 = vst [vmem:[%s438 + $0xa8] sm:$0xff] %v465
                %v467 = vld [vmem:[%s437 + $0x70] sm:$0xff]
                %468 = vst [vmem:[%s438 + $0xb0] sm:$0xff] %v467
                %v469 = vld [vmem:[%s437 + $0x78] sm:$0xff]
                %470 = vst [vmem:[%s438 + $0xb8] sm:$0xff] %v469
              $region76: #{multi_up_forward.7} parent=70 // loop_footer
                %s436 = sadd.s32 1, %s432
              $region77: #{multi_up_forward.7} parent=70 // loop_footer_branch
                %431 = sbr.rel target = $region73
              $region78: #{multi_up_forward.7} parent=70 // loop_exit
                _
            $region71: #{multi_up_forward.7} parent=66 // pred_fallthru
              _
            // Predicated region
            $region79: #{multi_up_forward.7} parent=66 // pred_check
              _
            $region80: #{multi_up_forward.7} parent=66 // pred_check_branch
              %472 = sbr.rel target = $region82
            $region81: #{multi_up_forward.7} parent=66 // pred_region
              _
            $region82: #{multi_up_forward.7} parent=66 // pred_fallthru
              _
          $region67: #{multi_up_forward.7} parent=62 // pred_fallthru
            _
          %473 = vnop
        $region63: #{multi_up_forward.7} parent=54 // pred_fallthru
          _
      $region55: #{multi_up_forward.7} parent=5 // pred_fallthru
        _
      %p474 = scmp.le.s32.totalorder 2, %s10
      // Predicated region
      $region83: #{multi_up_forward.7} parent=5 // pred_check
        %p475 = pneg %p474
      $region84: #{multi_up_forward.7} parent=5 // pred_check_branch
        %477 = sbr.rel (%p475) target = $region86
      $region85: #{multi_up_forward.7} parent=5 // pred_region
        %s478 = ssub.s32 %s10, 2
        // Predicated region
        $region87: #{multi_up_forward.7} parent=85 // pred_check
          %p479 = pneg %p133
        $region88: #{multi_up_forward.7} parent=85 // pred_check_branch
          %481 = sbr.rel (%p479) target = $region90
        $region89: #{multi_up_forward.7} parent=85 // pred_region
          %s482 = sand.u32 %s118, 1
          %s483 = sand.u32 %s118, 1
          %s484 = smul.addr %s483, 128
          %s485 = scalar_lea.vmem [#allocation3], %s484
        $region90: #{multi_up_forward.7} parent=85 // pred_fallthru
          _
      $region86: #{multi_up_forward.7} parent=5 // pred_fallthru
        _
    $region6: #{multi_up_forward.7} parent=1 // loop_footer
      %s14 = sadd.s32 1, %s10
    $region7: #{multi_up_forward.7} parent=1 // loop_footer_branch
      %9 = sbr.rel target = $region3
    $region8: #{multi_up_forward.7} parent=1 // loop_exit
      _

// kernel: multi_up_forward.5
$region0: #{multi_up_forward.5}
  #allocation0 [shape = 'u32[]', space=smem, size = 0x4, offset = 0x4, fixed_abs, tag = 'smem constant byte address 0x4 - core index']
  #allocation1 [shape = 'u32[144,128]{1,0:T(1,128)}', space=vmem, size = 0x12000, scoped, tag = 'internal scratch']
  %s0 = inlined_call_operand.vmem [shape: bf16[16,2048], index: 0, kind: input, shape index: {}]
  %s1 = inlined_call_operand.vmem [shape: f32[16,1], index: 1, kind: input, shape index: {}]
  %s2 = inlined_call_operand.vmem [shape: f32[16,1], index: 2, kind: input, shape index: {}]
  %s3 = inlined_call_operand.vmem [shape: f32[1,2048], index: 3, kind: input, shape index: {}]
  %s4 = inlined_call_operand.vmem [shape: bf16[16,2048], index: 4, kind: output, shape index: {}]
  %s5 = sld [smem:[#allocation0]]
  $region91: #{multi_up_forward.5} parent=0
    _
  %s7 = ssub.s32 1, %s5
  %s8 = scalar_select 0, %s7, %s5
  $region1: #{multi_up_forward.5} parent=0
    #allocation2 [shape = 'u8[65536]{0}', space=vmem, size = 0x10000, scoped, tag = 'input window, operand 0']
    #allocation3 [shape = 'u8[65536]{0}', space=vmem, size = 0x10000, scoped, tag = 'output window, operand 0']
    loop: start=0, step=1, limit=4
    $region2: #{multi_up_forward.5} parent=1 // loop_pre_header
      _
    $region3: #{multi_up_forward.5} parent=1 // loop_header
      %s10 = sphi 0, %s14
      %p11 = scmp.ge.s32.totalorder %s10, 4
      %s20 = sphi 0, %s22
      %s23 = sphi 0, %s20
      %s24 = sphi 0, %s23
      %s40 = sphi 0, %s24
      %s44 = sphi 0, %s44
      %s46 = sphi 0, %s44
      %s47 = sphi 0, %s46
      %s61 = sphi 0, %s47
      %s65 = sphi 0, %s65
      %s67 = sphi 0, %s65
      %s68 = sphi 0, %s67
      %s82 = sphi 0, %s68
      %s88 = sphi 0, %s90
      %s91 = sphi 0, %s88
      %s92 = sphi 0, %s91
      %s108 = sphi 0, %s92
      %s114 = sphi 0, %s116
      %s117 = sphi 0, %s114
      %s118 = sphi 0, %s117
      %s134 = sphi 0, %s118
    $region4: #{multi_up_forward.5} parent=1 // loop_header_branch
      %13 = sbr.rel (%p11) target = $region8
    $region5: #{multi_up_forward.5} parent=1 // loop_body
      %s15 = ssub.s32 %s10, 1
      %s16 = ssub.s32 %s10, 2
      %s17 = sadd.s32 %s10, 1
      %s18 = ssub.s32 %s10, %s17
      %p19 = scmp.eq.s32.totalorder %s18, 0
      %s21 = sadd.s32 %s20, 1
      %s22 = scalar_select %p19, %s20, %s21
      %p25 = pneg %p19
      %p26 = scmp.eq.s32.totalorder %s10, 1
      %p27 = por %p25, %p26
      %p28 = scmp.ne.s32.totalorder %s20, %s23
      %p29 = scmp.eq.s32.totalorder %s10, 0
      %p30 = por %p28, %p29
      %p31 = scmp.ne.s32.totalorder %s20, %s23
      %p32 = scmp.eq.s32.totalorder %s15, 1
      %p33 = por %p31, %p32
      %p34 = scmp.ne.s32.totalorder %s23, %s24
      %p35 = scmp.eq.s32.totalorder %s15, 0
      %p36 = por %p34, %p35
      %p37 = scmp.ne.s32.totalorder %s23, %s24
      %p38 = scmp.eq.s32.totalorder %s16, 1
      %p39 = por %p37, %p38
      %p41 = scmp.ne.s32.totalorder %s24, %s40
      %p42 = scmp.eq.s32.totalorder %s16, 0
      %p43 = por %p41, %p42
      %s45 = sadd.s32 %s44, 1
      %p48 = scmp.eq.s32.totalorder %s10, 1
      %p49 = scmp.ne.s32.totalorder %s44, %s46
      %p50 = scmp.eq.s32.totalorder %s10, 0
      %p51 = por %p49, %p50
      %p52 = scmp.ne.s32.totalorder %s44, %s46
      %p53 = scmp.eq.s32.totalorder %s15, 1
      %p54 = por %p52, %p53
      %p55 = scmp.ne.s32.totalorder %s46, %s47
      %p56 = scmp.eq.s32.totalorder %s15, 0
      %p57 = por %p55, %p56
      %p58 = scmp.ne.s32.totalorder %s46, %s47
      %p59 = scmp.eq.s32.totalorder %s16, 1
      %p60 = por %p58, %p59
      %p62 = scmp.ne.s32.totalorder %s47, %s61
      %p63 = scmp.eq.s32.totalorder %s16, 0
      %p64 = por %p62, %p63
      %s66 = sadd.s32 %s65, 1
      %p69 = scmp.eq.s32.totalorder %s10, 1
      %p70 = scmp.ne.s32.totalorder %s65, %s67
      %p71 = scmp.eq.s32.totalorder %s10, 0
      %p72 = por %p70, %p71
      %p73 = scmp.ne.s32.totalorder %s65, %s67
      %p74 = scmp.eq.s32.totalorder %s15, 1
      %p75 = por %p73, %p74
      %p76 = scmp.ne.s32.totalorder %s67, %s68
      %p77 = scmp.eq.s32.totalorder %s15, 0
      %p78 = por %p76, %p77
      %p79 = scmp.ne.s32.totalorder %s67, %s68
      %p80 = scmp.eq.s32.totalorder %s16, 1
      %p81 = por %p79, %p80
      %p83 = scmp.ne.s32.totalorder %s68, %s82
      %p84 = scmp.eq.s32.totalorder %s16, 0
      %p85 = por %p83, %p84
      %s86 = ssub.s32 %s10, %s17
      %p87 = scmp.eq.s32.totalorder %s86, 0
      %s89 = sadd.s32 %s88, 1
      %s90 = scalar_select %p87, %s88, %s89
      %p93 = pneg %p87
      %p94 = scmp.eq.s32.totalorder %s10, 1
      %p95 = por %p93, %p94
      %p96 = scmp.ne.s32.totalorder %s88, %s91
      %p97 = scmp.eq.s32.totalorder %s10, 0
      %p98 = por %p96, %p97
      %p99 = scmp.ne.s32.totalorder %s88, %s91
      %p100 = scmp.eq.s32.totalorder %s15, 1
      %p101 = por %p99, %p100
      %p102 = scmp.ne.s32.totalorder %s91, %s92
      %p103 = scmp.eq.s32.totalorder %s15, 0
      %p104 = por %p102, %p103
      %p105 = scmp.ne.s32.totalorder %s91, %s92
      %p106 = scmp.eq.s32.totalorder %s16, 1
      %p107 = por %p105, %p106
      %p109 = scmp.ne.s32.totalorder %s92, %s108
      %p110 = scmp.eq.s32.totalorder %s16, 0
      %p111 = por %p109, %p110
      %s112 = ssub.s32 %s10, %s17
      %p113 = scmp.eq.s32.totalorder %s112, 0
      %s115 = sadd.s32 %s114, 1
      %s116 = scalar_select %p113, %s114, %s115
      %p119 = pneg %p113
      %p120 = scmp.eq.s32.totalorder %s10, 1
      %p121 = por %p119, %p120
      %p122 = scmp.ne.s32.totalorder %s114, %s117
      %p123 = scmp.eq.s32.totalorder %s10, 0
      %p124 = por %p122, %p123
      %p125 = scmp.ne.s32.totalorder %s114, %s117
      %p126 = scmp.eq.s32.totalorder %s15, 1
      %p127 = por %p125, %p126
      %p128 = scmp.ne.s32.totalorder %s117, %s118
      %p129 = scmp.eq.s32.totalorder %s15, 0
      %p130 = por %p128, %p129
      %p131 = scmp.ne.s32.totalorder %s117, %s118
      %p132 = scmp.eq.s32.totalorder %s16, 1
      %p133 = por %p131, %p132
      %p135 = scmp.ne.s32.totalorder %s118, %s134
      %p136 = scmp.eq.s32.totalorder %s16, 0
      %p137 = por %p135, %p136
      %p138 = scmp.le.s32.totalorder 1, %s10
      %p139 = scmp.lt.s32.totalorder %s10, 3
      %p140 = pnand %p138, %p139
      %p141 = pneg %p140
      // Predicated region
      $region9: #{multi_up_forward.5} parent=5 // pred_check
        _
      $region10: #{multi_up_forward.5} parent=5 // pred_check_branch
        %143 = sbr.rel (%p140) target = $region12
      $region11: #{multi_up_forward.5} parent=5 // pred_region
        %s144 = ssub.s32 %s10, 1
        // Predicated region
        $region13: #{multi_up_forward.5} parent=11 // pred_check
          %p145 = pneg %p57
        $region14: #{multi_up_forward.5} parent=11 // pred_check_branch
          %147 = sbr.rel (%p145) target = $region16
        $region15: #{multi_up_forward.5} parent=11 // pred_region
          _
        $region16: #{multi_up_forward.5} parent=11 // pred_fallthru
          _
        // Predicated region
        $region17: #{multi_up_forward.5} parent=11 // pred_check
          %p148 = pneg %p78
        $region18: #{multi_up_forward.5} parent=11 // pred_check_branch
          %150 = sbr.rel (%p148) target = $region20
        $region19: #{multi_up_forward.5} parent=11 // pred_region
          _
        $region20: #{multi_up_forward.5} parent=11 // pred_fallthru
          _
      $region12: #{multi_up_forward.5} parent=5 // pred_fallthru
        _
      %p151 = scmp.lt.s32.totalorder %s10, 2
      // Predicated region
      $region21: #{multi_up_forward.5} parent=5 // pred_check
        %p152 = pneg %p151
      $region22: #{multi_up_forward.5} parent=5 // pred_check_branch
        %154 = sbr.rel (%p152) target = $region24
      $region23: #{multi_up_forward.5} parent=5 // pred_region
        // Predicated region
        $region25: #{multi_up_forward.5} parent=23 // pred_check
          %p155 = pneg %p30
        $region26: #{multi_up_forward.5} parent=23 // pred_check_branch
          %157 = sbr.rel (%p155) target = $region28
        $region27: #{multi_up_forward.5} parent=23 // pred_region
          %s158 = sand.u32 %s20, 1
          %s159 = sand.u32 %s20, 1
          %s160 = smul.addr %s159, 64
          %s161 = scalar_lea.vmem [#allocation2], %s160
          %s162 = smul.u32 8, %s10
          %s163 = smul.addr %s162, 4
          %s164 = scalar_lea.vmem %s0, %s163
          // Predicated region
          $region29: #{multi_up_forward.5} parent=27 // pred_check
            _
          $region30: #{multi_up_forward.5} parent=27 // pred_check_branch
            %166 = sbr.rel (0) target = $region32
          $region31: #{multi_up_forward.5} parent=27 // pred_region
            // Predicated region
            $region33: #{multi_up_forward.5} parent=31 // pred_check
              _
            $region34: #{multi_up_forward.5} parent=31 // pred_check_branch
              %168 = sbr.rel (0) target = $region36
            $region35: #{multi_up_forward.5} parent=31 // pred_region
              loop: start=0, step=1, limit=1
              $region37: #{multi_up_forward.5} parent=35 // loop_pre_header
                _
              $region38: #{multi_up_forward.5} parent=35 // loop_header
                %s170 = sphi 0, %s174
                %p171 = scmp.ge.s32.totalorder %s170, 1
                %s175 = sphi %s164, %s164
                %s176 = sphi %s161, %s161
              $region39: #{multi_up_forward.5} parent=35 // loop_header_branch
                %173 = sbr.rel (%p171) target = $region43
              $region40: #{multi_up_forward.5} parent=35 // loop_body
                %v177 = vld [vmem:[%s175] sm:$0xff]
                %178 = vst [vmem:[%s176] sm:$0xff] %v177
                %v179 = vld [vmem:[%s175 + $0x8] sm:$0xff]
                %180 = vst [vmem:[%s176 + $0x8] sm:$0xff] %v179
                %v181 = vld [vmem:[%s175 + $0x10] sm:$0xff]
                %182 = vst [vmem:[%s176 + $0x10] sm:$0xff] %v181
                %v183 = vld [vmem:[%s175 + $0x18] sm:$0xff]
                %184 = vst [vmem:[%s176 + $0x18] sm:$0xff] %v183
                %v185 = vld [vmem:[%s175 + $0x40] sm:$0xff]
                %186 = vst [vmem:[%s176 + $0x20] sm:$0xff] %v185
                %v187 = vld [vmem:[%s175 + $0x48] sm:$0xff]
                %188 = vst [vmem:[%s176 + $0x28] sm:$0xff] %v187
                %v189 = vld [vmem:[%s175 + $0x50] sm:$0xff]
                %190 = vst [vmem:[%s176 + $0x30] sm:$0xff] %v189
                %v191 = vld [vmem:[%s175 + $0x58] sm:$0xff]
                %192 = vst [vmem:[%s176 + $0x38] sm:$0xff] %v191
              $region41: #{multi_up_forward.5} parent=35 // loop_footer
                %s174 = sadd.s32 1, %s170
              $region42: #{multi_up_forward.5} parent=35 // loop_footer_branch
                %169 = sbr.rel target = $region38
              $region43: #{multi_up_forward.5} parent=35 // loop_exit
                _
            $region36: #{multi_up_forward.5} parent=31 // pred_fallthru
              _
            // Predicated region
            $region44: #{multi_up_forward.5} parent=31 // pred_check
              _
            $region45: #{multi_up_forward.5} parent=31 // pred_check_branch
              %194 = sbr.rel target = $region47
            $region46: #{multi_up_forward.5} parent=31 // pred_region
              _
            $region47: #{multi_up_forward.5} parent=31 // pred_fallthru
              _
          $region32: #{multi_up_forward.5} parent=27 // pred_fallthru
            _
          %195 = vnop
        $region28: #{multi_up_forward.5} parent=23 // pred_fallthru
          _
        // Predicated region
        $region48: #{multi_up_forward.5} parent=23 // pred_check
          %p196 = pneg %p98
        $region49: #{multi_up_forward.5} parent=23 // pred_check_branch
          %198 = sbr.rel (%p196) target = $region51
        $region50: #{multi_up_forward.5} parent=23 // pred_region
          %s199 = smul.u32 8, %s10
          %p200 = scmp.lt.s32.totalorder %s199, 15
          %s201 = scalar_select %p200, %s199, 15
          %s202 = scalar_lea.vmem %s3, %s201
          %s203 = smul.u32 8, %s10
        $region51: #{multi_up_forward.5} parent=23 // pred_fallthru
          _
      $region24: #{multi_up_forward.5} parent=5 // pred_fallthru
        _
      %p204 = scmp.le.s32.totalorder 1, %s10
      %p205 = scmp.lt.s32.totalorder %s10, 3
      %p206 = pnand %p204, %p205
      %p207 = pneg %p206
      // Predicated region
      $region52: #{multi_up_forward.5} parent=5 // pred_check
        _
      $region53: #{multi_up_forward.5} parent=5 // pred_check_branch
        %209 = sbr.rel (%p206) target = $region55
      $region54: #{multi_up_forward.5} parent=5 // pred_region
        %s210 = ssub.s32 %s10, 1
        %s211 = sand.u32 %s23, 1
        %s212 = sand.u32 %s23, 1
        %s213 = smul.addr %s212, 64
        %s214 = scalar_lea.vmem [#allocation2], %s213
        // Predicated region
        $region56: #{multi_up_forward.5} parent=54 // pred_check
          %p215 = pneg %p36
        $region57: #{multi_up_forward.5} parent=54 // pred_check_branch
          %217 = sbr.rel (%p215) target = $region59
        $region58: #{multi_up_forward.5} parent=54 // pred_region
          _
        $region59: #{multi_up_forward.5} parent=54 // pred_fallthru
          _
        %s218 = sand.u32 %s23, 1
        %s219 = sand.u32 %s23, 1
        %s220 = smul.addr %s219, 64
        %s221 = scalar_lea.vmem [#allocation2], %s220
        %p222 = pneg %p36
        %p223 = pneg %p33
        %p224 = pneg %p57
        %p225 = pneg %p54
        %p226 = pneg %p78
        %p227 = pneg %p75
        %s228 = smul.u32 8, %s15
        %p229 = scmp.lt.s32.totalorder %s228, 15
        %s230 = scalar_select %p229, %s228, 15
        %s231 = scalar_lea.vmem %s3, %s230
        %p232 = pneg %p104
        %p233 = pneg %p101
        %p234 = pneg %p130
        %p235 = pneg %p127
        %s236 = sand.u32 %s117, 1
        %s237 = sand.u32 %s117, 1
        %s238 = smul.addr %s237, 64
        %s239 = scalar_lea.vmem [#allocation3], %s238
        %s240 = smul.u32 8, %s15
        %s241 = smul.u32 8, %s15
        %p242 = scmp.lt.s32.totalorder %s241, 15
        %s243 = scalar_select %p242, %s241, 15
        %s244 = scalar_lea.vmem %s3, %s243
        %s245 = smul.u32 8, %s15
        %s246 = smul.u32 8, %s15
        %v247 = vld [vmem:[%s214] sm:$0xff]
        %v248 = vld [vmem:[%s214 + $0x8] sm:$0xff]
        %v249 = vld [vmem:[%s214 + $0x10] sm:$0xff]
        %v250 = vld [vmem:[%s214 + $0x18] sm:$0xff]
        %v251 = vld [vmem:[%s214 + $0x20] sm:$0xff]
        %v252 = vld [vmem:[%s214 + $0x28] sm:$0xff]
        %v253 = vld [vmem:[%s214 + $0x30] sm:$0xff]
        %v254 = vld [vmem:[%s214 + $0x38] sm:$0xff]
        %v255 = vunpack.c.l.bf16 %v247
        %v256 = vunpack.c.h.bf16 %v247
        %v257 = vunpack.c.l.bf16 %v248
        %v258 = vunpack.c.h.bf16 %v248
        %v259 = vunpack.c.l.bf16 %v249
        %v260 = vunpack.c.h.bf16 %v249
        %v261 = vunpack.c.l.bf16 %v250
        %v262 = vunpack.c.h.bf16 %v250
        %v263 = vunpack.c.l.bf16 %v251
        %v264 = vunpack.c.h.bf16 %v251
        %v265 = vunpack.c.l.bf16 %v252
        %v266 = vunpack.c.h.bf16 %v252
        %v267 = vunpack.c.l.bf16 %v253
        %v268 = vunpack.c.h.bf16 %v253
        %v269 = vunpack.c.l.bf16 %v254
        %v270 = vunpack.c.h.bf16 %v254
        %v271 = vld [vmem:[%s1] sm:$0xff]
        %v272 = vld [vmem:[%s1 + $0x8] sm:$0xff]
        %274 = vset.pattern.permute.xlu0 0
        %275 = vperm.xlu0 %274, %v271
        %v276 = vpop.permute.xlu0 %275
        %279 = vset.pattern.permute.xlu0 0
        %280 = vperm.xlu0 %279, %v272
        %v281 = vpop.permute.xlu0 %280
        %v283 = vmul.f32 %v255, %v276
        %v284 = vmul.f32 %v256, %v276
        %v285 = vmul.f32 %v257, %v276
        %v286 = vmul.f32 %v258, %v276
        %v287 = vmul.f32 %v259, %v276
        %v288 = vmul.f32 %v260, %v276
        %v289 = vmul.f32 %v261, %v276
        %v290 = vmul.f32 %v262, %v276
        %v291 = vmul.f32 %v263, %v281
        %v292 = vmul.f32 %v264, %v281
        %v293 = vmul.f32 %v265, %v281
        %v294 = vmul.f32 %v266, %v281
        %v295 = vmul.f32 %v267, %v281
        %v296 = vmul.f32 %v268, %v281
        %v297 = vmul.f32 %v269, %v281
        %v298 = vmul.f32 %v270, %v281
        %v299 = vld [vmem:[%s2] sm:$0xff]
        %v300 = vld [vmem:[%s2 + $0x8] sm:$0xff]
        %302 = vset.pattern.permute.xlu0 0
        %303 = vperm.xlu0 %302, %v299
        %v304 = vpop.permute.xlu0 %303
        %307 = vset.pattern.permute.xlu0 0
        %308 = vperm.xlu0 %307, %v300
        %v309 = vpop.permute.xlu0 %308
        %v311 = vadd.f32 %v283, %v304
        %v312 = vadd.f32 %v284, %v304
        %v313 = vadd.f32 %v285, %v304
        %v314 = vadd.f32 %v286, %v304
        %v315 = vadd.f32 %v287, %v304
        %v316 = vadd.f32 %v288, %v304
        %v317 = vadd.f32 %v289, %v304
        %v318 = vadd.f32 %v290, %v304
        %v319 = vadd.f32 %v291, %v309
        %v320 = vadd.f32 %v292, %v309
        %v321 = vadd.f32 %v293, %v309
        %v322 = vadd.f32 %v294, %v309
        %v323 = vadd.f32 %v295, %v309
        %v324 = vadd.f32 %v296, %v309
        %v325 = vadd.f32 %v297, %v309
        %v326 = vadd.f32 %v298, %v309
        %v327 = vmax.f32 %v311, 0.0
        %v328 = vmax.f32 %v312, 0.0
        %v329 = vmax.f32 %v313, 0.0
        %v330 = vmax.f32 %v314, 0.0
        %v331 = vmax.f32 %v315, 0.0
        %v332 = vmax.f32 %v316, 0.0
        %v333 = vmax.f32 %v317, 0.0
        %v334 = vmax.f32 %v318, 0.0
        %v335 = vmax.f32 %v319, 0.0
        %v336 = vmax.f32 %v320, 0.0
        %v337 = vmax.f32 %v321, 0.0
        %v338 = vmax.f32 %v322, 0.0
        %v339 = vmax.f32 %v323, 0.0
        %v340 = vmax.f32 %v324, 0.0
        %v341 = vmax.f32 %v325, 0.0
        %v342 = vmax.f32 %v326, 0.0
        %v343 = vld [vmem:[%s244] sm:$0xff]
        %v345 = vlaneseq
        %v346 = vshrl.u32 %v345, 7
        %v347 = vsub.s32 0, %v346
        %v348 = vrot.slane %v343, %v347
        %v349 = vlaneseq
        %v350 = vshrl.u32 %v349, 7
        %v351 = vsub.s32 1, %v350
        %v352 = vrot.slane %v343, %v351
        %v353 = vlaneseq
        %v354 = vshrl.u32 %v353, 7
        %v355 = vsub.s32 2, %v354
        %v356 = vrot.slane %v343, %v355
        %v357 = vlaneseq
        %v358 = vshrl.u32 %v357, 7
        %v359 = vsub.s32 3, %v358
        %v360 = vrot.slane %v343, %v359
        %v361 = vlaneseq
        %v362 = vshrl.u32 %v361, 7
        %v363 = vsub.s32 4, %v362
        %v364 = vrot.slane %v343, %v363
        %v365 = vlaneseq
        %v366 = vshrl.u32 %v365, 7
        %v367 = vsub.s32 5, %v366
        %v368 = vrot.slane %v343, %v367
        %v369 = vlaneseq
        %v370 = vshrl.u32 %v369, 7
        %v371 = vsub.s32 6, %v370
        %v372 = vrot.slane %v343, %v371
        %v373 = vlaneseq
        %v374 = vshrl.u32 %v373, 7
        %v375 = vsub.s32 7, %v374
        %v376 = vrot.slane %v343, %v375
        %v385 = vmul.f32 %v327, %v348
        %v386 = vmul.f32 %v328, %v352
        %v387 = vmul.f32 %v329, %v356
        %v388 = vmul.f32 %v330, %v360
        %v389 = vmul.f32 %v331, %v364
        %v390 = vmul.f32 %v332, %v368
        %v391 = vmul.f32 %v333, %v372
        %v392 = vmul.f32 %v334, %v376
        %v393 = vmul.f32 %v335, %v348
        %v394 = vmul.f32 %v336, %v352
        %v395 = vmul.f32 %v337, %v356
        %v396 = vmul.f32 %v338, %v360
        %v397 = vmul.f32 %v339, %v364
        %v398 = vmul.f32 %v340, %v368
        %v399 = vmul.f32 %v341, %v372
        %v400 = vmul.f32 %v342, %v376
        %v401 = vpack.c.bf16 %v393, %v385
        %v402 = vpack.c.bf16 %v394, %v386
        %v403 = vpack.c.bf16 %v395, %v387
        %v404 = vpack.c.bf16 %v396, %v388
        %v405 = vpack.c.bf16 %v397, %v389
        %v406 = vpack.c.bf16 %v398, %v390
        %v407 = vpack.c.bf16 %v399, %v391
        %v408 = vpack.c.bf16 %v400, %v392
        %v417 = vunpack.c.l.b16 %v401
        %v418 = vunpack.c.l.b16 %v402
        %v419 = vunpack.c.l.b16 %v403
        %v420 = vunpack.c.l.b16 %v404
        %v421 = vunpack.c.l.b16 %v405
        %v422 = vunpack.c.l.b16 %v406
        %v423 = vunpack.c.l.b16 %v407
        %v424 = vunpack.c.l.b16 %v408
        %v425 = vunpack.c.h.b16 %v401
        %v426 = vunpack.c.h.b16 %v402
        %v427 = vunpack.c.h.b16 %v403
        %v428 = vunpack.c.h.b16 %v404
        %v429 = vunpack.c.h.b16 %v405
        %v430 = vunpack.c.h.b16 %v406
        %v431 = vunpack.c.h.b16 %v407
        %v432 = vunpack.c.h.b16 %v408
        %v433 = vpack.c.b16 %v418, %v417
        %v434 = vpack.c.b16 %v420, %v419
        %v435 = vpack.c.b16 %v422, %v421
        %v436 = vpack.c.b16 %v424, %v423
        %v437 = vpack.c.b16 %v426, %v425
        %v438 = vpack.c.b16 %v428, %v427
        %v439 = vpack.c.b16 %v430, %v429
        %v440 = vpack.c.b16 %v432, %v431
        %449 = vst [vmem:[%s239] sm:$0xff] %v433
        %450 = vst [vmem:[%s239 + $0x8] sm:$0xff] %v434
        %451 = vst [vmem:[%s239 + $0x10] sm:$0xff] %v435
        %452 = vst [vmem:[%s239 + $0x18] sm:$0xff] %v436
        %453 = vst [vmem:[%s239 + $0x20] sm:$0xff] %v437
        %454 = vst [vmem:[%s239 + $0x28] sm:$0xff] %v438
        %455 = vst [vmem:[%s239 + $0x30] sm:$0xff] %v439
        %456 = vst [vmem:[%s239 + $0x38] sm:$0xff] %v440
        %s457 = sand.u32 %s117, 1
        %s458 = sand.u32 %s117, 1
        %s459 = smul.addr %s458, 64
        %s460 = scalar_lea.vmem [#allocation3], %s459
        // Predicated region
        $region60: #{multi_up_forward.5} parent=54 // pred_check
          %p461 = pneg %p127
        $region61: #{multi_up_forward.5} parent=54 // pred_check_branch
          %463 = sbr.rel (%p461) target = $region63
        $region62: #{multi_up_forward.5} parent=54 // pred_region
          %s464 = smul.u32 8, %s15
          %s465 = smul.addr %s464, 4
          %s466 = scalar_lea.vmem %s4, %s465
          // Predicated region
          $region64: #{multi_up_forward.5} parent=62 // pred_check
            _
          $region65: #{multi_up_forward.5} parent=62 // pred_check_branch
            %468 = sbr.rel (0) target = $region67
          $region66: #{multi_up_forward.5} parent=62 // pred_region
            // Predicated region
            $region68: #{multi_up_forward.5} parent=66 // pred_check
              _
            $region69: #{multi_up_forward.5} parent=66 // pred_check_branch
              %470 = sbr.rel (0) target = $region71
            $region70: #{multi_up_forward.5} parent=66 // pred_region
              loop: start=0, step=1, limit=1
              $region72: #{multi_up_forward.5} parent=70 // loop_pre_header
                _
              $region73: #{multi_up_forward.5} parent=70 // loop_header
                %s472 = sphi 0, %s476
                %p473 = scmp.ge.s32.totalorder %s472, 1
                %s477 = sphi %s460, %s460
                %s478 = sphi %s466, %s466
              $region74: #{multi_up_forward.5} parent=70 // loop_header_branch
                %475 = sbr.rel (%p473) target = $region78
              $region75: #{multi_up_forward.5} parent=70 // loop_body
                %v479 = vld [vmem:[%s477] sm:$0xff]
                %480 = vst [vmem:[%s478] sm:$0xff] %v479
                %v481 = vld [vmem:[%s477 + $0x8] sm:$0xff]
                %482 = vst [vmem:[%s478 + $0x8] sm:$0xff] %v481
                %v483 = vld [vmem:[%s477 + $0x10] sm:$0xff]
                %484 = vst [vmem:[%s478 + $0x10] sm:$0xff] %v483
                %v485 = vld [vmem:[%s477 + $0x18] sm:$0xff]
                %486 = vst [vmem:[%s478 + $0x18] sm:$0xff] %v485
                %v487 = vld [vmem:[%s477 + $0x20] sm:$0xff]
                %488 = vst [vmem:[%s478 + $0x40] sm:$0xff] %v487
                %v489 = vld [vmem:[%s477 + $0x28] sm:$0xff]
                %490 = vst [vmem:[%s478 + $0x48] sm:$0xff] %v489
                %v491 = vld [vmem:[%s477 + $0x30] sm:$0xff]
                %492 = vst [vmem:[%s478 + $0x50] sm:$0xff] %v491
                %v493 = vld [vmem:[%s477 + $0x38] sm:$0xff]
                %494 = vst [vmem:[%s478 + $0x58] sm:$0xff] %v493
              $region76: #{multi_up_forward.5} parent=70 // loop_footer
                %s476 = sadd.s32 1, %s472
              $region77: #{multi_up_forward.5} parent=70 // loop_footer_branch
                %471 = sbr.rel target = $region73
              $region78: #{multi_up_forward.5} parent=70 // loop_exit
                _
            $region71: #{multi_up_forward.5} parent=66 // pred_fallthru
              _
            // Predicated region
            $region79: #{multi_up_forward.5} parent=66 // pred_check
              _
            $region80: #{multi_up_forward.5} parent=66 // pred_check_branch
              %496 = sbr.rel target = $region82
            $region81: #{multi_up_forward.5} parent=66 // pred_region
              _
            $region82: #{multi_up_forward.5} parent=66 // pred_fallthru
              _
          $region67: #{multi_up_forward.5} parent=62 // pred_fallthru
            _
          %497 = vnop
        $region63: #{multi_up_forward.5} parent=54 // pred_fallthru
          _
      $region55: #{multi_up_forward.5} parent=5 // pred_fallthru
        _
      %p498 = scmp.le.s32.totalorder 2, %s10
      // Predicated region
      $region83: #{multi_up_forward.5} parent=5 // pred_check
        %p499 = pneg %p498
      $region84: #{multi_up_forward.5} parent=5 // pred_check_branch
        %501 = sbr.rel (%p499) target = $region86
      $region85: #{multi_up_forward.5} parent=5 // pred_region
        %s502 = ssub.s32 %s10, 2
        // Predicated region
        $region87: #{multi_up_forward.5} parent=85 // pred_check
          %p503 = pneg %p133
        $region88: #{multi_up_forward.5} parent=85 // pred_check_branch
          %505 = sbr.rel (%p503) target = $region90
        $region89: #{multi_up_forward.5} parent=85 // pred_region
          %s506 = sand.u32 %s118, 1
          %s507 = sand.u32 %s118, 1
          %s508 = smul.addr %s507, 64
          %s509 = scalar_lea.vmem [#allocation3], %s508
        $region90: #{multi_up_forward.5} parent=85 // pred_fallthru
          _
      $region86: #{multi_up_forward.5} parent=5 // pred_fallthru
        _
    $region6: #{multi_up_forward.5} parent=1 // loop_footer
      %s14 = sadd.s32 1, %s10
    $region7: #{multi_up_forward.5} parent=1 // loop_footer_branch
      %9 = sbr.rel target = $region3
    $region8: #{multi_up_forward.5} parent=1 // loop_exit
      _

// kernel: multi_up_forward.4
$region0: #{multi_up_forward.4}
  #allocation0 [shape = 'u32[]', space=smem, size = 0x4, offset = 0x4, fixed_abs, tag = 'smem constant byte address 0x4 - core index']
  #allocation1 [shape = 'u32[144,128]{1,0:T(1,128)}', space=vmem, size = 0x12000, scoped, tag = 'internal scratch']
  %s0 = inlined_call_operand.vmem [shape: bf16[16,2048], index: 0, kind: input, shape index: {}, may-alias: {0,1,2}]
  %s1 = inlined_call_operand.vmem [shape: bf16[16,2048], index: 1, kind: input, shape index: {}, may-alias: {0,1,2}]
  %s2 = inlined_call_operand.vmem [shape: bf16[16,2048], index: 2, kind: input, shape index: {}, may-alias: {0,1,2}]
  %s3 = inlined_call_operand.vmem [shape: bf16[16,432], index: 3, kind: input, shape index: {}]
  %s4 = inlined_call_operand.vmem [shape: f32[1,2048], index: 4, kind: input, shape index: {}]
  %s5 = inlined_call_operand.vmem [shape: bf16[16,2048], index: 5, kind: output, shape index: {0}]
  %s6 = inlined_call_operand.vmem [shape: f32[16,256], index: 6, kind: output, shape index: {1}]
  %s7 = inlined_call_operand.vmem [shape: f32[16,256], index: 7, kind: output, shape index: {2}]
  %8 = xla_tuple %s5, %s6, %s7
  %s9 = sld [smem:[#allocation0]]
  $region225: #{multi_up_forward.4} parent=0
    _
  %s11 = ssub.s32 1, %s9
  %s12 = scalar_select 0, %s11, %s9
  $region1: #{multi_up_forward.4} parent=0
    #allocation2 [shape = 'u8[65536]{0}', space=vmem, size = 0x10000, scoped, tag = 'input window, operand 0']
    #allocation3 [shape = 'u8[65536]{0}', space=vmem, size = 0x10000, scoped, tag = 'input window, operand 1']
    #allocation4 [shape = 'u8[65536]{0}', space=vmem, size = 0x10000, scoped, tag = 'input window, operand 2']
    #allocation5 [shape = 'u8[65536]{0}', space=vmem, size = 0x10000, scoped, tag = 'output window, operand 0']
    #allocation6 [shape = 'u8[16384]{0}', space=vmem, size = 0x4000, scoped, tag = 'output window, operand 1']
    #allocation7 [shape = 'u8[16384]{0}', space=vmem, size = 0x4000, scoped, tag = 'output window, operand 2']
    loop: start=0, step=1, limit=4
    $region2: #{multi_up_forward.4} parent=1 // loop_pre_header
      _
    $region3: #{multi_up_forward.4} parent=1 // loop_header
      %s14 = sphi 0, %s18
      %p15 = scmp.ge.s32.totalorder %s14, 4
      %s30 = sphi 0, %s32
      %s33 = sphi 0, %s30
      %s34 = sphi 0, %s33
      %s50 = sphi 0, %s34
      %s56 = sphi 0, %s58
      %s59 = sphi 0, %s56
      %s60 = sphi 0, %s59
      %s76 = sphi 0, %s60
      %s88 = sphi 0, %s90
      %s91 = sphi 0, %s88
      %s92 = sphi 0, %s91
      %s108 = sphi 0, %s92
      %s112 = sphi 0, %s112
      %s114 = sphi 0, %s112
      %s115 = sphi 0, %s114
      %s129 = sphi 0, %s115
      %s135 = sphi 0, %s137
      %s138 = sphi 0, %s135
      %s139 = sphi 0, %s138
      %s155 = sphi 0, %s139
      %s161 = sphi 0, %s163
      %s164 = sphi 0, %s161
      %s165 = sphi 0, %s164
      %s181 = sphi 0, %s165
      %s187 = sphi 0, %s189
      %s190 = sphi 0, %s187
      %s191 = sphi 0, %s190
      %s207 = sphi 0, %s191
      %s213 = sphi 0, %s215
      %s216 = sphi 0, %s213
      %s217 = sphi 0, %s216
      %s233 = sphi 0, %s217
    $region4: #{multi_up_forward.4} parent=1 // loop_header_branch
      %17 = sbr.rel (%p15) target = $region8
    $region5: #{multi_up_forward.4} parent=1 // loop_body
      %s19 = ssub.s32 %s14, 1
      %s20 = ssub.s32 %s14, 2
      %s21 = sadd.s32 %s14, 1
      %s22 = ssub.s32 %s14, 1
      %p23 = scmp.gt.s32.totalorder %s22, 0
      %s24 = scalar_select %p23, %s22, 0
      %s25 = ssub.s32 %s21, 1
      %p26 = scmp.gt.s32.totalorder %s25, 0
      %s27 = scalar_select %p26, %s25, 0
      %s28 = ssub.s32 %s24, %s27
      %p29 = scmp.eq.s32.totalorder %s28, 0
      %s31 = sadd.s32 %s30, 1
      %s32 = scalar_select %p29, %s30, %s31
      %p35 = pneg %p29
      %p36 = scmp.eq.s32.totalorder %s14, 1
      %p37 = por %p35, %p36
      %p38 = scmp.ne.s32.totalorder %s30, %s33
      %p39 = scmp.eq.s32.totalorder %s14, 0
      %p40 = por %p38, %p39
      %p41 = scmp.ne.s32.totalorder %s30, %s33
      %p42 = scmp.eq.s32.totalorder %s19, 1
      %p43 = por %p41, %p42
      %p44 = scmp.ne.s32.totalorder %s33, %s34
      %p45 = scmp.eq.s32.totalorder %s19, 0
      %p46 = por %p44, %p45
      %p47 = scmp.ne.s32.totalorder %s33, %s34
      %p48 = scmp.eq.s32.totalorder %s20, 1
      %p49 = por %p47, %p48
      %p51 = scmp.ne.s32.totalorder %s34, %s50
      %p52 = scmp.eq.s32.totalorder %s20, 0
      %p53 = por %p51, %p52
      %s54 = ssub.s32 %s14, %s21
      %p55 = scmp.eq.s32.totalorder %s54, 0
      %s57 = sadd.s32 %s56, 1
      %s58 = scalar_select %p55, %s56, %s57
      %p61 = pneg %p55
      %p62 = scmp.eq.s32.totalorder %s14, 1
      %p63 = por %p61, %p62
      %p64 = scmp.ne.s32.totalorder %s56, %s59
      %p65 = scmp.eq.s32.totalorder %s14, 0
      %p66 = por %p64, %p65
      %p67 = scmp.ne.s32.totalorder %s56, %s59
      %p68 = scmp.eq.s32.totalorder %s19, 1
      %p69 = por %p67, %p68
      %p70 = scmp.ne.s32.totalorder %s59, %s60
      %p71 = scmp.eq.s32.totalorder %s19, 0
      %p72 = por %p70, %p71
      %p73 = scmp.ne.s32.totalorder %s59, %s60
      %p74 = scmp.eq.s32.totalorder %s20, 1
      %p75 = por %p73, %p74
      %p77 = scmp.ne.s32.totalorder %s60, %s76
      %p78 = scmp.eq.s32.totalorder %s20, 0
      %p79 = por %p77, %p78
      %s80 = sadd.s32 %s14, 1
      %p81 = scmp.lt.s32.totalorder %s80, 1
      %s82 = scalar_select %p81, %s80, 1
      %s83 = sadd.s32 %s21, 1
      %p84 = scmp.lt.s32.totalorder %s83, 1
      %s85 = scalar_select %p84, %s83, 1
      %s86 = ssub.s32 %s82, %s85
      %p87 = scmp.eq.s32.totalorder %s86, 0
      %s89 = sadd.s32 %s88, 1
      %s90 = scalar_select %p87, %s88, %s89
      %p93 = pneg %p87
      %p94 = scmp.eq.s32.totalorder %s14, 1
      %p95 = por %p93, %p94
      %p96 = scmp.ne.s32.totalorder %s88, %s91
      %p97 = scmp.eq.s32.totalorder %s14, 0
      %p98 = por %p96, %p97
      %p99 = scmp.ne.s32.totalorder %s88, %s91
      %p100 = scmp.eq.s32.totalorder %s19, 1
      %p101 = por %p99, %p100
      %p102 = scmp.ne.s32.totalorder %s91, %s92
      %p103 = scmp.eq.s32.totalorder %s19, 0
      %p104 = por %p102, %p103
      %p105 = scmp.ne.s32.totalorder %s91, %s92
      %p106 = scmp.eq.s32.totalorder %s20, 1
      %p107 = por %p105, %p106
      %p109 = scmp.ne.s32.totalorder %s92, %s108
      %p110 = scmp.eq.s32.totalorder %s20, 0
      %p111 = por %p109, %p110
      %s113 = sadd.s32 %s112, 1
      %p116 = scmp.eq.s32.totalorder %s14, 1
      %p117 = scmp.ne.s32.totalorder %s112, %s114
      %p118 = scmp.eq.s32.totalorder %s14, 0
      %p119 = por %p117, %p118
      %p120 = scmp.ne.s32.totalorder %s112, %s114
      %p121 = scmp.eq.s32.totalorder %s19, 1
      %p122 = por %p120, %p121
      %p123 = scmp.ne.s32.totalorder %s114, %s115
      %p124 = scmp.eq.s32.totalorder %s19, 0
      %p125 = por %p123, %p124
      %p126 = scmp.ne.s32.totalorder %s114, %s115
      %p127 = scmp.eq.s32.totalorder %s20, 1
      %p128 = por %p126, %p127
      %p130 = scmp.ne.s32.totalorder %s115, %s129
      %p131 = scmp.eq.s32.totalorder %s20, 0
      %p132 = por %p130, %p131
      %s133 = ssub.s32 %s14, %s21
      %p134 = scmp.eq.s32.totalorder %s133, 0
      %s136 = sadd.s32 %s135, 1
      %s137 = scalar_select %p134, %s135, %s136
      %p140 = pneg %p134
      %p141 = scmp.eq.s32.totalorder %s14, 1
      %p142 = por %p140, %p141
      %p143 = scmp.ne.s32.totalorder %s135, %s138
      %p144 = scmp.eq.s32.totalorder %s14, 0
      %p145 = por %p143, %p144
      %p146 = scmp.ne.s32.totalorder %s135, %s138
      %p147 = scmp.eq.s32.totalorder %s19, 1
      %p148 = por %p146, %p147
      %p149 = scmp.ne.s32.totalorder %s138, %s139
      %p150 = scmp.eq.s32.totalorder %s19, 0
      %p151 = por %p149, %p150
      %p152 = scmp.ne.s32.totalorder %s138, %s139
      %p153 = scmp.eq.s32.totalorder %s20, 1
      %p154 = por %p152, %p153
      %p156 = scmp.ne.s32.totalorder %s139, %s155
      %p157 = scmp.eq.s32.totalorder %s20, 0
      %p158 = por %p156, %p157
      %s159 = ssub.s32 %s14, %s21
      %p160 = scmp.eq.s32.totalorder %s159, 0
      %s162 = sadd.s32 %s161, 1
      %s163 = scalar_select %p160, %s161, %s162
      %p166 = pneg %p160
      %p167 = scmp.eq.s32.totalorder %s14, 1
      %p168 = por %p166, %p167
      %p169 = scmp.ne.s32.totalorder %s161, %s164
      %p170 = scmp.eq.s32.totalorder %s14, 0
      %p171 = por %p169, %p170
      %p172 = scmp.ne.s32.totalorder %s161, %s164
      %p173 = scmp.eq.s32.totalorder %s19, 1
      %p174 = por %p172, %p173
      %p175 = scmp.ne.s32.totalorder %s164, %s165
      %p176 = scmp.eq.s32.totalorder %s19, 0
      %p177 = por %p175, %p176
      %p178 = scmp.ne.s32.totalorder %s164, %s165
      %p179 = scmp.eq.s32.totalorder %s20, 1
      %p180 = por %p178, %p179
      %p182 = scmp.ne.s32.totalorder %s165, %s181
      %p183 = scmp.eq.s32.totalorder %s20, 0
      %p184 = por %p182, %p183
      %s185 = ssub.s32 %s14, %s21
      %p186 = scmp.eq.s32.totalorder %s185, 0
      %s188 = sadd.s32 %s187, 1
      %s189 = scalar_select %p186, %s187, %s188
      %p192 = pneg %p186
      %p193 = scmp.eq.s32.totalorder %s14, 1
      %p194 = por %p192, %p193
      %p195 = scmp.ne.s32.totalorder %s187, %s190
      %p196 = scmp.eq.s32.totalorder %s14, 0
      %p197 = por %p195, %p196
      %p198 = scmp.ne.s32.totalorder %s187, %s190
      %p199 = scmp.eq.s32.totalorder %s19, 1
      %p200 = por %p198, %p199
      %p201 = scmp.ne.s32.totalorder %s190, %s191
      %p202 = scmp.eq.s32.totalorder %s19, 0
      %p203 = por %p201, %p202
      %p204 = scmp.ne.s32.totalorder %s190, %s191
      %p205 = scmp.eq.s32.totalorder %s20, 1
      %p206 = por %p204, %p205
      %p208 = scmp.ne.s32.totalorder %s191, %s207
      %p209 = scmp.eq.s32.totalorder %s20, 0
      %p210 = por %p208, %p209
      %s211 = ssub.s32 %s14, %s21
      %p212 = scmp.eq.s32.totalorder %s211, 0
      %s214 = sadd.s32 %s213, 1
      %s215 = scalar_select %p212, %s213, %s214
      %p218 = pneg %p212
      %p219 = scmp.eq.s32.totalorder %s14, 1
      %p220 = por %p218, %p219
      %p221 = scmp.ne.s32.totalorder %s213, %s216
      %p222 = scmp.eq.s32.totalorder %s14, 0
      %p223 = por %p221, %p222
      %p224 = scmp.ne.s32.totalorder %s213, %s216
      %p225 = scmp.eq.s32.totalorder %s19, 1
      %p226 = por %p224, %p225
      %p227 = scmp.ne.s32.totalorder %s216, %s217
      %p228 = scmp.eq.s32.totalorder %s19, 0
      %p229 = por %p227, %p228
      %p230 = scmp.ne.s32.totalorder %s216, %s217
      %p231 = scmp.eq.s32.totalorder %s20, 1
      %p232 = por %p230, %p231
      %p234 = scmp.ne.s32.totalorder %s217, %s233
      %p235 = scmp.eq.s32.totalorder %s20, 0
      %p236 = por %p234, %p235
      %p237 = scmp.le.s32.totalorder 1, %s14
      %p238 = scmp.lt.s32.totalorder %s14, 3
      %p239 = pnand %p237, %p238
      %p240 = pneg %p239
      // Predicated region
      $region9: #{multi_up_forward.4} parent=5 // pred_check
        _
      $region10: #{multi_up_forward.4} parent=5 // pred_check_branch
        %242 = sbr.rel (%p239) target = $region12
      $region11: #{multi_up_forward.4} parent=5 // pred_region
        %s243 = ssub.s32 %s14, 1
        // Predicated region
        $region13: #{multi_up_forward.4} parent=11 // pred_check
          %p244 = pneg %p125
        $region14: #{multi_up_forward.4} parent=11 // pred_check_branch
          %246 = sbr.rel (%p244) target = $region16
        $region15: #{multi_up_forward.4} parent=11 // pred_region
          _
        $region16: #{multi_up_forward.4} parent=11 // pred_fallthru
          _
      $region12: #{multi_up_forward.4} parent=5 // pred_fallthru
        _
      %p247 = scmp.lt.s32.totalorder %s14, 2
      // Predicated region
      $region17: #{multi_up_forward.4} parent=5 // pred_check
        %p248 = pneg %p247
      $region18: #{multi_up_forward.4} parent=5 // pred_check_branch
        %250 = sbr.rel (%p248) target = $region20
      $region19: #{multi_up_forward.4} parent=5 // pred_region
        // Predicated region
        $region21: #{multi_up_forward.4} parent=19 // pred_check
          %p251 = pneg %p40
        $region22: #{multi_up_forward.4} parent=19 // pred_check_branch
          %253 = sbr.rel (%p251) target = $region24
        $region23: #{multi_up_forward.4} parent=19 // pred_region
          %s254 = sand.u32 %s30, 1
          %s255 = sand.u32 %s30, 1
          %s256 = smul.addr %s255, 64
          %s257 = scalar_lea.vmem [#allocation2], %s256
          %s258 = ssub.s32 %s14, 1
          %p259 = scmp.gt.s32.totalorder %s258, 0
          %s260 = scalar_select %p259, %s258, 0
          %s261 = smul.u32 8, %s260
          %s262 = smul.addr %s261, 4
          %s263 = scalar_lea.vmem %s0, %s262
          // Predicated region
          $region25: #{multi_up_forward.4} parent=23 // pred_check
            _
          $region26: #{multi_up_forward.4} parent=23 // pred_check_branch
            %265 = sbr.rel (0) target = $region28
          $region27: #{multi_up_forward.4} parent=23 // pred_region
            // Predicated region
            $region29: #{multi_up_forward.4} parent=27 // pred_check
              _
            $region30: #{multi_up_forward.4} parent=27 // pred_check_branch
              %267 = sbr.rel (0) target = $region32
            $region31: #{multi_up_forward.4} parent=27 // pred_region
              loop: start=0, step=1, limit=1
              $region33: #{multi_up_forward.4} parent=31 // loop_pre_header
                _
              $region34: #{multi_up_forward.4} parent=31 // loop_header
                %s269 = sphi 0, %s273
                %p270 = scmp.ge.s32.totalorder %s269, 1
                %s274 = sphi %s263, %s263
                %s275 = sphi %s257, %s257
              $region35: #{multi_up_forward.4} parent=31 // loop_header_branch
                %272 = sbr.rel (%p270) target = $region39
              $region36: #{multi_up_forward.4} parent=31 // loop_body
                %v276 = vld [vmem:[%s274] sm:$0xff]
                %277 = vst [vmem:[%s275] sm:$0xff] %v276
                %v278 = vld [vmem:[%s274 + $0x8] sm:$0xff]
                %279 = vst [vmem:[%s275 + $0x8] sm:$0xff] %v278
                %v280 = vld [vmem:[%s274 + $0x10] sm:$0xff]
                %281 = vst [vmem:[%s275 + $0x10] sm:$0xff] %v280
                %v282 = vld [vmem:[%s274 + $0x18] sm:$0xff]
                %283 = vst [vmem:[%s275 + $0x18] sm:$0xff] %v282
                %v284 = vld [vmem:[%s274 + $0x40] sm:$0xff]
                %285 = vst [vmem:[%s275 + $0x20] sm:$0xff] %v284
                %v286 = vld [vmem:[%s274 + $0x48] sm:$0xff]
                %287 = vst [vmem:[%s275 + $0x28] sm:$0xff] %v286
                %v288 = vld [vmem:[%s274 + $0x50] sm:$0xff]
                %289 = vst [vmem:[%s275 + $0x30] sm:$0xff] %v288
                %v290 = vld [vmem:[%s274 + $0x58] sm:$0xff]
                %291 = vst [vmem:[%s275 + $0x38] sm:$0xff] %v290
              $region37: #{multi_up_forward.4} parent=31 // loop_footer
                %s273 = sadd.s32 1, %s269
              $region38: #{multi_up_forward.4} parent=31 // loop_footer_branch
                %268 = sbr.rel target = $region34
              $region39: #{multi_up_forward.4} parent=31 // loop_exit
                _
            $region32: #{multi_up_forward.4} parent=27 // pred_fallthru
              _
            // Predicated region
            $region40: #{multi_up_forward.4} parent=27 // pred_check
              _
            $region41: #{multi_up_forward.4} parent=27 // pred_check_branch
              %293 = sbr.rel target = $region43
            $region42: #{multi_up_forward.4} parent=27 // pred_region
              _
            $region43: #{multi_up_forward.4} parent=27 // pred_fallthru
              _
          $region28: #{multi_up_forward.4} parent=23 // pred_fallthru
            _
          %294 = vnop
        $region24: #{multi_up_forward.4} parent=19 // pred_fallthru
          _
        // Predicated region
        $region44: #{multi_up_forward.4} parent=19 // pred_check
          %p295 = pneg %p66
        $region45: #{multi_up_forward.4} parent=19 // pred_check_branch
          %297 = sbr.rel (%p295) target = $region47
        $region46: #{multi_up_forward.4} parent=19 // pred_region
          %s298 = sand.u32 %s56, 1
          %s299 = sand.u32 %s56, 1
          %s300 = smul.addr %s299, 64
          %s301 = scalar_lea.vmem [#allocation3], %s300
          %s302 = smul.u32 8, %s14
          %s303 = smul.addr %s302, 4
          %s304 = scalar_lea.vmem %s1, %s303
          // Predicated region
          $region48: #{multi_up_forward.4} parent=46 // pred_check
            _
          $region49: #{multi_up_forward.4} parent=46 // pred_check_branch
            %306 = sbr.rel (0) target = $region51
          $region50: #{multi_up_forward.4} parent=46 // pred_region
            // Predicated region
            $region52: #{multi_up_forward.4} parent=50 // pred_check
              _
            $region53: #{multi_up_forward.4} parent=50 // pred_check_branch
              %308 = sbr.rel (0) target = $region55
            $region54: #{multi_up_forward.4} parent=50 // pred_region
              loop: start=0, step=1, limit=1
              $region56: #{multi_up_forward.4} parent=54 // loop_pre_header
                _
              $region57: #{multi_up_forward.4} parent=54 // loop_header
                %s310 = sphi 0, %s314
                %p311 = scmp.ge.s32.totalorder %s310, 1
                %s315 = sphi %s304, %s304
                %s316 = sphi %s301, %s301
              $region58: #{multi_up_forward.4} parent=54 // loop_header_branch
                %313 = sbr.rel (%p311) target = $region62
              $region59: #{multi_up_forward.4} parent=54 // loop_body
                %v317 = vld [vmem:[%s315] sm:$0xff]
                %318 = vst [vmem:[%s316] sm:$0xff] %v317
                %v319 = vld [vmem:[%s315 + $0x8] sm:$0xff]
                %320 = vst [vmem:[%s316 + $0x8] sm:$0xff] %v319
                %v321 = vld [vmem:[%s315 + $0x10] sm:$0xff]
                %322 = vst [vmem:[%s316 + $0x10] sm:$0xff] %v321
                %v323 = vld [vmem:[%s315 + $0x18] sm:$0xff]
                %324 = vst [vmem:[%s316 + $0x18] sm:$0xff] %v323
                %v325 = vld [vmem:[%s315 + $0x40] sm:$0xff]
                %326 = vst [vmem:[%s316 + $0x20] sm:$0xff] %v325
                %v327 = vld [vmem:[%s315 + $0x48] sm:$0xff]
                %328 = vst [vmem:[%s316 + $0x28] sm:$0xff] %v327
                %v329 = vld [vmem:[%s315 + $0x50] sm:$0xff]
                %330 = vst [vmem:[%s316 + $0x30] sm:$0xff] %v329
                %v331 = vld [vmem:[%s315 + $0x58] sm:$0xff]
                %332 = vst [vmem:[%s316 + $0x38] sm:$0xff] %v331
              $region60: #{multi_up_forward.4} parent=54 // loop_footer
                %s314 = sadd.s32 1, %s310
              $region61: #{multi_up_forward.4} parent=54 // loop_footer_branch
                %309 = sbr.rel target = $region57
              $region62: #{multi_up_forward.4} parent=54 // loop_exit
                _
            $region55: #{multi_up_forward.4} parent=50 // pred_fallthru
              _
            // Predicated region
            $region63: #{multi_up_forward.4} parent=50 // pred_check
              _
            $region64: #{multi_up_forward.4} parent=50 // pred_check_branch
              %334 = sbr.rel target = $region66
            $region65: #{multi_up_forward.4} parent=50 // pred_region
              _
            $region66: #{multi_up_forward.4} parent=50 // pred_fallthru
              _
          $region51: #{multi_up_forward.4} parent=46 // pred_fallthru
            _
          %335 = vnop
        $region47: #{multi_up_forward.4} parent=19 // pred_fallthru
          _
        // Predicated region
        $region67: #{multi_up_forward.4} parent=19 // pred_check
          %p336 = pneg %p98
        $region68: #{multi_up_forward.4} parent=19 // pred_check_branch
          %338 = sbr.rel (%p336) target = $region70
        $region69: #{multi_up_forward.4} parent=19 // pred_region
          %s339 = sand.u32 %s88, 1
          %s340 = sand.u32 %s88, 1
          %s341 = smul.addr %s340, 64
          %s342 = scalar_lea.vmem [#allocation4], %s341
          %s343 = sadd.s32 %s14, 1
          %p344 = scmp.lt.s32.totalorder %s343, 1
          %s345 = scalar_select %p344, %s343, 1
          %s346 = smul.u32 8, %s345
          %s347 = smul.addr %s346, 4
          %s348 = scalar_lea.vmem %s2, %s347
          // Predicated region
          $region71: #{multi_up_forward.4} parent=69 // pred_check
            _
          $region72: #{multi_up_forward.4} parent=69 // pred_check_branch
            %350 = sbr.rel (0) target = $region74
          $region73: #{multi_up_forward.4} parent=69 // pred_region
            // Predicated region
            $region75: #{multi_up_forward.4} parent=73 // pred_check
              _
            $region76: #{multi_up_forward.4} parent=73 // pred_check_branch
              %352 = sbr.rel (0) target = $region78
            $region77: #{multi_up_forward.4} parent=73 // pred_region
              loop: start=0, step=1, limit=1
              $region79: #{multi_up_forward.4} parent=77 // loop_pre_header
                _
              $region80: #{multi_up_forward.4} parent=77 // loop_header
                %s354 = sphi 0, %s358
                %p355 = scmp.ge.s32.totalorder %s354, 1
                %s359 = sphi %s348, %s348
                %s360 = sphi %s342, %s342
              $region81: #{multi_up_forward.4} parent=77 // loop_header_branch
                %357 = sbr.rel (%p355) target = $region85
              $region82: #{multi_up_forward.4} parent=77 // loop_body
                %v361 = vld [vmem:[%s359] sm:$0xff]
                %362 = vst [vmem:[%s360] sm:$0xff] %v361
                %v363 = vld [vmem:[%s359 + $0x8] sm:$0xff]
                %364 = vst [vmem:[%s360 + $0x8] sm:$0xff] %v363
                %v365 = vld [vmem:[%s359 + $0x10] sm:$0xff]
                %366 = vst [vmem:[%s360 + $0x10] sm:$0xff] %v365
                %v367 = vld [vmem:[%s359 + $0x18] sm:$0xff]
                %368 = vst [vmem:[%s360 + $0x18] sm:$0xff] %v367
                %v369 = vld [vmem:[%s359 + $0x40] sm:$0xff]
                %370 = vst [vmem:[%s360 + $0x20] sm:$0xff] %v369
                %v371 = vld [vmem:[%s359 + $0x48] sm:$0xff]
                %372 = vst [vmem:[%s360 + $0x28] sm:$0xff] %v371
                %v373 = vld [vmem:[%s359 + $0x50] sm:$0xff]
                %374 = vst [vmem:[%s360 + $0x30] sm:$0xff] %v373
                %v375 = vld [vmem:[%s359 + $0x58] sm:$0xff]
                %376 = vst [vmem:[%s360 + $0x38] sm:$0xff] %v375
              $region83: #{multi_up_forward.4} parent=77 // loop_footer
                %s358 = sadd.s32 1, %s354
              $region84: #{multi_up_forward.4} parent=77 // loop_footer_branch
                %353 = sbr.rel target = $region80
              $region85: #{multi_up_forward.4} parent=77 // loop_exit
                _
            $region78: #{multi_up_forward.4} parent=73 // pred_fallthru
              _
            // Predicated region
            $region86: #{multi_up_forward.4} parent=73 // pred_check
              _
            $region87: #{multi_up_forward.4} parent=73 // pred_check_branch
              %378 = sbr.rel target = $region89
            $region88: #{multi_up_forward.4} parent=73 // pred_region
              _
            $region89: #{multi_up_forward.4} parent=73 // pred_fallthru
              _
          $region74: #{multi_up_forward.4} parent=69 // pred_fallthru
            _
          %379 = vnop
        $region70: #{multi_up_forward.4} parent=19 // pred_fallthru
          _
        // Predicated region
        $region90: #{multi_up_forward.4} parent=19 // pred_check
          %p380 = pneg %p145
        $region91: #{multi_up_forward.4} parent=19 // pred_check_branch
          %382 = sbr.rel (%p380) target = $region93
        $region92: #{multi_up_forward.4} parent=19 // pred_region
          %s383 = smul.u32 8, %s14
          %p384 = scmp.lt.s32.totalorder %s383, 15
          %s385 = scalar_select %p384, %s383, 15
          %s386 = scalar_lea.vmem %s4, %s385
          %s387 = smul.u32 8, %s14
        $region93: #{multi_up_forward.4} parent=19 // pred_fallthru
          _
      $region20: #{multi_up_forward.4} parent=5 // pred_fallthru
        _
      %p388 = scmp.le.s32.totalorder 1, %s14
      %p389 = scmp.lt.s32.totalorder %s14, 3
      %p390 = pnand %p388, %p389
      %p391 = pneg %p390
      // Predicated region
      $region94: #{multi_up_forward.4} parent=5 // pred_check
        _
      $region95: #{multi_up_forward.4} parent=5 // pred_check_branch
        %393 = sbr.rel (%p390) target = $region97
      $region96: #{multi_up_forward.4} parent=5 // pred_region
        %s394 = ssub.s32 %s14, 1
        %s395 = sand.u32 %s33, 1
        %s396 = sand.u32 %s33, 1
        %s397 = smul.addr %s396, 64
        %s398 = scalar_lea.vmem [#allocation2], %s397
        // Predicated region
        $region98: #{multi_up_forward.4} parent=96 // pred_check
          %p399 = pneg %p46
        $region99: #{multi_up_forward.4} parent=96 // pred_check_branch
          %401 = sbr.rel (%p399) target = $region101
        $region100: #{multi_up_forward.4} parent=96 // pred_region
          _
        $region101: #{multi_up_forward.4} parent=96 // pred_fallthru
          _
        %s402 = sand.u32 %s59, 1
        %s403 = sand.u32 %s59, 1
        %s404 = smul.addr %s403, 64
        %s405 = scalar_lea.vmem [#allocation3], %s404
        // Predicated region
        $region102: #{multi_up_forward.4} parent=96 // pred_check
          %p406 = pneg %p72
        $region103: #{multi_up_forward.4} parent=96 // pred_check_branch
          %408 = sbr.rel (%p406) target = $region105
        $region104: #{multi_up_forward.4} parent=96 // pred_region
          _
        $region105: #{multi_up_forward.4} parent=96 // pred_fallthru
          _
        %s409 = sand.u32 %s91, 1
        %s410 = sand.u32 %s91, 1
        %s411 = smul.addr %s410, 64
        %s412 = scalar_lea.vmem [#allocation4], %s411
        // Predicated region
        $region106: #{multi_up_forward.4} parent=96 // pred_check
          %p413 = pneg %p104
        $region107: #{multi_up_forward.4} parent=96 // pred_check_branch
          %415 = sbr.rel (%p413) target = $region109
        $region108: #{multi_up_forward.4} parent=96 // pred_region
          _
        $region109: #{multi_up_forward.4} parent=96 // pred_fallthru
          _
        %s416 = sand.u32 %s33, 1
        %s417 = sand.u32 %s33, 1
        %s418 = smul.addr %s417, 64
        %s419 = scalar_lea.vmem [#allocation2], %s418
        %p420 = pneg %p46
        %p421 = pneg %p43
        %s422 = sand.u32 %s59, 1
        %s423 = sand.u32 %s59, 1
        %s424 = smul.addr %s423, 64
        %s425 = scalar_lea.vmem [#allocation3], %s424
        %p426 = pneg %p72
        %p427 = pneg %p69
        %s428 = sand.u32 %s91, 1
        %s429 = sand.u32 %s91, 1
        %s430 = smul.addr %s429, 64
        %s431 = scalar_lea.vmem [#allocation4], %s430
        %p432 = pneg %p104
        %p433 = pneg %p101
        %p434 = pneg %p125
        %p435 = pneg %p122
        %s436 = smul.u32 8, %s19
        %p437 = scmp.lt.s32.totalorder %s436, 15
        %s438 = scalar_select %p437, %s436, 15
        %s439 = scalar_lea.vmem %s4, %s438
        %p440 = pneg %p151
        %p441 = pneg %p148
        %p442 = pneg %p177
        %p443 = pneg %p174
        %s444 = sand.u32 %s164, 1
        %s445 = sand.u32 %s164, 1
        %s446 = smul.addr %s445, 64
        %s447 = scalar_lea.vmem [#allocation5], %s446
        %p448 = pneg %p203
        %p449 = pneg %p200
        %s450 = sand.u32 %s190, 1
        %s451 = sand.u32 %s190, 1
        %s452 = smul.addr %s451, 16
        %s453 = scalar_lea.vmem [#allocation6], %s452
        %p454 = pneg %p229
        %p455 = pneg %p226
        %s456 = sand.u32 %s216, 1
        %s457 = sand.u32 %s216, 1
        %s458 = smul.addr %s457, 16
        %s459 = scalar_lea.vmem [#allocation7], %s458
        %s460 = ssub.s32 %s19, 1
        %p461 = scmp.gt.s32.totalorder %s460, 0
        %s462 = scalar_select %p461, %s460, 0
        %s463 = smul.u32 8, %s462
        %s464 = smul.u32 8, %s19
        %s465 = sadd.s32 %s19, 1
        %p466 = scmp.lt.s32.totalorder %s465, 1
        %s467 = scalar_select %p466, %s465, 1
        %s468 = smul.u32 8, %s467
        %s469 = smul.u32 8, %s19
        %p470 = scmp.lt.s32.totalorder %s469, 15
        %s471 = scalar_select %p470, %s469, 15
        %s472 = scalar_lea.vmem %s4, %s471
        %s473 = smul.u32 8, %s19
        %s474 = smul.u32 8, %s19
        %v476 = vld [vmem:[%s398 + $0x18] sm:$0xff]
        %v477 = vld [vmem:[%s398 + $0x38] sm:$0xff]
        %v478 = vld [vmem:[%s405] sm:$0xff]
        %v479 = vld [vmem:[%s405 + $0x8] sm:$0xff]
        %v480 = vld [vmem:[%s405 + $0x10] sm:$0xff]
        %v481 = vld [vmem:[%s405 + $0x18] sm:$0xff]
        %v482 = vld [vmem:[%s405 + $0x20] sm:$0xff]
        %v483 = vld [vmem:[%s405 + $0x28] sm:$0xff]
        %v484 = vld [vmem:[%s405 + $0x30] sm:$0xff]
        %v485 = vld [vmem:[%s405 + $0x38] sm:$0xff]
        %v486 = vld [vmem:[%s412] sm:$0xff]
        %v487 = vld [vmem:[%s412 + $0x20] sm:$0xff]
        %v490 = vunpack.c.h.b16 %v476
        %v491 = vunpack.c.h.b16 %v477
        %v492 = vpack.c.b16 %v491, %v490
        %v501 = vunpack.c.l.b16 %v478
        %v502 = vunpack.c.h.b16 %v478
        %v503 = vunpack.c.l.b16 %v479
        %v504 = vunpack.c.h.b16 %v479
        %v505 = vunpack.c.l.b16 %v480
        %v506 = vunpack.c.h.b16 %v480
        %v507 = vunpack.c.l.b16 %v481
        %v508 = vunpack.c.h.b16 %v481
        %v509 = vunpack.c.l.b16 %v482
        %v510 = vunpack.c.h.b16 %v482
        %v511 = vunpack.c.l.b16 %v483
        %v512 = vunpack.c.h.b16 %v483
        %v513 = vunpack.c.l.b16 %v484
        %v514 = vunpack.c.h.b16 %v484
        %v515 = vunpack.c.l.b16 %v485
        %v516 = vunpack.c.h.b16 %v485
        %v517 = vpack.c.b16 %v509, %v501
        %v518 = vpack.c.b16 %v510, %v502
        %v519 = vpack.c.b16 %v511, %v503
        %v520 = vpack.c.b16 %v512, %v504
        %v521 = vpack.c.b16 %v513, %v505
        %v522 = vpack.c.b16 %v514, %v506
        %v523 = vpack.c.b16 %v515, %v507
        %v524 = vpack.c.b16 %v516, %v508
        %v527 = vunpack.c.l.b16 %v486
        %v528 = vunpack.c.l.b16 %v487
        %v529 = vpack.c.b16 %v528, %v527
        %530 = vrot.lane.b32.xlu0 %v492, 127
        %v531 = vpop.permute.xlu0 %530
        %532 = vrot.lane.b32.xlu0 %v517, 127
        %v533 = vpop.permute.xlu0 %532
        %534 = vrot.lane.b32.xlu0 %v518, 127
        %v535 = vpop.permute.xlu0 %534
        %536 = vrot.lane.b32.xlu0 %v519, 127
        %v537 = vpop.permute.xlu0 %536
        %538 = vrot.lane.b32.xlu0 %v520, 127
        %v539 = vpop.permute.xlu0 %538
        %540 = vrot.lane.b32.xlu0 %v521, 127
        %v541 = vpop.permute.xlu0 %540
        %542 = vrot.lane.b32.xlu0 %v522, 127
        %v543 = vpop.permute.xlu0 %542
        %544 = vrot.lane.b32.xlu0 %v523, 127
        %v545 = vpop.permute.xlu0 %544
        %546 = vrot.lane.b32.xlu0 %v524, 127
        %v547 = vpop.permute.xlu0 %546
        %vm548 = vcmask 1039360
        %v549 = vsel %vm548, %v531, %v533
        %v550 = vsel %vm548, %v533, %v535
        %v551 = vsel %vm548, %v535, %v537
        %v552 = vsel %vm548, %v537, %v539
        %v553 = vsel %vm548, %v539, %v541
        %v554 = vsel %vm548, %v541, %v543
        %v555 = vsel %vm548, %v543, %v545
        %v556 = vsel %vm548, %v545, %v547
        %557 = vrot.lane.b32.xlu0 %v492, 126
        %v558 = vpop.permute.xlu0 %557
        %559 = vrot.lane.b32.xlu0 %v517, 126
        %v560 = vpop.permute.xlu0 %559
        %561 = vrot.lane.b32.xlu0 %v518, 126
        %v562 = vpop.permute.xlu0 %561
        %563 = vrot.lane.b32.xlu0 %v519, 126
        %v564 = vpop.permute.xlu0 %563
        %565 = vrot.lane.b32.xlu0 %v520, 126
        %v566 = vpop.permute.xlu0 %565
        %567 = vrot.lane.b32.xlu0 %v521, 126
        %v568 = vpop.permute.xlu0 %567
        %569 = vrot.lane.b32.xlu0 %v522, 126
        %v570 = vpop.permute.xlu0 %569
        %571 = vrot.lane.b32.xlu0 %v523, 126
        %v572 = vpop.permute.xlu0 %571
        %573 = vrot.lane.b32.xlu0 %v524, 126
        %v574 = vpop.permute.xlu0 %573
        %vm575 = vcmask 1031168
        %v576 = vsel %vm575, %v558, %v560
        %v577 = vsel %vm575, %v560, %v562
        %v578 = vsel %vm575, %v562, %v564
        %v579 = vsel %vm575, %v564, %v566
        %v580 = vsel %vm575, %v566, %v568
        %v581 = vsel %vm575, %v568, %v570
        %v582 = vsel %vm575, %v570, %v572
        %v583 = vsel %vm575, %v572, %v574
        %584 = vrot.lane.b32.xlu0 %v492, 118
        %v585 = vpop.permute.xlu0 %584
        %586 = vrot.lane.b32.xlu0 %v517, 118
        %v587 = vpop.permute.xlu0 %586
        %588 = vrot.lane.b32.xlu0 %v518, 118
        %v589 = vpop.permute.xlu0 %588
        %590 = vrot.lane.b32.xlu0 %v519, 118
        %v591 = vpop.permute.xlu0 %590
        %592 = vrot.lane.b32.xlu0 %v520, 118
        %v593 = vpop.permute.xlu0 %592
        %594 = vrot.lane.b32.xlu0 %v521, 118
        %v595 = vpop.permute.xlu0 %594
        %596 = vrot.lane.b32.xlu0 %v522, 118
        %v597 = vpop.permute.xlu0 %596
        %598 = vrot.lane.b32.xlu0 %v523, 118
        %v599 = vpop.permute.xlu0 %598
        %600 = vrot.lane.b32.xlu0 %v524, 118
        %v601 = vpop.permute.xlu0 %600
        %vm602 = vcmask 965632
        %v603 = vsel %vm602, %v585, %v587
        %v604 = vsel %vm602, %v587, %v589
        %v605 = vsel %vm602, %v589, %v591
        %v606 = vsel %vm602, %v591, %v593
        %v607 = vsel %vm602, %v593, %v595
        %v608 = vsel %vm602, %v595, %v597
        %v609 = vsel %vm602, %v597, %v599
        %v610 = vsel %vm602, %v599, %v601
        %611 = vrot.lane.b32.xlu0 %v492, 117
        %v612 = vpop.permute.xlu0 %611
        %613 = vrot.lane.b32.xlu0 %v517, 117
        %v614 = vpop.permute.xlu0 %613
        %615 = vrot.lane.b32.xlu0 %v518, 117
        %v616 = vpop.permute.xlu0 %615
        %617 = vrot.lane.b32.xlu0 %v519, 117
        %v618 = vpop.permute.xlu0 %617
        %619 = vrot.lane.b32.xlu0 %v520, 117
        %v620 = vpop.permute.xlu0 %619
        %621 = vrot.lane.b32.xlu0 %v521, 117
        %v622 = vpop.permute.xlu0 %621
        %623 = vrot.lane.b32.xlu0 %v522, 117
        %v624 = vpop.permute.xlu0 %623
        %625 = vrot.lane.b32.xlu0 %v523, 117
        %v626 = vpop.permute.xlu0 %625
        %627 = vrot.lane.b32.xlu0 %v524, 117
        %v628 = vpop.permute.xlu0 %627
        %vm629 = vcmask 957440
        %v630 = vsel %vm629, %v612, %v614
        %v631 = vsel %vm629, %v614, %v616
        %v632 = vsel %vm629, %v616, %v618
        %v633 = vsel %vm629, %v618, %v620
        %v634 = vsel %vm629, %v620, %v622
        %v635 = vsel %vm629, %v622, %v624
        %v636 = vsel %vm629, %v624, %v626
        %v637 = vsel %vm629, %v626, %v628
        %638 = vrot.lane.b32.xlu0 %v492, 116
        %v639 = vpop.permute.xlu0 %638
        %640 = vrot.lane.b32.xlu0 %v517, 116
        %v641 = vpop.permute.xlu0 %640
        %642 = vrot.lane.b32.xlu0 %v518, 116
        %v643 = vpop.permute.xlu0 %642
        %644 = vrot.lane.b32.xlu0 %v519, 116
        %v645 = vpop.permute.xlu0 %644
        %646 = vrot.lane.b32.xlu0 %v520, 116
        %v647 = vpop.permute.xlu0 %646
        %648 = vrot.lane.b32.xlu0 %v521, 116
        %v649 = vpop.permute.xlu0 %648
        %650 = vrot.lane.b32.xlu0 %v522, 116
        %v651 = vpop.permute.xlu0 %650
        %652 = vrot.lane.b32.xlu0 %v523, 116
        %v653 = vpop.permute.xlu0 %652
        %654 = vrot.lane.b32.xlu0 %v524, 116
        %v655 = vpop.permute.xlu0 %654
        %vm656 = vcmask 949248
        %v657 = vsel %vm656, %v639, %v641
        %v658 = vsel %vm656, %v641, %v643
        %v659 = vsel %vm656, %v643, %v645
        %v660 = vsel %vm656, %v645, %v647
        %v661 = vsel %vm656, %v647, %v649
        %v662 = vsel %vm656, %v649, %v651
        %v663 = vsel %vm656, %v651, %v653
        %v664 = vsel %vm656, %v653, %v655
        %665 = vrot.lane.b32.xlu0 %v492, 108
        %v666 = vpop.permute.xlu0 %665
        %667 = vrot.lane.b32.xlu0 %v517, 108
        %v668 = vpop.permute.xlu0 %667
        %669 = vrot.lane.b32.xlu0 %v518, 108
        %v670 = vpop.permute.xlu0 %669
        %671 = vrot.lane.b32.xlu0 %v519, 108
        %v672 = vpop.permute.xlu0 %671
        %673 = vrot.lane.b32.xlu0 %v520, 108
        %v674 = vpop.permute.xlu0 %673
        %675 = vrot.lane.b32.xlu0 %v521, 108
        %v676 = vpop.permute.xlu0 %675
        %677 = vrot.lane.b32.xlu0 %v522, 108
        %v678 = vpop.permute.xlu0 %677
        %679 = vrot.lane.b32.xlu0 %v523, 108
        %v680 = vpop.permute.xlu0 %679
        %681 = vrot.lane.b32.xlu0 %v524, 108
        %v682 = vpop.permute.xlu0 %681
        %vm683 = vcmask 883712
        %v684 = vsel %vm683, %v666, %v668
        %v685 = vsel %vm683, %v668, %v670
        %v686 = vsel %vm683, %v670, %v672
        %v687 = vsel %vm683, %v672, %v674
        %v688 = vsel %vm683, %v674, %v676
        %v689 = vsel %vm683, %v676, %v678
        %v690 = vsel %vm683, %v678, %v680
        %v691 = vsel %vm683, %v680, %v682
        %692 = vrot.lane.b32.xlu0 %v492, 107
        %v693 = vpop.permute.xlu0 %692
        %694 = vrot.lane.b32.xlu0 %v517, 107
        %v695 = vpop.permute.xlu0 %694
        %696 = vrot.lane.b32.xlu0 %v518, 107
        %v697 = vpop.permute.xlu0 %696
        %698 = vrot.lane.b32.xlu0 %v519, 107
        %v699 = vpop.permute.xlu0 %698
        %700 = vrot.lane.b32.xlu0 %v520, 107
        %v701 = vpop.permute.xlu0 %700
        %702 = vrot.lane.b32.xlu0 %v521, 107
        %v703 = vpop.permute.xlu0 %702
        %704 = vrot.lane.b32.xlu0 %v522, 107
        %v705 = vpop.permute.xlu0 %704
        %706 = vrot.lane.b32.xlu0 %v523, 107
        %v707 = vpop.permute.xlu0 %706
        %708 = vrot.lane.b32.xlu0 %v524, 107
        %v709 = vpop.permute.xlu0 %708
        %vm710 = vcmask 875520
        %v711 = vsel %vm710, %v693, %v695
        %v712 = vsel %vm710, %v695, %v697
        %v713 = vsel %vm710, %v697, %v699
        %v714 = vsel %vm710, %v699, %v701
        %v715 = vsel %vm710, %v701, %v703
        %v716 = vsel %vm710, %v703, %v705
        %v717 = vsel %vm710, %v705, %v707
        %v718 = vsel %vm710, %v707, %v709
        %719 = vrot.lane.b32.xlu0 %v492, 106
        %v720 = vpop.permute.xlu0 %719
        %721 = vrot.lane.b32.xlu0 %v517, 106
        %v722 = vpop.permute.xlu0 %721
        %723 = vrot.lane.b32.xlu0 %v518, 106
        %v724 = vpop.permute.xlu0 %723
        %725 = vrot.lane.b32.xlu0 %v519, 106
        %v726 = vpop.permute.xlu0 %725
        %727 = vrot.lane.b32.xlu0 %v520, 106
        %v728 = vpop.permute.xlu0 %727
        %729 = vrot.lane.b32.xlu0 %v521, 106
        %v730 = vpop.permute.xlu0 %729
        %731 = vrot.lane.b32.xlu0 %v522, 106
        %v732 = vpop.permute.xlu0 %731
        %733 = vrot.lane.b32.xlu0 %v523, 106
        %v734 = vpop.permute.xlu0 %733
        %735 = vrot.lane.b32.xlu0 %v524, 106
        %v736 = vpop.permute.xlu0 %735
        %vm737 = vcmask 867328
        %v738 = vsel %vm737, %v720, %v722
        %v739 = vsel %vm737, %v722, %v724
        %v740 = vsel %vm737, %v724, %v726
        %v741 = vsel %vm737, %v726, %v728
        %v742 = vsel %vm737, %v728, %v730
        %v743 = vsel %vm737, %v730, %v732
        %v744 = vsel %vm737, %v732, %v734
        %v745 = vsel %vm737, %v734, %v736
        %746 = vrot.lane.b32.xlu0 %v492, 28
        %v747 = vpop.permute.xlu0 %746
        %748 = vrot.lane.b32.xlu0 %v517, 28
        %v749 = vpop.permute.xlu0 %748
        %750 = vrot.lane.b32.xlu0 %v518, 28
        %v751 = vpop.permute.xlu0 %750
        %752 = vrot.lane.b32.xlu0 %v519, 28
        %v753 = vpop.permute.xlu0 %752
        %754 = vrot.lane.b32.xlu0 %v520, 28
        %v755 = vpop.permute.xlu0 %754
        %756 = vrot.lane.b32.xlu0 %v521, 28
        %v757 = vpop.permute.xlu0 %756
        %758 = vrot.lane.b32.xlu0 %v522, 28
        %v759 = vpop.permute.xlu0 %758
        %760 = vrot.lane.b32.xlu0 %v523, 28
        %v761 = vpop.permute.xlu0 %760
        %762 = vrot.lane.b32.xlu0 %v524, 28
        %v763 = vpop.permute.xlu0 %762
        %vm764 = vcmask 228352
        %v765 = vsel %vm764, %v747, %v749
        %v766 = vsel %vm764, %v749, %v751
        %v767 = vsel %vm764, %v751, %v753
        %v768 = vsel %vm764, %v753, %v755
        %v769 = vsel %vm764, %v755, %v757
        %v770 = vsel %vm764, %v757, %v759
        %v771 = vsel %vm764, %v759, %v761
        %v772 = vsel %vm764, %v761, %v763
        %773 = vrot.lane.b32.xlu0 %v492, 27
        %v774 = vpop.permute.xlu0 %773
        %775 = vrot.lane.b32.xlu0 %v517, 27
        %v776 = vpop.permute.xlu0 %775
        %777 = vrot.lane.b32.xlu0 %v518, 27
        %v778 = vpop.permute.xlu0 %777
        %779 = vrot.lane.b32.xlu0 %v519, 27
        %v780 = vpop.permute.xlu0 %779
        %781 = vrot.lane.b32.xlu0 %v520, 27
        %v782 = vpop.permute.xlu0 %781
        %783 = vrot.lane.b32.xlu0 %v521, 27
        %v784 = vpop.permute.xlu0 %783
        %785 = vrot.lane.b32.xlu0 %v522, 27
        %v786 = vpop.permute.xlu0 %785
        %787 = vrot.lane.b32.xlu0 %v523, 27
        %v788 = vpop.permute.xlu0 %787
        %789 = vrot.lane.b32.xlu0 %v524, 27
        %v790 = vpop.permute.xlu0 %789
        %vm791 = vcmask 220160
        %v792 = vsel %vm791, %v774, %v776
        %v793 = vsel %vm791, %v776, %v778
        %v794 = vsel %vm791, %v778, %v780
        %v795 = vsel %vm791, %v780, %v782
        %v796 = vsel %vm791, %v782, %v784
        %v797 = vsel %vm791, %v784, %v786
        %v798 = vsel %vm791, %v786, %v788
        %v799 = vsel %vm791, %v788, %v790
        %800 = vrot.lane.b32.xlu0 %v492, 26
        %v801 = vpop.permute.xlu0 %800
        %802 = vrot.lane.b32.xlu0 %v517, 26
        %v803 = vpop.permute.xlu0 %802
        %804 = vrot.lane.b32.xlu0 %v518, 26
        %v805 = vpop.permute.xlu0 %804
        %806 = vrot.lane.b32.xlu0 %v519, 26
        %v807 = vpop.permute.xlu0 %806
        %808 = vrot.lane.b32.xlu0 %v520, 26
        %v809 = vpop.permute.xlu0 %808
        %810 = vrot.lane.b32.xlu0 %v521, 26
        %v811 = vpop.permute.xlu0 %810
        %812 = vrot.lane.b32.xlu0 %v522, 26
        %v813 = vpop.permute.xlu0 %812
        %814 = vrot.lane.b32.xlu0 %v523, 26
        %v815 = vpop.permute.xlu0 %814
        %816 = vrot.lane.b32.xlu0 %v524, 26
        %v817 = vpop.permute.xlu0 %816
        %vm818 = vcmask 211968
        %v819 = vsel %vm818, %v801, %v803
        %v820 = vsel %vm818, %v803, %v805
        %v821 = vsel %vm818, %v805, %v807
        %v822 = vsel %vm818, %v807, %v809
        %v823 = vsel %vm818, %v809, %v811
        %v824 = vsel %vm818, %v811, %v813
        %v825 = vsel %vm818, %v813, %v815
        %v826 = vsel %vm818, %v815, %v817
        %827 = vrot.lane.b32.xlu0 %v492, 18
        %v828 = vpop.permute.xlu0 %827
        %829 = vrot.lane.b32.xlu0 %v517, 18
        %v830 = vpop.permute.xlu0 %829
        %831 = vrot.lane.b32.xlu0 %v518, 18
        %v832 = vpop.permute.xlu0 %831
        %833 = vrot.lane.b32.xlu0 %v519, 18
        %v834 = vpop.permute.xlu0 %833
        %835 = vrot.lane.b32.xlu0 %v520, 18
        %v836 = vpop.permute.xlu0 %835
        %837 = vrot.lane.b32.xlu0 %v521, 18
        %v838 = vpop.permute.xlu0 %837
        %839 = vrot.lane.b32.xlu0 %v522, 18
        %v840 = vpop.permute.xlu0 %839
        %841 = vrot.lane.b32.xlu0 %v523, 18
        %v842 = vpop.permute.xlu0 %841
        %843 = vrot.lane.b32.xlu0 %v524, 18
        %v844 = vpop.permute.xlu0 %843
        %vm845 = vcmask 146432
        %v846 = vsel %vm845, %v828, %v830
        %v847 = vsel %vm845, %v830, %v832
        %v848 = vsel %vm845, %v832, %v834
        %v849 = vsel %vm845, %v834, %v836
        %v850 = vsel %vm845, %v836, %v838
        %v851 = vsel %vm845, %v838, %v840
        %v852 = vsel %vm845, %v840, %v842
        %v853 = vsel %vm845, %v842, %v844
        %854 = vrot.lane.b32.xlu0 %v517, 17
        %v855 = vpop.permute.xlu0 %854
        %856 = vrot.lane.b32.xlu0 %v518, 17
        %v857 = vpop.permute.xlu0 %856
        %858 = vrot.lane.b32.xlu0 %v519, 17
        %v859 = vpop.permute.xlu0 %858
        %860 = vrot.lane.b32.xlu0 %v520, 17
        %v861 = vpop.permute.xlu0 %860
        %862 = vrot.lane.b32.xlu0 %v521, 17
        %v863 = vpop.permute.xlu0 %862
        %864 = vrot.lane.b32.xlu0 %v522, 17
        %v865 = vpop.permute.xlu0 %864
        %866 = vrot.lane.b32.xlu0 %v523, 17
        %v867 = vpop.permute.xlu0 %866
        %868 = vrot.lane.b32.xlu0 %v524, 17
        %v869 = vpop.permute.xlu0 %868
        %vm870 = vcmask 138240
        %v871 = vsel %vm870, %v855, %v857
        %v872 = vsel %vm870, %v857, %v859
        %v873 = vsel %vm870, %v859, %v861
        %v874 = vsel %vm870, %v861, %v863
        %v875 = vsel %vm870, %v863, %v865
        %v876 = vsel %vm870, %v865, %v867
        %v877 = vsel %vm870, %v867, %v869
        %878 = vrot.lane.b32.xlu0 %v517, 16
        %v879 = vpop.permute.xlu0 %878
        %880 = vrot.lane.b32.xlu0 %v518, 16
        %v881 = vpop.permute.xlu0 %880
        %882 = vrot.lane.b32.xlu0 %v519, 16
        %v883 = vpop.permute.xlu0 %882
        %884 = vrot.lane.b32.xlu0 %v520, 16
        %v885 = vpop.permute.xlu0 %884
        %886 = vrot.lane.b32.xlu0 %v521, 16
        %v887 = vpop.permute.xlu0 %886
        %888 = vrot.lane.b32.xlu0 %v522, 16
        %v889 = vpop.permute.xlu0 %888
        %890 = vrot.lane.b32.xlu0 %v523, 16
        %v891 = vpop.permute.xlu0 %890
        %892 = vrot.lane.b32.xlu0 %v524, 16
        %v893 = vpop.permute.xlu0 %892
        %894 = vrot.lane.b32.xlu0 %v529, 16
        %v895 = vpop.permute.xlu0 %894
        %vm896 = vcmask 130048
        %v897 = vsel %vm896, %v879, %v881
        %v898 = vsel %vm896, %v881, %v883
        %v899 = vsel %vm896, %v883, %v885
        %v900 = vsel %vm896, %v885, %v887
        %v901 = vsel %vm896, %v887, %v889
        %v902 = vsel %vm896, %v889, %v891
        %v903 = vsel %vm896, %v891, %v893
        %v904 = vsel %vm896, %v893, %v895
        %905 = vrot.lane.b32.xlu0 %v517, 8
        %v906 = vpop.permute.xlu0 %905
        %907 = vrot.lane.b32.xlu0 %v518, 8
        %v908 = vpop.permute.xlu0 %907
        %909 = vrot.lane.b32.xlu0 %v519, 8
        %v910 = vpop.permute.xlu0 %909
        %911 = vrot.lane.b32.xlu0 %v520, 8
        %v912 = vpop.permute.xlu0 %911
        %913 = vrot.lane.b32.xlu0 %v521, 8
        %v914 = vpop.permute.xlu0 %913
        %915 = vrot.lane.b32.xlu0 %v522, 8
        %v916 = vpop.permute.xlu0 %915
        %917 = vrot.lane.b32.xlu0 %v523, 8
        %v918 = vpop.permute.xlu0 %917
        %919 = vrot.lane.b32.xlu0 %v524, 8
        %v920 = vpop.permute.xlu0 %919
        %921 = vrot.lane.b32.xlu0 %v529, 8
        %v922 = vpop.permute.xlu0 %921
        %vm923 = vcmask 64512
        %v924 = vsel %vm923, %v906, %v908
        %v925 = vsel %vm923, %v908, %v910
        %v926 = vsel %vm923, %v910, %v912
        %v927 = vsel %vm923, %v912, %v914
        %v928 = vsel %vm923, %v914, %v916
        %v929 = vsel %vm923, %v916, %v918
        %v930 = vsel %vm923, %v918, %v920
        %v931 = vsel %vm923, %v920, %v922
        %932 = vrot.lane.b32.xlu0 %v529, 127
        %v933 = vpop.permute.xlu0 %932
        %v934 = vsel %vm548, %v547, %v933
        %935 = vrot.lane.b32.xlu0 %v517, 49
        %v936 = vpop.permute.xlu0 %935
        %937 = vrot.lane.b32.xlu0 %v518, 49
        %v938 = vpop.permute.xlu0 %937
        %939 = vrot.lane.b32.xlu0 %v519, 49
        %v940 = vpop.permute.xlu0 %939
        %941 = vrot.lane.b32.xlu0 %v520, 49
        %v942 = vpop.permute.xlu0 %941
        %943 = vrot.lane.b32.xlu0 %v521, 49
        %v944 = vpop.permute.xlu0 %943
        %945 = vrot.lane.b32.xlu0 %v522, 49
        %v946 = vpop.permute.xlu0 %945
        %947 = vrot.lane.b32.xlu0 %v523, 49
        %v948 = vpop.permute.xlu0 %947
        %949 = vrot.lane.b32.xlu0 %v524, 49
        %v950 = vpop.permute.xlu0 %949
        %951 = vrot.lane.b32.xlu0 %v529, 49
        %v952 = vpop.permute.xlu0 %951
        %vm953 = vcmask 400384
        %v954 = vsel %vm953, %v936, %v938
        %v955 = vsel %vm953, %v938, %v940
        %v956 = vsel %vm953, %v940, %v942
        %v957 = vsel %vm953, %v942, %v944
        %v958 = vsel %vm953, %v944, %v946
        %v959 = vsel %vm953, %v946, %v948
        %v960 = vsel %vm953, %v948, %v950
        %v961 = vsel %vm953, %v950, %v952
        %962 = vrot.lane.b32.xlu0 %v517, 48
        %v963 = vpop.permute.xlu0 %962
        %964 = vrot.lane.b32.xlu0 %v518, 48
        %v965 = vpop.permute.xlu0 %964
        %966 = vrot.lane.b32.xlu0 %v519, 48
        %v967 = vpop.permute.xlu0 %966
        %968 = vrot.lane.b32.xlu0 %v520, 48
        %v969 = vpop.permute.xlu0 %968
        %970 = vrot.lane.b32.xlu0 %v521, 48
        %v971 = vpop.permute.xlu0 %970
        %972 = vrot.lane.b32.xlu0 %v522, 48
        %v973 = vpop.permute.xlu0 %972
        %974 = vrot.lane.b32.xlu0 %v523, 48
        %v975 = vpop.permute.xlu0 %974
        %976 = vrot.lane.b32.xlu0 %v524, 48
        %v977 = vpop.permute.xlu0 %976
        %978 = vrot.lane.b32.xlu0 %v529, 48
        %v979 = vpop.permute.xlu0 %978
        %vm980 = vcmask 392192
        %v981 = vsel %vm980, %v963, %v965
        %v982 = vsel %vm980, %v965, %v967
        %v983 = vsel %vm980, %v967, %v969
        %v984 = vsel %vm980, %v969, %v971
        %v985 = vsel %vm980, %v971, %v973
        %v986 = vsel %vm980, %v973, %v975
        %v987 = vsel %vm980, %v975, %v977
        %v988 = vsel %vm980, %v977, %v979
        %989 = vrot.lane.b32.xlu0 %v517, 47
        %v990 = vpop.permute.xlu0 %989
        %991 = vrot.lane.b32.xlu0 %v518, 47
        %v992 = vpop.permute.xlu0 %991
        %993 = vrot.lane.b32.xlu0 %v519, 47
        %v994 = vpop.permute.xlu0 %993
        %995 = vrot.lane.b32.xlu0 %v520, 47
        %v996 = vpop.permute.xlu0 %995
        %997 = vrot.lane.b32.xlu0 %v521, 47
        %v998 = vpop.permute.xlu0 %997
        %999 = vrot.lane.b32.xlu0 %v522, 47
        %v1000 = vpop.permute.xlu0 %999
        %1001 = vrot.lane.b32.xlu0 %v523, 47
        %v1002 = vpop.permute.xlu0 %1001
        %1003 = vrot.lane.b32.xlu0 %v524, 47
        %v1004 = vpop.permute.xlu0 %1003
        %1005 = vrot.lane.b32.xlu0 %v529, 47
        %v1006 = vpop.permute.xlu0 %1005
        %vm1007 = vcmask 384000
        %v1008 = vsel %vm1007, %v990, %v992
        %v1009 = vsel %vm1007, %v992, %v994
        %v1010 = vsel %vm1007, %v994, %v996
        %v1011 = vsel %vm1007, %v996, %v998
        %v1012 = vsel %vm1007, %v998, %v1000
        %v1013 = vsel %vm1007, %v1000, %v1002
        %v1014 = vsel %vm1007, %v1002, %v1004
        %v1015 = vsel %vm1007, %v1004, %v1006
        %1016 = vrot.lane.b32.xlu0 %v517, 39
        %v1017 = vpop.permute.xlu0 %1016
        %1018 = vrot.lane.b32.xlu0 %v518, 39
        %v1019 = vpop.permute.xlu0 %1018
        %1020 = vrot.lane.b32.xlu0 %v519, 39
        %v1021 = vpop.permute.xlu0 %1020
        %1022 = vrot.lane.b32.xlu0 %v520, 39
        %v1023 = vpop.permute.xlu0 %1022
        %1024 = vrot.lane.b32.xlu0 %v521, 39
        %v1025 = vpop.permute.xlu0 %1024
        %1026 = vrot.lane.b32.xlu0 %v522, 39
        %v1027 = vpop.permute.xlu0 %1026
        %1028 = vrot.lane.b32.xlu0 %v523, 39
        %v1029 = vpop.permute.xlu0 %1028
        %1030 = vrot.lane.b32.xlu0 %v524, 39
        %v1031 = vpop.permute.xlu0 %1030
        %1032 = vrot.lane.b32.xlu0 %v529, 39
        %v1033 = vpop.permute.xlu0 %1032
        %vm1034 = vcmask 318464
        %v1035 = vsel %vm1034, %v1017, %v1019
        %v1036 = vsel %vm1034, %v1019, %v1021
        %v1037 = vsel %vm1034, %v1021, %v1023
        %v1038 = vsel %vm1034, %v1023, %v1025
        %v1039 = vsel %vm1034, %v1025, %v1027
        %v1040 = vsel %vm1034, %v1027, %v1029
        %v1041 = vsel %vm1034, %v1029, %v1031
        %v1042 = vsel %vm1034, %v1031, %v1033
        %1043 = vrot.lane.b32.xlu0 %v517, 38
        %v1044 = vpop.permute.xlu0 %1043
        %1045 = vrot.lane.b32.xlu0 %v518, 38
        %v1046 = vpop.permute.xlu0 %1045
        %1047 = vrot.lane.b32.xlu0 %v519, 38
        %v1048 = vpop.permute.xlu0 %1047
        %1049 = vrot.lane.b32.xlu0 %v520, 38
        %v1050 = vpop.permute.xlu0 %1049
        %1051 = vrot.lane.b32.xlu0 %v521, 38
        %v1052 = vpop.permute.xlu0 %1051
        %1053 = vrot.lane.b32.xlu0 %v522, 38
        %v1054 = vpop.permute.xlu0 %1053
        %1055 = vrot.lane.b32.xlu0 %v523, 38
        %v1056 = vpop.permute.xlu0 %1055
        %1057 = vrot.lane.b32.xlu0 %v524, 38
        %v1058 = vpop.permute.xlu0 %1057
        %1059 = vrot.lane.b32.xlu0 %v529, 38
        %v1060 = vpop.permute.xlu0 %1059
        %vm1061 = vcmask 310272
        %v1062 = vsel %vm1061, %v1044, %v1046
        %v1063 = vsel %vm1061, %v1046, %v1048
        %v1064 = vsel %vm1061, %v1048, %v1050
        %v1065 = vsel %vm1061, %v1050, %v1052
        %v1066 = vsel %vm1061, %v1052, %v1054
        %v1067 = vsel %vm1061, %v1054, %v1056
        %v1068 = vsel %vm1061, %v1056, %v1058
        %v1069 = vsel %vm1061, %v1058, %v1060
        %1070 = vrot.lane.b32.xlu0 %v517, 37
        %v1071 = vpop.permute.xlu0 %1070
        %1072 = vrot.lane.b32.xlu0 %v518, 37
        %v1073 = vpop.permute.xlu0 %1072
        %1074 = vrot.lane.b32.xlu0 %v519, 37
        %v1075 = vpop.permute.xlu0 %1074
        %1076 = vrot.lane.b32.xlu0 %v520, 37
        %v1077 = vpop.permute.xlu0 %1076
        %1078 = vrot.lane.b32.xlu0 %v521, 37
        %v1079 = vpop.permute.xlu0 %1078
        %1080 = vrot.lane.b32.xlu0 %v522, 37
        %v1081 = vpop.permute.xlu0 %1080
        %1082 = vrot.lane.b32.xlu0 %v523, 37
        %v1083 = vpop.permute.xlu0 %1082
        %1084 = vrot.lane.b32.xlu0 %v524, 37
        %v1085 = vpop.permute.xlu0 %1084
        %1086 = vrot.lane.b32.xlu0 %v529, 37
        %v1087 = vpop.permute.xlu0 %1086
        %vm1088 = vcmask 302080
        %v1089 = vsel %vm1088, %v1071, %v1073
        %v1090 = vsel %vm1088, %v1073, %v1075
        %v1091 = vsel %vm1088, %v1075, %v1077
        %v1092 = vsel %vm1088, %v1077, %v1079
        %v1093 = vsel %vm1088, %v1079, %v1081
        %v1094 = vsel %vm1088, %v1081, %v1083
        %v1095 = vsel %vm1088, %v1083, %v1085
        %v1096 = vsel %vm1088, %v1085, %v1087
        %1097 = vrot.lane.b32.xlu0 %v517, 29
        %v1098 = vpop.permute.xlu0 %1097
        %1099 = vrot.lane.b32.xlu0 %v518, 29
        %v1100 = vpop.permute.xlu0 %1099
        %1101 = vrot.lane.b32.xlu0 %v519, 29
        %v1102 = vpop.permute.xlu0 %1101
        %1103 = vrot.lane.b32.xlu0 %v520, 29
        %v1104 = vpop.permute.xlu0 %1103
        %1105 = vrot.lane.b32.xlu0 %v521, 29
        %v1106 = vpop.permute.xlu0 %1105
        %1107 = vrot.lane.b32.xlu0 %v522, 29
        %v1108 = vpop.permute.xlu0 %1107
        %1109 = vrot.lane.b32.xlu0 %v523, 29
        %v1110 = vpop.permute.xlu0 %1109
        %1111 = vrot.lane.b32.xlu0 %v524, 29
        %v1112 = vpop.permute.xlu0 %1111
        %1113 = vrot.lane.b32.xlu0 %v529, 29
        %v1114 = vpop.permute.xlu0 %1113
        %vm1115 = vcmask 236544
        %v1116 = vsel %vm1115, %v1098, %v1100
        %v1117 = vsel %vm1115, %v1100, %v1102
        %v1118 = vsel %vm1115, %v1102, %v1104
        %v1119 = vsel %vm1115, %v1104, %v1106
        %v1120 = vsel %vm1115, %v1106, %v1108
        %v1121 = vsel %vm1115, %v1108, %v1110
        %v1122 = vsel %vm1115, %v1110, %v1112
        %v1123 = vsel %vm1115, %v1112, %v1114
        %1124 = vrot.lane.b32.xlu0 %v529, 28
        %v1125 = vpop.permute.xlu0 %1124
        %v1126 = vsel %vm764, %v763, %v1125
        %1127 = vrot.lane.b32.xlu0 %v529, 27
        %v1128 = vpop.permute.xlu0 %1127
        %v1129 = vsel %vm791, %v790, %v1128
        %1130 = vrot.lane.b32.xlu0 %v517, 7
        %v1131 = vpop.permute.xlu0 %1130
        %1132 = vrot.lane.b32.xlu0 %v518, 7
        %v1133 = vpop.permute.xlu0 %1132
        %1134 = vrot.lane.b32.xlu0 %v519, 7
        %v1135 = vpop.permute.xlu0 %1134
        %1136 = vrot.lane.b32.xlu0 %v520, 7
        %v1137 = vpop.permute.xlu0 %1136
        %1138 = vrot.lane.b32.xlu0 %v521, 7
        %v1139 = vpop.permute.xlu0 %1138
        %1140 = vrot.lane.b32.xlu0 %v522, 7
        %v1141 = vpop.permute.xlu0 %1140
        %1142 = vrot.lane.b32.xlu0 %v523, 7
        %v1143 = vpop.permute.xlu0 %1142
        %1144 = vrot.lane.b32.xlu0 %v524, 7
        %v1145 = vpop.permute.xlu0 %1144
        %1146 = vrot.lane.b32.xlu0 %v529, 7
        %v1147 = vpop.permute.xlu0 %1146
        %1148 = vrot.lane.b32.xlu0 %v550, 7
        %v1149 = vpop.permute.xlu0 %1148
        %1150 = vrot.lane.b32.xlu0 %v551, 7
        %v1151 = vpop.permute.xlu0 %1150
        %1152 = vrot.lane.b32.xlu0 %v552, 7
        %v1153 = vpop.permute.xlu0 %1152
        %1154 = vrot.lane.b32.xlu0 %v553, 7
        %v1155 = vpop.permute.xlu0 %1154
        %1156 = vrot.lane.b32.xlu0 %v554, 7
        %v1157 = vpop.permute.xlu0 %1156
        %1158 = vrot.lane.b32.xlu0 %v555, 7
        %v1159 = vpop.permute.xlu0 %1158
        %1160 = vrot.lane.b32.xlu0 %v556, 7
        %v1161 = vpop.permute.xlu0 %1160
        %1162 = vrot.lane.b32.xlu0 %v934, 7
        %v1163 = vpop.permute.xlu0 %1162
        %1164 = vrot.lane.b32.xlu0 %v933, 7
        %v1165 = vpop.permute.xlu0 %1164
        %1166 = vrot.lane.b32.xlu0 %v954, 7
        %v1167 = vpop.permute.xlu0 %1166
        %1168 = vrot.lane.b32.xlu0 %v955, 7
        %v1169 = vpop.permute.xlu0 %1168
        %1170 = vrot.lane.b32.xlu0 %v956, 7
        %v1171 = vpop.permute.xlu0 %1170
        %1172 = vrot.lane.b32.xlu0 %v957, 7
        %v1173 = vpop.permute.xlu0 %1172
        %1174 = vrot.lane.b32.xlu0 %v958, 7
        %v1175 = vpop.permute.xlu0 %1174
        %1176 = vrot.lane.b32.xlu0 %v959, 7
        %v1177 = vpop.permute.xlu0 %1176
        %1178 = vrot.lane.b32.xlu0 %v960, 7
        %v1179 = vpop.permute.xlu0 %1178
        %1180 = vrot.lane.b32.xlu0 %v961, 7
        %v1181 = vpop.permute.xlu0 %1180
        %1182 = vrot.lane.b32.xlu0 %v952, 7
        %v1183 = vpop.permute.xlu0 %1182
        %1184 = vrot.lane.b32.xlu0 %v981, 7
        %v1185 = vpop.permute.xlu0 %1184
        %1186 = vrot.lane.b32.xlu0 %v982, 7
        %v1187 = vpop.permute.xlu0 %1186
        %1188 = vrot.lane.b32.xlu0 %v983, 7
        %v1189 = vpop.permute.xlu0 %1188
        %1190 = vrot.lane.b32.xlu0 %v984, 7
        %v1191 = vpop.permute.xlu0 %1190
        %1192 = vrot.lane.b32.xlu0 %v985, 7
        %v1193 = vpop.permute.xlu0 %1192
        %1194 = vrot.lane.b32.xlu0 %v986, 7
        %v1195 = vpop.permute.xlu0 %1194
        %1196 = vrot.lane.b32.xlu0 %v987, 7
        %v1197 = vpop.permute.xlu0 %1196
        %1198 = vrot.lane.b32.xlu0 %v988, 7
        %v1199 = vpop.permute.xlu0 %1198
        %1200 = vrot.lane.b32.xlu0 %v979, 7
        %v1201 = vpop.permute.xlu0 %1200
        %1202 = vrot.lane.b32.xlu0 %v1008, 7
        %v1203 = vpop.permute.xlu0 %1202
        %1204 = vrot.lane.b32.xlu0 %v1009, 7
        %v1205 = vpop.permute.xlu0 %1204
        %1206 = vrot.lane.b32.xlu0 %v1010, 7
        %v1207 = vpop.permute.xlu0 %1206
        %1208 = vrot.lane.b32.xlu0 %v1011, 7
        %v1209 = vpop.permute.xlu0 %1208
        %1210 = vrot.lane.b32.xlu0 %v1012, 7
        %v1211 = vpop.permute.xlu0 %1210
        %1212 = vrot.lane.b32.xlu0 %v1013, 7
        %v1213 = vpop.permute.xlu0 %1212
        %1214 = vrot.lane.b32.xlu0 %v1014, 7
        %v1215 = vpop.permute.xlu0 %1214
        %1216 = vrot.lane.b32.xlu0 %v1015, 7
        %v1217 = vpop.permute.xlu0 %1216
        %1218 = vrot.lane.b32.xlu0 %v1006, 7
        %v1219 = vpop.permute.xlu0 %1218
        %1220 = vrot.lane.b32.xlu0 %v1035, 7
        %v1221 = vpop.permute.xlu0 %1220
        %1222 = vrot.lane.b32.xlu0 %v1036, 7
        %v1223 = vpop.permute.xlu0 %1222
        %1224 = vrot.lane.b32.xlu0 %v1037, 7
        %v1225 = vpop.permute.xlu0 %1224
        %1226 = vrot.lane.b32.xlu0 %v1038, 7
        %v1227 = vpop.permute.xlu0 %1226
        %1228 = vrot.lane.b32.xlu0 %v1039, 7
        %v1229 = vpop.permute.xlu0 %1228
        %1230 = vrot.lane.b32.xlu0 %v1040, 7
        %v1231 = vpop.permute.xlu0 %1230
        %1232 = vrot.lane.b32.xlu0 %v1041, 7
        %v1233 = vpop.permute.xlu0 %1232
        %1234 = vrot.lane.b32.xlu0 %v1042, 7
        %v1235 = vpop.permute.xlu0 %1234
        %1236 = vrot.lane.b32.xlu0 %v1033, 7
        %v1237 = vpop.permute.xlu0 %1236
        %1238 = vrot.lane.b32.xlu0 %v1062, 7
        %v1239 = vpop.permute.xlu0 %1238
        %1240 = vrot.lane.b32.xlu0 %v1063, 7
        %v1241 = vpop.permute.xlu0 %1240
        %1242 = vrot.lane.b32.xlu0 %v1064, 7
        %v1243 = vpop.permute.xlu0 %1242
        %1244 = vrot.lane.b32.xlu0 %v1065, 7
        %v1245 = vpop.permute.xlu0 %1244
        %1246 = vrot.lane.b32.xlu0 %v1066, 7
        %v1247 = vpop.permute.xlu0 %1246
        %1248 = vrot.lane.b32.xlu0 %v1067, 7
        %v1249 = vpop.permute.xlu0 %1248
        %1250 = vrot.lane.b32.xlu0 %v1068, 7
        %v1251 = vpop.permute.xlu0 %1250
        %1252 = vrot.lane.b32.xlu0 %v1069, 7
        %v1253 = vpop.permute.xlu0 %1252
        %1254 = vrot.lane.b32.xlu0 %v1060, 7
        %v1255 = vpop.permute.xlu0 %1254
        %1256 = vrot.lane.b32.xlu0 %v1089, 7
        %v1257 = vpop.permute.xlu0 %1256
        %1258 = vrot.lane.b32.xlu0 %v1090, 7
        %v1259 = vpop.permute.xlu0 %1258
        %1260 = vrot.lane.b32.xlu0 %v1091, 7
        %v1261 = vpop.permute.xlu0 %1260
        %1262 = vrot.lane.b32.xlu0 %v1092, 7
        %v1263 = vpop.permute.xlu0 %1262
        %1264 = vrot.lane.b32.xlu0 %v1093, 7
        %v1265 = vpop.permute.xlu0 %1264
        %1266 = vrot.lane.b32.xlu0 %v1094, 7
        %v1267 = vpop.permute.xlu0 %1266
        %1268 = vrot.lane.b32.xlu0 %v1095, 7
        %v1269 = vpop.permute.xlu0 %1268
        %1270 = vrot.lane.b32.xlu0 %v1096, 7
        %v1271 = vpop.permute.xlu0 %1270
        %1272 = vrot.lane.b32.xlu0 %v1087, 7
        %v1273 = vpop.permute.xlu0 %1272
        %1274 = vrot.lane.b32.xlu0 %v1116, 7
        %v1275 = vpop.permute.xlu0 %1274
        %1276 = vrot.lane.b32.xlu0 %v1117, 7
        %v1277 = vpop.permute.xlu0 %1276
        %1278 = vrot.lane.b32.xlu0 %v1118, 7
        %v1279 = vpop.permute.xlu0 %1278
        %1280 = vrot.lane.b32.xlu0 %v1119, 7
        %v1281 = vpop.permute.xlu0 %1280
        %1282 = vrot.lane.b32.xlu0 %v1120, 7
        %v1283 = vpop.permute.xlu0 %1282
        %1284 = vrot.lane.b32.xlu0 %v1121, 7
        %v1285 = vpop.permute.xlu0 %1284
        %1286 = vrot.lane.b32.xlu0 %v1122, 7
        %v1287 = vpop.permute.xlu0 %1286
        %1288 = vrot.lane.b32.xlu0 %v1123, 7
        %v1289 = vpop.permute.xlu0 %1288
        %1290 = vrot.lane.b32.xlu0 %v1114, 7
        %v1291 = vpop.permute.xlu0 %1290
        %1292 = vrot.lane.b32.xlu0 %v766, 7
        %v1293 = vpop.permute.xlu0 %1292
        %1294 = vrot.lane.b32.xlu0 %v767, 7
        %v1295 = vpop.permute.xlu0 %1294
        %1296 = vrot.lane.b32.xlu0 %v768, 7
        %v1297 = vpop.permute.xlu0 %1296
        %1298 = vrot.lane.b32.xlu0 %v769, 7
        %v1299 = vpop.permute.xlu0 %1298
        %1300 = vrot.lane.b32.xlu0 %v770, 7
        %v1301 = vpop.permute.xlu0 %1300
        %1302 = vrot.lane.b32.xlu0 %v771, 7
        %v1303 = vpop.permute.xlu0 %1302
        %1304 = vrot.lane.b32.xlu0 %v772, 7
        %v1305 = vpop.permute.xlu0 %1304
        %1306 = vrot.lane.b32.xlu0 %v1126, 7
        %v1307 = vpop.permute.xlu0 %1306
        %1308 = vrot.lane.b32.xlu0 %v1125, 7
        %v1309 = vpop.permute.xlu0 %1308
        %1310 = vrot.lane.b32.xlu0 %v793, 7
        %v1311 = vpop.permute.xlu0 %1310
        %1312 = vrot.lane.b32.xlu0 %v794, 7
        %v1313 = vpop.permute.xlu0 %1312
        %1314 = vrot.lane.b32.xlu0 %v795, 7
        %v1315 = vpop.permute.xlu0 %1314
        %1316 = vrot.lane.b32.xlu0 %v796, 7
        %v1317 = vpop.permute.xlu0 %1316
        %1318 = vrot.lane.b32.xlu0 %v797, 7
        %v1319 = vpop.permute.xlu0 %1318
        %1320 = vrot.lane.b32.xlu0 %v798, 7
        %v1321 = vpop.permute.xlu0 %1320
        %1322 = vrot.lane.b32.xlu0 %v799, 7
        %v1323 = vpop.permute.xlu0 %1322
        %1324 = vrot.lane.b32.xlu0 %v1129, 7
        %v1325 = vpop.permute.xlu0 %1324
        %1326 = vrot.lane.b32.xlu0 %v1128, 7
        %v1327 = vpop.permute.xlu0 %1326
        %vm1328 = vcmask 56320
        %v1329 = vsel %vm1328, %v1131, %v1133
        %v1330 = vsel %vm1328, %v1133, %v1135
        %v1331 = vsel %vm1328, %v1135, %v1137
        %v1332 = vsel %vm1328, %v1137, %v1139
        %v1333 = vsel %vm1328, %v1139, %v1141
        %v1334 = vsel %vm1328, %v1141, %v1143
        %v1335 = vsel %vm1328, %v1143, %v1145
        %v1336 = vsel %vm1328, %v1145, %v1147
        %v1337 = vsel %vm1328, %v1149, %v1151
        %v1338 = vsel %vm1328, %v1151, %v1153
        %v1339 = vsel %vm1328, %v1153, %v1155
        %v1340 = vsel %vm1328, %v1155, %v1157
        %v1341 = vsel %vm1328, %v1157, %v1159
        %v1342 = vsel %vm1328, %v1159, %v1161
        %v1343 = vsel %vm1328, %v1161, %v1163
        %v1344 = vsel %vm1328, %v1163, %v1165
        %v1345 = vsel %vm1328, %v1167, %v1169
        %v1346 = vsel %vm1328, %v1169, %v1171
        %v1347 = vsel %vm1328, %v1171, %v1173
        %v1348 = vsel %vm1328, %v1173, %v1175
        %v1349 = vsel %vm1328, %v1175, %v1177
        %v1350 = vsel %vm1328, %v1177, %v1179
        %v1351 = vsel %vm1328, %v1179, %v1181
        %v1352 = vsel %vm1328, %v1181, %v1183
        %v1353 = vsel %vm1328, %v1185, %v1187
        %v1354 = vsel %vm1328, %v1187, %v1189
        %v1355 = vsel %vm1328, %v1189, %v1191
        %v1356 = vsel %vm1328, %v1191, %v1193
        %v1357 = vsel %vm1328, %v1193, %v1195
        %v1358 = vsel %vm1328, %v1195, %v1197
        %v1359 = vsel %vm1328, %v1197, %v1199
        %v1360 = vsel %vm1328, %v1199, %v1201
        %v1361 = vsel %vm1328, %v1203, %v1205
        %v1362 = vsel %vm1328, %v1205, %v1207
        %v1363 = vsel %vm1328, %v1207, %v1209
        %v1364 = vsel %vm1328, %v1209, %v1211
        %v1365 = vsel %vm1328, %v1211, %v1213
        %v1366 = vsel %vm1328, %v1213, %v1215
        %v1367 = vsel %vm1328, %v1215, %v1217
        %v1368 = vsel %vm1328, %v1217, %v1219
        %v1369 = vsel %vm1328, %v1221, %v1223
        %v1370 = vsel %vm1328, %v1223, %v1225
        %v1371 = vsel %vm1328, %v1225, %v1227
        %v1372 = vsel %vm1328, %v1227, %v1229
        %v1373 = vsel %vm1328, %v1229, %v1231
        %v1374 = vsel %vm1328, %v1231, %v1233
        %v1375 = vsel %vm1328, %v1233, %v1235
        %v1376 = vsel %vm1328, %v1235, %v1237
        %v1377 = vsel %vm1328, %v1239, %v1241
        %v1378 = vsel %vm1328, %v1241, %v1243
        %v1379 = vsel %vm1328, %v1243, %v1245
        %v1380 = vsel %vm1328, %v1245, %v1247
        %v1381 = vsel %vm1328, %v1247, %v1249
        %v1382 = vsel %vm1328, %v1249, %v1251
        %v1383 = vsel %vm1328, %v1251, %v1253
        %v1384 = vsel %vm1328, %v1253, %v1255
        %v1385 = vsel %vm1328, %v1257, %v1259
        %v1386 = vsel %vm1328, %v1259, %v1261
        %v1387 = vsel %vm1328, %v1261, %v1263
        %v1388 = vsel %vm1328, %v1263, %v1265
        %v1389 = vsel %vm1328, %v1265, %v1267
        %v1390 = vsel %vm1328, %v1267, %v1269
        %v1391 = vsel %vm1328, %v1269, %v1271
        %v1392 = vsel %vm1328, %v1271, %v1273
        %v1393 = vsel %vm1328, %v1275, %v1277
        %v1394 = vsel %vm1328, %v1277, %v1279
        %v1395 = vsel %vm1328, %v1279, %v1281
        %v1396 = vsel %vm1328, %v1281, %v1283
        %v1397 = vsel %vm1328, %v1283, %v1285
        %v1398 = vsel %vm1328, %v1285, %v1287
        %v1399 = vsel %vm1328, %v1287, %v1289
        %v1400 = vsel %vm1328, %v1289, %v1291
        %v1401 = vsel %vm1328, %v1293, %v1295
        %v1402 = vsel %vm1328, %v1295, %v1297
        %v1403 = vsel %vm1328, %v1297, %v1299
        %v1404 = vsel %vm1328, %v1299, %v1301
        %v1405 = vsel %vm1328, %v1301, %v1303
        %v1406 = vsel %vm1328, %v1303, %v1305
        %v1407 = vsel %vm1328, %v1305, %v1307
        %v1408 = vsel %vm1328, %v1307, %v1309
        %v1409 = vsel %vm1328, %v1311, %v1313
        %v1410 = vsel %vm1328, %v1313, %v1315
        %v1411 = vsel %vm1328, %v1315, %v1317
        %v1412 = vsel %vm1328, %v1317, %v1319
        %v1413 = vsel %vm1328, %v1319, %v1321
        %v1414 = vsel %vm1328, %v1321, %v1323
        %v1415 = vsel %vm1328, %v1323, %v1325
        %v1416 = vsel %vm1328, %v1325, %v1327
        %v1417 = vld [vmem:[%s3] sm:$0xff]
        %v1418 = vld [vmem:[%s3 + $0x8] sm:$0xff]
        %v1419 = vld [vmem:[%s3 + $0x10] sm:$0xff]
        %v1420 = vld [vmem:[%s3 + $0x18] sm:$0xff]
        %v1425 = vunpack.c.l.b16 %v1417
        %v1426 = vunpack.c.h.b16 %v1417
        %v1427 = vunpack.c.l.b16 %v1418
        %v1428 = vunpack.c.h.b16 %v1418
        %v1429 = vunpack.c.l.b16 %v1419
        %v1430 = vunpack.c.h.b16 %v1419
        %v1431 = vunpack.c.l.b16 %v1420
        %v1432 = vunpack.c.h.b16 %v1420
        %v1433 = vpack.c.b16 %v1429, %v1425
        %v1434 = vpack.c.b16 %v1430, %v1426
        %v1435 = vpack.c.b16 %v1431, %v1427
        %v1436 = vpack.c.b16 %v1432, %v1428
        %1440 = vrot.lane.b32.xlu0 %v492, 111
        %v1441 = vpop.permute.xlu0 %1440
        %1442 = vrot.lane.b32.xlu0 %v517, 111
        %v1443 = vpop.permute.xlu0 %1442
        %1444 = vrot.lane.b32.xlu0 %v518, 111
        %v1445 = vpop.permute.xlu0 %1444
        %1446 = vrot.lane.b32.xlu0 %v519, 111
        %v1447 = vpop.permute.xlu0 %1446
        %1448 = vrot.lane.b32.xlu0 %v520, 111
        %v1449 = vpop.permute.xlu0 %1448
        %1450 = vrot.lane.b32.xlu0 %v521, 111
        %v1451 = vpop.permute.xlu0 %1450
        %1452 = vrot.lane.b32.xlu0 %v522, 111
        %v1453 = vpop.permute.xlu0 %1452
        %1454 = vrot.lane.b32.xlu0 %v523, 111
        %v1455 = vpop.permute.xlu0 %1454
        %1456 = vrot.lane.b32.xlu0 %v524, 111
        %v1457 = vpop.permute.xlu0 %1456
        %1458 = vrot.lane.b32.xlu0 %v549, 111
        %v1459 = vpop.permute.xlu0 %1458
        %1460 = vrot.lane.b32.xlu0 %v550, 111
        %v1461 = vpop.permute.xlu0 %1460
        %1462 = vrot.lane.b32.xlu0 %v551, 111
        %v1463 = vpop.permute.xlu0 %1462
        %1464 = vrot.lane.b32.xlu0 %v552, 111
        %v1465 = vpop.permute.xlu0 %1464
        %1466 = vrot.lane.b32.xlu0 %v553, 111
        %v1467 = vpop.permute.xlu0 %1466
        %1468 = vrot.lane.b32.xlu0 %v554, 111
        %v1469 = vpop.permute.xlu0 %1468
        %1470 = vrot.lane.b32.xlu0 %v555, 111
        %v1471 = vpop.permute.xlu0 %1470
        %1472 = vrot.lane.b32.xlu0 %v556, 111
        %v1473 = vpop.permute.xlu0 %1472
        %1474 = vrot.lane.b32.xlu0 %v547, 111
        %v1475 = vpop.permute.xlu0 %1474
        %1476 = vrot.lane.b32.xlu0 %v576, 111
        %v1477 = vpop.permute.xlu0 %1476
        %1478 = vrot.lane.b32.xlu0 %v577, 111
        %v1479 = vpop.permute.xlu0 %1478
        %1480 = vrot.lane.b32.xlu0 %v578, 111
        %v1481 = vpop.permute.xlu0 %1480
        %1482 = vrot.lane.b32.xlu0 %v579, 111
        %v1483 = vpop.permute.xlu0 %1482
        %1484 = vrot.lane.b32.xlu0 %v580, 111
        %v1485 = vpop.permute.xlu0 %1484
        %1486 = vrot.lane.b32.xlu0 %v581, 111
        %v1487 = vpop.permute.xlu0 %1486
        %1488 = vrot.lane.b32.xlu0 %v582, 111
        %v1489 = vpop.permute.xlu0 %1488
        %1490 = vrot.lane.b32.xlu0 %v583, 111
        %v1491 = vpop.permute.xlu0 %1490
        %1492 = vrot.lane.b32.xlu0 %v574, 111
        %v1493 = vpop.permute.xlu0 %1492
        %1494 = vrot.lane.b32.xlu0 %v603, 111
        %v1495 = vpop.permute.xlu0 %1494
        %1496 = vrot.lane.b32.xlu0 %v604, 111
        %v1497 = vpop.permute.xlu0 %1496
        %1498 = vrot.lane.b32.xlu0 %v605, 111
        %v1499 = vpop.permute.xlu0 %1498
        %1500 = vrot.lane.b32.xlu0 %v606, 111
        %v1501 = vpop.permute.xlu0 %1500
        %1502 = vrot.lane.b32.xlu0 %v607, 111
        %v1503 = vpop.permute.xlu0 %1502
        %1504 = vrot.lane.b32.xlu0 %v608, 111
        %v1505 = vpop.permute.xlu0 %1504
        %1506 = vrot.lane.b32.xlu0 %v609, 111
        %v1507 = vpop.permute.xlu0 %1506
        %1508 = vrot.lane.b32.xlu0 %v610, 111
        %v1509 = vpop.permute.xlu0 %1508
        %1510 = vrot.lane.b32.xlu0 %v601, 111
        %v1511 = vpop.permute.xlu0 %1510
        %1512 = vrot.lane.b32.xlu0 %v630, 111
        %v1513 = vpop.permute.xlu0 %1512
        %1514 = vrot.lane.b32.xlu0 %v631, 111
        %v1515 = vpop.permute.xlu0 %1514
        %1516 = vrot.lane.b32.xlu0 %v632, 111
        %v1517 = vpop.permute.xlu0 %1516
        %1518 = vrot.lane.b32.xlu0 %v633, 111
        %v1519 = vpop.permute.xlu0 %1518
        %1520 = vrot.lane.b32.xlu0 %v634, 111
        %v1521 = vpop.permute.xlu0 %1520
        %1522 = vrot.lane.b32.xlu0 %v635, 111
        %v1523 = vpop.permute.xlu0 %1522
        %1524 = vrot.lane.b32.xlu0 %v636, 111
        %v1525 = vpop.permute.xlu0 %1524
        %1526 = vrot.lane.b32.xlu0 %v637, 111
        %v1527 = vpop.permute.xlu0 %1526
        %1528 = vrot.lane.b32.xlu0 %v628, 111
        %v1529 = vpop.permute.xlu0 %1528
        %1530 = vrot.lane.b32.xlu0 %v657, 111
        %v1531 = vpop.permute.xlu0 %1530
        %1532 = vrot.lane.b32.xlu0 %v658, 111
        %v1533 = vpop.permute.xlu0 %1532
        %1534 = vrot.lane.b32.xlu0 %v659, 111
        %v1535 = vpop.permute.xlu0 %1534
        %1536 = vrot.lane.b32.xlu0 %v660, 111
        %v1537 = vpop.permute.xlu0 %1536
        %1538 = vrot.lane.b32.xlu0 %v661, 111
        %v1539 = vpop.permute.xlu0 %1538
        %1540 = vrot.lane.b32.xlu0 %v662, 111
        %v1541 = vpop.permute.xlu0 %1540
        %1542 = vrot.lane.b32.xlu0 %v663, 111
        %v1543 = vpop.permute.xlu0 %1542
        %1544 = vrot.lane.b32.xlu0 %v664, 111
        %v1545 = vpop.permute.xlu0 %1544
        %1546 = vrot.lane.b32.xlu0 %v655, 111
        %v1547 = vpop.permute.xlu0 %1546
        %1548 = vrot.lane.b32.xlu0 %v684, 111
        %v1549 = vpop.permute.xlu0 %1548
        %1550 = vrot.lane.b32.xlu0 %v685, 111
        %v1551 = vpop.permute.xlu0 %1550
        %1552 = vrot.lane.b32.xlu0 %v686, 111
        %v1553 = vpop.permute.xlu0 %1552
        %1554 = vrot.lane.b32.xlu0 %v687, 111
        %v1555 = vpop.permute.xlu0 %1554
        %1556 = vrot.lane.b32.xlu0 %v688, 111
        %v1557 = vpop.permute.xlu0 %1556
        %1558 = vrot.lane.b32.xlu0 %v689, 111
        %v1559 = vpop.permute.xlu0 %1558
        %1560 = vrot.lane.b32.xlu0 %v690, 111
        %v1561 = vpop.permute.xlu0 %1560
        %1562 = vrot.lane.b32.xlu0 %v691, 111
        %v1563 = vpop.permute.xlu0 %1562
        %1564 = vrot.lane.b32.xlu0 %v682, 111
        %v1565 = vpop.permute.xlu0 %1564
        %1566 = vrot.lane.b32.xlu0 %v711, 111
        %v1567 = vpop.permute.xlu0 %1566
        %1568 = vrot.lane.b32.xlu0 %v712, 111
        %v1569 = vpop.permute.xlu0 %1568
        %1570 = vrot.lane.b32.xlu0 %v713, 111
        %v1571 = vpop.permute.xlu0 %1570
        %1572 = vrot.lane.b32.xlu0 %v714, 111
        %v1573 = vpop.permute.xlu0 %1572
        %1574 = vrot.lane.b32.xlu0 %v715, 111
        %v1575 = vpop.permute.xlu0 %1574
        %1576 = vrot.lane.b32.xlu0 %v716, 111
        %v1577 = vpop.permute.xlu0 %1576
        %1578 = vrot.lane.b32.xlu0 %v717, 111
        %v1579 = vpop.permute.xlu0 %1578
        %1580 = vrot.lane.b32.xlu0 %v718, 111
        %v1581 = vpop.permute.xlu0 %1580
        %1582 = vrot.lane.b32.xlu0 %v709, 111
        %v1583 = vpop.permute.xlu0 %1582
        %1584 = vrot.lane.b32.xlu0 %v738, 111
        %v1585 = vpop.permute.xlu0 %1584
        %1586 = vrot.lane.b32.xlu0 %v739, 111
        %v1587 = vpop.permute.xlu0 %1586
        %1588 = vrot.lane.b32.xlu0 %v740, 111
        %v1589 = vpop.permute.xlu0 %1588
        %1590 = vrot.lane.b32.xlu0 %v741, 111
        %v1591 = vpop.permute.xlu0 %1590
        %1592 = vrot.lane.b32.xlu0 %v742, 111
        %v1593 = vpop.permute.xlu0 %1592
        %1594 = vrot.lane.b32.xlu0 %v743, 111
        %v1595 = vpop.permute.xlu0 %1594
        %1596 = vrot.lane.b32.xlu0 %v744, 111
        %v1597 = vpop.permute.xlu0 %1596
        %1598 = vrot.lane.b32.xlu0 %v745, 111
        %v1599 = vpop.permute.xlu0 %1598
        %1600 = vrot.lane.b32.xlu0 %v736, 111
        %v1601 = vpop.permute.xlu0 %1600
        %1602 = vrot.lane.b32.xlu0 %v765, 111
        %v1603 = vpop.permute.xlu0 %1602
        %1604 = vrot.lane.b32.xlu0 %v766, 111
        %v1605 = vpop.permute.xlu0 %1604
        %1606 = vrot.lane.b32.xlu0 %v767, 111
        %v1607 = vpop.permute.xlu0 %1606
        %1608 = vrot.lane.b32.xlu0 %v768, 111
        %v1609 = vpop.permute.xlu0 %1608
        %1610 = vrot.lane.b32.xlu0 %v769, 111
        %v1611 = vpop.permute.xlu0 %1610
        %1612 = vrot.lane.b32.xlu0 %v770, 111
        %v1613 = vpop.permute.xlu0 %1612
        %1614 = vrot.lane.b32.xlu0 %v771, 111
        %v1615 = vpop.permute.xlu0 %1614
        %1616 = vrot.lane.b32.xlu0 %v772, 111
        %v1617 = vpop.permute.xlu0 %1616
        %1618 = vrot.lane.b32.xlu0 %v763, 111
        %v1619 = vpop.permute.xlu0 %1618
        %1620 = vrot.lane.b32.xlu0 %v792, 111
        %v1621 = vpop.permute.xlu0 %1620
        %1622 = vrot.lane.b32.xlu0 %v793, 111
        %v1623 = vpop.permute.xlu0 %1622
        %1624 = vrot.lane.b32.xlu0 %v794, 111
        %v1625 = vpop.permute.xlu0 %1624
        %1626 = vrot.lane.b32.xlu0 %v795, 111
        %v1627 = vpop.permute.xlu0 %1626
        %1628 = vrot.lane.b32.xlu0 %v796, 111
        %v1629 = vpop.permute.xlu0 %1628
        %1630 = vrot.lane.b32.xlu0 %v797, 111
        %v1631 = vpop.permute.xlu0 %1630
        %1632 = vrot.lane.b32.xlu0 %v798, 111
        %v1633 = vpop.permute.xlu0 %1632
        %1634 = vrot.lane.b32.xlu0 %v799, 111
        %v1635 = vpop.permute.xlu0 %1634
        %1636 = vrot.lane.b32.xlu0 %v790, 111
        %v1637 = vpop.permute.xlu0 %1636
        %1638 = vrot.lane.b32.xlu0 %v819, 111
        %v1639 = vpop.permute.xlu0 %1638
        %1640 = vrot.lane.b32.xlu0 %v820, 111
        %v1641 = vpop.permute.xlu0 %1640
        %1642 = vrot.lane.b32.xlu0 %v821, 111
        %v1643 = vpop.permute.xlu0 %1642
        %1644 = vrot.lane.b32.xlu0 %v822, 111
        %v1645 = vpop.permute.xlu0 %1644
        %1646 = vrot.lane.b32.xlu0 %v823, 111
        %v1647 = vpop.permute.xlu0 %1646
        %1648 = vrot.lane.b32.xlu0 %v824, 111
        %v1649 = vpop.permute.xlu0 %1648
        %1650 = vrot.lane.b32.xlu0 %v825, 111
        %v1651 = vpop.permute.xlu0 %1650
        %1652 = vrot.lane.b32.xlu0 %v826, 111
        %v1653 = vpop.permute.xlu0 %1652
        %1654 = vrot.lane.b32.xlu0 %v817, 111
        %v1655 = vpop.permute.xlu0 %1654
        %1656 = vrot.lane.b32.xlu0 %v846, 111
        %v1657 = vpop.permute.xlu0 %1656
        %1658 = vrot.lane.b32.xlu0 %v847, 111
        %v1659 = vpop.permute.xlu0 %1658
        %1660 = vrot.lane.b32.xlu0 %v848, 111
        %v1661 = vpop.permute.xlu0 %1660
        %1662 = vrot.lane.b32.xlu0 %v849, 111
        %v1663 = vpop.permute.xlu0 %1662
        %1664 = vrot.lane.b32.xlu0 %v850, 111
        %v1665 = vpop.permute.xlu0 %1664
        %1666 = vrot.lane.b32.xlu0 %v851, 111
        %v1667 = vpop.permute.xlu0 %1666
        %1668 = vrot.lane.b32.xlu0 %v852, 111
        %v1669 = vpop.permute.xlu0 %1668
        %1670 = vrot.lane.b32.xlu0 %v853, 111
        %v1671 = vpop.permute.xlu0 %1670
        %1672 = vrot.lane.b32.xlu0 %v844, 111
        %v1673 = vpop.permute.xlu0 %1672
        %1674 = vrot.lane.b32.xlu0 %v855, 111
        %v1675 = vpop.permute.xlu0 %1674
        %1676 = vrot.lane.b32.xlu0 %v871, 111
        %v1677 = vpop.permute.xlu0 %1676
        %1678 = vrot.lane.b32.xlu0 %v872, 111
        %v1679 = vpop.permute.xlu0 %1678
        %1680 = vrot.lane.b32.xlu0 %v873, 111
        %v1681 = vpop.permute.xlu0 %1680
        %1682 = vrot.lane.b32.xlu0 %v874, 111
        %v1683 = vpop.permute.xlu0 %1682
        %1684 = vrot.lane.b32.xlu0 %v875, 111
        %v1685 = vpop.permute.xlu0 %1684
        %1686 = vrot.lane.b32.xlu0 %v876, 111
        %v1687 = vpop.permute.xlu0 %1686
        %1688 = vrot.lane.b32.xlu0 %v877, 111
        %v1689 = vpop.permute.xlu0 %1688
        %1690 = vrot.lane.b32.xlu0 %v869, 111
        %v1691 = vpop.permute.xlu0 %1690
        %1692 = vrot.lane.b32.xlu0 %v879, 111
        %v1693 = vpop.permute.xlu0 %1692
        %1694 = vrot.lane.b32.xlu0 %v897, 111
        %v1695 = vpop.permute.xlu0 %1694
        %1696 = vrot.lane.b32.xlu0 %v898, 111
        %v1697 = vpop.permute.xlu0 %1696
        %1698 = vrot.lane.b32.xlu0 %v899, 111
        %v1699 = vpop.permute.xlu0 %1698
        %1700 = vrot.lane.b32.xlu0 %v900, 111
        %v1701 = vpop.permute.xlu0 %1700
        %1702 = vrot.lane.b32.xlu0 %v901, 111
        %v1703 = vpop.permute.xlu0 %1702
        %1704 = vrot.lane.b32.xlu0 %v902, 111
        %v1705 = vpop.permute.xlu0 %1704
        %1706 = vrot.lane.b32.xlu0 %v903, 111
        %v1707 = vpop.permute.xlu0 %1706
        %1708 = vrot.lane.b32.xlu0 %v904, 111
        %v1709 = vpop.permute.xlu0 %1708
        %1710 = vrot.lane.b32.xlu0 %v906, 111
        %v1711 = vpop.permute.xlu0 %1710
        %1712 = vrot.lane.b32.xlu0 %v924, 111
        %v1713 = vpop.permute.xlu0 %1712
        %1714 = vrot.lane.b32.xlu0 %v925, 111
        %v1715 = vpop.permute.xlu0 %1714
        %1716 = vrot.lane.b32.xlu0 %v926, 111
        %v1717 = vpop.permute.xlu0 %1716
        %1718 = vrot.lane.b32.xlu0 %v927, 111
        %v1719 = vpop.permute.xlu0 %1718
        %1720 = vrot.lane.b32.xlu0 %v928, 111
        %v1721 = vpop.permute.xlu0 %1720
        %1722 = vrot.lane.b32.xlu0 %v929, 111
        %v1723 = vpop.permute.xlu0 %1722
        %1724 = vrot.lane.b32.xlu0 %v930, 111
        %v1725 = vpop.permute.xlu0 %1724
        %1726 = vrot.lane.b32.xlu0 %v931, 111
        %v1727 = vpop.permute.xlu0 %1726
        %1728 = vrot.lane.b32.xlu0 %v1131, 111
        %v1729 = vpop.permute.xlu0 %1728
        %1730 = vrot.lane.b32.xlu0 %v1329, 111
        %v1731 = vpop.permute.xlu0 %1730
        %1732 = vrot.lane.b32.xlu0 %v1330, 111
        %v1733 = vpop.permute.xlu0 %1732
        %1734 = vrot.lane.b32.xlu0 %v1331, 111
        %v1735 = vpop.permute.xlu0 %1734
        %1736 = vrot.lane.b32.xlu0 %v1332, 111
        %v1737 = vpop.permute.xlu0 %1736
        %1738 = vrot.lane.b32.xlu0 %v1333, 111
        %v1739 = vpop.permute.xlu0 %1738
        %1740 = vrot.lane.b32.xlu0 %v1334, 111
        %v1741 = vpop.permute.xlu0 %1740
        %1742 = vrot.lane.b32.xlu0 %v1335, 111
        %v1743 = vpop.permute.xlu0 %1742
        %1744 = vrot.lane.b32.xlu0 %v1336, 111
        %v1745 = vpop.permute.xlu0 %1744
        %1746 = vrot.lane.b32.xlu0 %v1149, 111
        %v1747 = vpop.permute.xlu0 %1746
        %1748 = vrot.lane.b32.xlu0 %v1337, 111
        %v1749 = vpop.permute.xlu0 %1748
        %1750 = vrot.lane.b32.xlu0 %v1338, 111
        %v1751 = vpop.permute.xlu0 %1750
        %1752 = vrot.lane.b32.xlu0 %v1339, 111
        %v1753 = vpop.permute.xlu0 %1752
        %1754 = vrot.lane.b32.xlu0 %v1340, 111
        %v1755 = vpop.permute.xlu0 %1754
        %1756 = vrot.lane.b32.xlu0 %v1341, 111
        %v1757 = vpop.permute.xlu0 %1756
        %1758 = vrot.lane.b32.xlu0 %v1342, 111
        %v1759 = vpop.permute.xlu0 %1758
        %1760 = vrot.lane.b32.xlu0 %v1343, 111
        %v1761 = vpop.permute.xlu0 %1760
        %1762 = vrot.lane.b32.xlu0 %v1344, 111
        %v1763 = vpop.permute.xlu0 %1762
        %1764 = vrot.lane.b32.xlu0 %v1167, 111
        %v1765 = vpop.permute.xlu0 %1764
        %1766 = vrot.lane.b32.xlu0 %v1345, 111
        %v1767 = vpop.permute.xlu0 %1766
        %1768 = vrot.lane.b32.xlu0 %v1346, 111
        %v1769 = vpop.permute.xlu0 %1768
        %1770 = vrot.lane.b32.xlu0 %v1347, 111
        %v1771 = vpop.permute.xlu0 %1770
        %1772 = vrot.lane.b32.xlu0 %v1348, 111
        %v1773 = vpop.permute.xlu0 %1772
        %1774 = vrot.lane.b32.xlu0 %v1349, 111
        %v1775 = vpop.permute.xlu0 %1774
        %1776 = vrot.lane.b32.xlu0 %v1350, 111
        %v1777 = vpop.permute.xlu0 %1776
        %1778 = vrot.lane.b32.xlu0 %v1351, 111
        %v1779 = vpop.permute.xlu0 %1778
        %1780 = vrot.lane.b32.xlu0 %v1352, 111
        %v1781 = vpop.permute.xlu0 %1780
        %1782 = vrot.lane.b32.xlu0 %v1185, 111
        %v1783 = vpop.permute.xlu0 %1782
        %1784 = vrot.lane.b32.xlu0 %v1353, 111
        %v1785 = vpop.permute.xlu0 %1784
        %1786 = vrot.lane.b32.xlu0 %v1354, 111
        %v1787 = vpop.permute.xlu0 %1786
        %1788 = vrot.lane.b32.xlu0 %v1355, 111
        %v1789 = vpop.permute.xlu0 %1788
        %1790 = vrot.lane.b32.xlu0 %v1356, 111
        %v1791 = vpop.permute.xlu0 %1790
        %1792 = vrot.lane.b32.xlu0 %v1357, 111
        %v1793 = vpop.permute.xlu0 %1792
        %1794 = vrot.lane.b32.xlu0 %v1358, 111
        %v1795 = vpop.permute.xlu0 %1794
        %1796 = vrot.lane.b32.xlu0 %v1359, 111
        %v1797 = vpop.permute.xlu0 %1796
        %1798 = vrot.lane.b32.xlu0 %v1360, 111
        %v1799 = vpop.permute.xlu0 %1798
        %1800 = vrot.lane.b32.xlu0 %v1203, 111
        %v1801 = vpop.permute.xlu0 %1800
        %1802 = vrot.lane.b32.xlu0 %v1361, 111
        %v1803 = vpop.permute.xlu0 %1802
        %1804 = vrot.lane.b32.xlu0 %v1362, 111
        %v1805 = vpop.permute.xlu0 %1804
        %1806 = vrot.lane.b32.xlu0 %v1363, 111
        %v1807 = vpop.permute.xlu0 %1806
        %1808 = vrot.lane.b32.xlu0 %v1364, 111
        %v1809 = vpop.permute.xlu0 %1808
        %1810 = vrot.lane.b32.xlu0 %v1365, 111
        %v1811 = vpop.permute.xlu0 %1810
        %1812 = vrot.lane.b32.xlu0 %v1366, 111
        %v1813 = vpop.permute.xlu0 %1812
        %1814 = vrot.lane.b32.xlu0 %v1367, 111
        %v1815 = vpop.permute.xlu0 %1814
        %1816 = vrot.lane.b32.xlu0 %v1368, 111
        %v1817 = vpop.permute.xlu0 %1816
        %1818 = vrot.lane.b32.xlu0 %v1221, 111
        %v1819 = vpop.permute.xlu0 %1818
        %1820 = vrot.lane.b32.xlu0 %v1369, 111
        %v1821 = vpop.permute.xlu0 %1820
        %1822 = vrot.lane.b32.xlu0 %v1370, 111
        %v1823 = vpop.permute.xlu0 %1822
        %1824 = vrot.lane.b32.xlu0 %v1371, 111
        %v1825 = vpop.permute.xlu0 %1824
        %1826 = vrot.lane.b32.xlu0 %v1372, 111
        %v1827 = vpop.permute.xlu0 %1826
        %1828 = vrot.lane.b32.xlu0 %v1373, 111
        %v1829 = vpop.permute.xlu0 %1828
        %1830 = vrot.lane.b32.xlu0 %v1374, 111
        %v1831 = vpop.permute.xlu0 %1830
        %1832 = vrot.lane.b32.xlu0 %v1375, 111
        %v1833 = vpop.permute.xlu0 %1832
        %1834 = vrot.lane.b32.xlu0 %v1376, 111
        %v1835 = vpop.permute.xlu0 %1834
        %1836 = vrot.lane.b32.xlu0 %v1239, 111
        %v1837 = vpop.permute.xlu0 %1836
        %1838 = vrot.lane.b32.xlu0 %v1377, 111
        %v1839 = vpop.permute.xlu0 %1838
        %1840 = vrot.lane.b32.xlu0 %v1378, 111
        %v1841 = vpop.permute.xlu0 %1840
        %1842 = vrot.lane.b32.xlu0 %v1379, 111
        %v1843 = vpop.permute.xlu0 %1842
        %1844 = vrot.lane.b32.xlu0 %v1380, 111
        %v1845 = vpop.permute.xlu0 %1844
        %1846 = vrot.lane.b32.xlu0 %v1381, 111
        %v1847 = vpop.permute.xlu0 %1846
        %1848 = vrot.lane.b32.xlu0 %v1382, 111
        %v1849 = vpop.permute.xlu0 %1848
        %1850 = vrot.lane.b32.xlu0 %v1383, 111
        %v1851 = vpop.permute.xlu0 %1850
        %1852 = vrot.lane.b32.xlu0 %v1384, 111
        %v1853 = vpop.permute.xlu0 %1852
        %1854 = vrot.lane.b32.xlu0 %v1257, 111
        %v1855 = vpop.permute.xlu0 %1854
        %1856 = vrot.lane.b32.xlu0 %v1385, 111
        %v1857 = vpop.permute.xlu0 %1856
        %1858 = vrot.lane.b32.xlu0 %v1386, 111
        %v1859 = vpop.permute.xlu0 %1858
        %1860 = vrot.lane.b32.xlu0 %v1387, 111
        %v1861 = vpop.permute.xlu0 %1860
        %1862 = vrot.lane.b32.xlu0 %v1388, 111
        %v1863 = vpop.permute.xlu0 %1862
        %1864 = vrot.lane.b32.xlu0 %v1389, 111
        %v1865 = vpop.permute.xlu0 %1864
        %1866 = vrot.lane.b32.xlu0 %v1390, 111
        %v1867 = vpop.permute.xlu0 %1866
        %1868 = vrot.lane.b32.xlu0 %v1391, 111
        %v1869 = vpop.permute.xlu0 %1868
        %1870 = vrot.lane.b32.xlu0 %v1392, 111
        %v1871 = vpop.permute.xlu0 %1870
        %1872 = vrot.lane.b32.xlu0 %v1275, 111
        %v1873 = vpop.permute.xlu0 %1872
        %1874 = vrot.lane.b32.xlu0 %v1393, 111
        %v1875 = vpop.permute.xlu0 %1874
        %1876 = vrot.lane.b32.xlu0 %v1394, 111
        %v1877 = vpop.permute.xlu0 %1876
        %1878 = vrot.lane.b32.xlu0 %v1395, 111
        %v1879 = vpop.permute.xlu0 %1878
        %1880 = vrot.lane.b32.xlu0 %v1396, 111
        %v1881 = vpop.permute.xlu0 %1880
        %1882 = vrot.lane.b32.xlu0 %v1397, 111
        %v1883 = vpop.permute.xlu0 %1882
        %1884 = vrot.lane.b32.xlu0 %v1398, 111
        %v1885 = vpop.permute.xlu0 %1884
        %1886 = vrot.lane.b32.xlu0 %v1399, 111
        %v1887 = vpop.permute.xlu0 %1886
        %1888 = vrot.lane.b32.xlu0 %v1400, 111
        %v1889 = vpop.permute.xlu0 %1888
        %1890 = vrot.lane.b32.xlu0 %v1293, 111
        %v1891 = vpop.permute.xlu0 %1890
        %1892 = vrot.lane.b32.xlu0 %v1401, 111
        %v1893 = vpop.permute.xlu0 %1892
        %1894 = vrot.lane.b32.xlu0 %v1402, 111
        %v1895 = vpop.permute.xlu0 %1894
        %1896 = vrot.lane.b32.xlu0 %v1403, 111
        %v1897 = vpop.permute.xlu0 %1896
        %1898 = vrot.lane.b32.xlu0 %v1404, 111
        %v1899 = vpop.permute.xlu0 %1898
        %1900 = vrot.lane.b32.xlu0 %v1405, 111
        %v1901 = vpop.permute.xlu0 %1900
        %1902 = vrot.lane.b32.xlu0 %v1406, 111
        %v1903 = vpop.permute.xlu0 %1902
        %1904 = vrot.lane.b32.xlu0 %v1407, 111
        %v1905 = vpop.permute.xlu0 %1904
        %1906 = vrot.lane.b32.xlu0 %v1408, 111
        %v1907 = vpop.permute.xlu0 %1906
        %1908 = vrot.lane.b32.xlu0 %v1311, 111
        %v1909 = vpop.permute.xlu0 %1908
        %1910 = vrot.lane.b32.xlu0 %v1409, 111
        %v1911 = vpop.permute.xlu0 %1910
        %1912 = vrot.lane.b32.xlu0 %v1410, 111
        %v1913 = vpop.permute.xlu0 %1912
        %1914 = vrot.lane.b32.xlu0 %v1411, 111
        %v1915 = vpop.permute.xlu0 %1914
        %1916 = vrot.lane.b32.xlu0 %v1412, 111
        %v1917 = vpop.permute.xlu0 %1916
        %1918 = vrot.lane.b32.xlu0 %v1413, 111
        %v1919 = vpop.permute.xlu0 %1918
        %1920 = vrot.lane.b32.xlu0 %v1414, 111
        %v1921 = vpop.permute.xlu0 %1920
        %1922 = vrot.lane.b32.xlu0 %v1415, 111
        %v1923 = vpop.permute.xlu0 %1922
        %1924 = vrot.lane.b32.xlu0 %v1416, 111
        %v1925 = vpop.permute.xlu0 %1924
        %vm1926 = vcmask 908288
        %v1927 = vsel %vm1926, %v1441, %v1443
        %v1928 = vsel %vm1926, %v1443, %v1445
        %v1929 = vsel %vm1926, %v1445, %v1447
        %v1930 = vsel %vm1926, %v1447, %v1449
        %v1931 = vsel %vm1926, %v1449, %v1451
        %v1932 = vsel %vm1926, %v1451, %v1453
        %v1933 = vsel %vm1926, %v1453, %v1455
        %v1934 = vsel %vm1926, %v1455, %v1457
        %v1935 = vsel %vm1926, %v1459, %v1461
        %v1936 = vsel %vm1926, %v1461, %v1463
        %v1937 = vsel %vm1926, %v1463, %v1465
        %v1938 = vsel %vm1926, %v1465, %v1467
        %v1939 = vsel %vm1926, %v1467, %v1469
        %v1940 = vsel %vm1926, %v1469, %v1471
        %v1941 = vsel %vm1926, %v1471, %v1473
        %v1942 = vsel %vm1926, %v1473, %v1475
        %v1943 = vsel %vm1926, %v1477, %v1479
        %v1944 = vsel %vm1926, %v1479, %v1481
        %v1945 = vsel %vm1926, %v1481, %v1483
        %v1946 = vsel %vm1926, %v1483, %v1485
        %v1947 = vsel %vm1926, %v1485, %v1487
        %v1948 = vsel %vm1926, %v1487, %v1489
        %v1949 = vsel %vm1926, %v1489, %v1491
        %v1950 = vsel %vm1926, %v1491, %v1493
        %v1951 = vsel %vm1926, %v1495, %v1497
        %v1952 = vsel %vm1926, %v1497, %v1499
        %v1953 = vsel %vm1926, %v1499, %v1501
        %v1954 = vsel %vm1926, %v1501, %v1503
        %v1955 = vsel %vm1926, %v1503, %v1505
        %v1956 = vsel %vm1926, %v1505, %v1507
        %v1957 = vsel %vm1926, %v1507, %v1509
        %v1958 = vsel %vm1926, %v1509, %v1511
        %v1959 = vsel %vm1926, %v1513, %v1515
        %v1960 = vsel %vm1926, %v1515, %v1517
        %v1961 = vsel %vm1926, %v1517, %v1519
        %v1962 = vsel %vm1926, %v1519, %v1521
        %v1963 = vsel %vm1926, %v1521, %v1523
        %v1964 = vsel %vm1926, %v1523, %v1525
        %v1965 = vsel %vm1926, %v1525, %v1527
        %v1966 = vsel %vm1926, %v1527, %v1529
        %v1967 = vsel %vm1926, %v1531, %v1533
        %v1968 = vsel %vm1926, %v1533, %v1535
        %v1969 = vsel %vm1926, %v1535, %v1537
        %v1970 = vsel %vm1926, %v1537, %v1539
        %v1971 = vsel %vm1926, %v1539, %v1541
        %v1972 = vsel %vm1926, %v1541, %v1543
        %v1973 = vsel %vm1926, %v1543, %v1545
        %v1974 = vsel %vm1926, %v1545, %v1547
        %v1975 = vsel %vm1926, %v1549, %v1551
        %v1976 = vsel %vm1926, %v1551, %v1553
        %v1977 = vsel %vm1926, %v1553, %v1555
        %v1978 = vsel %vm1926, %v1555, %v1557
        %v1979 = vsel %vm1926, %v1557, %v1559
        %v1980 = vsel %vm1926, %v1559, %v1561
        %v1981 = vsel %vm1926, %v1561, %v1563
        %v1982 = vsel %vm1926, %v1563, %v1565
        %v1983 = vsel %vm1926, %v1567, %v1569
        %v1984 = vsel %vm1926, %v1569, %v1571
        %v1985 = vsel %vm1926, %v1571, %v1573
        %v1986 = vsel %vm1926, %v1573, %v1575
        %v1987 = vsel %vm1926, %v1575, %v1577
        %v1988 = vsel %vm1926, %v1577, %v1579
        %v1989 = vsel %vm1926, %v1579, %v1581
        %v1990 = vsel %vm1926, %v1581, %v1583
        %v1991 = vsel %vm1926, %v1585, %v1587
        %v1992 = vsel %vm1926, %v1587, %v1589
        %v1993 = vsel %vm1926, %v1589, %v1591
        %v1994 = vsel %vm1926, %v1591, %v1593
        %v1995 = vsel %vm1926, %v1593, %v1595
        %v1996 = vsel %vm1926, %v1595, %v1597
        %v1997 = vsel %vm1926, %v1597, %v1599
        %v1998 = vsel %vm1926, %v1599, %v1601
        %v1999 = vsel %vm1926, %v1603, %v1605
        %v2000 = vsel %vm1926, %v1605, %v1607
        %v2001 = vsel %vm1926, %v1607, %v1609
        %v2002 = vsel %vm1926, %v1609, %v1611
        %v2003 = vsel %vm1926, %v1611, %v1613
        %v2004 = vsel %vm1926, %v1613, %v1615
        %v2005 = vsel %vm1926, %v1615, %v1617
        %v2006 = vsel %vm1926, %v1617, %v1619
        %v2007 = vsel %vm1926, %v1621, %v1623
        %v2008 = vsel %vm1926, %v1623, %v1625
        %v2009 = vsel %vm1926, %v1625, %v1627
        %v2010 = vsel %vm1926, %v1627, %v1629
        %v2011 = vsel %vm1926, %v1629, %v1631
        %v2012 = vsel %vm1926, %v1631, %v1633
        %v2013 = vsel %vm1926, %v1633, %v1635
        %v2014 = vsel %vm1926, %v1635, %v1637
        %v2015 = vsel %vm1926, %v1639, %v1641
        %v2016 = vsel %vm1926, %v1641, %v1643
        %v2017 = vsel %vm1926, %v1643, %v1645
        %v2018 = vsel %vm1926, %v1645, %v1647
        %v2019 = vsel %vm1926, %v1647, %v1649
        %v2020 = vsel %vm1926, %v1649, %v1651
        %v2021 = vsel %vm1926, %v1651, %v1653
        %v2022 = vsel %vm1926, %v1653, %v1655
        %v2023 = vsel %vm1926, %v1657, %v1659
        %v2024 = vsel %vm1926, %v1659, %v1661
        %v2025 = vsel %vm1926, %v1661, %v1663
        %v2026 = vsel %vm1926, %v1663, %v1665
        %v2027 = vsel %vm1926, %v1665, %v1667
        %v2028 = vsel %vm1926, %v1667, %v1669
        %v2029 = vsel %vm1926, %v1669, %v1671
        %v2030 = vsel %vm1926, %v1671, %v1673
        %v2031 = vsel %vm1926, %v1675, %v1677
        %v2032 = vsel %vm1926, %v1677, %v1679
        %v2033 = vsel %vm1926, %v1679, %v1681
        %v2034 = vsel %vm1926, %v1681, %v1683
        %v2035 = vsel %vm1926, %v1683, %v1685
        %v2036 = vsel %vm1926, %v1685, %v1687
        %v2037 = vsel %vm1926, %v1687, %v1689
        %v2038 = vsel %vm1926, %v1689, %v1691
        %v2039 = vsel %vm1926, %v1693, %v1695
        %v2040 = vsel %vm1926, %v1695, %v1697
        %v2041 = vsel %vm1926, %v1697, %v1699
        %v2042 = vsel %vm1926, %v1699, %v1701
        %v2043 = vsel %vm1926, %v1701, %v1703
        %v2044 = vsel %vm1926, %v1703, %v1705
        %v2045 = vsel %vm1926, %v1705, %v1707
        %v2046 = vsel %vm1926, %v1707, %v1709
        %v2047 = vsel %vm1926, %v1711, %v1713
        %v2048 = vsel %vm1926, %v1713, %v1715
        %v2049 = vsel %vm1926, %v1715, %v1717
        %v2050 = vsel %vm1926, %v1717, %v1719
        %v2051 = vsel %vm1926, %v1719, %v1721
        %v2052 = vsel %vm1926, %v1721, %v1723
        %v2053 = vsel %vm1926, %v1723, %v1725
        %v2054 = vsel %vm1926, %v1725, %v1727
        %v2055 = vsel %vm1926, %v1729, %v1731
        %v2056 = vsel %vm1926, %v1731, %v1733
        %v2057 = vsel %vm1926, %v1733, %v1735
        %v2058 = vsel %vm1926, %v1735, %v1737
        %v2059 = vsel %vm1926, %v1737, %v1739
        %v2060 = vsel %vm1926, %v1739, %v1741
        %v2061 = vsel %vm1926, %v1741, %v1743
        %v2062 = vsel %vm1926, %v1743, %v1745
        %v2063 = vsel %vm1926, %v1747, %v1749
        %v2064 = vsel %vm1926, %v1749, %v1751
        %v2065 = vsel %vm1926, %v1751, %v1753
        %v2066 = vsel %vm1926, %v1753, %v1755
        %v2067 = vsel %vm1926, %v1755, %v1757
        %v2068 = vsel %vm1926, %v1757, %v1759
        %v2069 = vsel %vm1926, %v1759, %v1761
        %v2070 = vsel %vm1926, %v1761, %v1763
        %v2071 = vsel %vm1926, %v1765, %v1767
        %v2072 = vsel %vm1926, %v1767, %v1769
        %v2073 = vsel %vm1926, %v1769, %v1771
        %v2074 = vsel %vm1926, %v1771, %v1773
        %v2075 = vsel %vm1926, %v1773, %v1775
        %v2076 = vsel %vm1926, %v1775, %v1777
        %v2077 = vsel %vm1926, %v1777, %v1779
        %v2078 = vsel %vm1926, %v1779, %v1781
        %v2079 = vsel %vm1926, %v1783, %v1785
        %v2080 = vsel %vm1926, %v1785, %v1787
        %v2081 = vsel %vm1926, %v1787, %v1789
        %v2082 = vsel %vm1926, %v1789, %v1791
        %v2083 = vsel %vm1926, %v1791, %v1793
        %v2084 = vsel %vm1926, %v1793, %v1795
        %v2085 = vsel %vm1926, %v1795, %v1797
        %v2086 = vsel %vm1926, %v1797, %v1799
        %v2087 = vsel %vm1926, %v1801, %v1803
        %v2088 = vsel %vm1926, %v1803, %v1805
        %v2089 = vsel %vm1926, %v1805, %v1807
        %v2090 = vsel %vm1926, %v1807, %v1809
        %v2091 = vsel %vm1926, %v1809, %v1811
        %v2092 = vsel %vm1926, %v1811, %v1813
        %v2093 = vsel %vm1926, %v1813, %v1815
        %v2094 = vsel %vm1926, %v1815, %v1817
        %v2095 = vsel %vm1926, %v1819, %v1821
        %v2096 = vsel %vm1926, %v1821, %v1823
        %v2097 = vsel %vm1926, %v1823, %v1825
        %v2098 = vsel %vm1926, %v1825, %v1827
        %v2099 = vsel %vm1926, %v1827, %v1829
        %v2100 = vsel %vm1926, %v1829, %v1831
        %v2101 = vsel %vm1926, %v1831, %v1833
        %v2102 = vsel %vm1926, %v1833, %v1835
        %v2103 = vsel %vm1926, %v1837, %v1839
        %v2104 = vsel %vm1926, %v1839, %v1841
        %v2105 = vsel %vm1926, %v1841, %v1843
        %v2106 = vsel %vm1926, %v1843, %v1845
        %v2107 = vsel %vm1926, %v1845, %v1847
        %v2108 = vsel %vm1926, %v1847, %v1849
        %v2109 = vsel %vm1926, %v1849, %v1851
        %v2110 = vsel %vm1926, %v1851, %v1853
        %v2111 = vsel %vm1926, %v1855, %v1857
        %v2112 = vsel %vm1926, %v1857, %v1859
        %v2113 = vsel %vm1926, %v1859, %v1861
        %v2114 = vsel %vm1926, %v1861, %v1863
        %v2115 = vsel %vm1926, %v1863, %v1865
        %v2116 = vsel %vm1926, %v1865, %v1867
        %v2117 = vsel %vm1926, %v1867, %v1869
        %v2118 = vsel %vm1926, %v1869, %v1871
        %v2119 = vsel %vm1926, %v1873, %v1875
        %v2120 = vsel %vm1926, %v1875, %v1877
        %v2121 = vsel %vm1926, %v1877, %v1879
        %v2122 = vsel %vm1926, %v1879, %v1881
        %v2123 = vsel %vm1926, %v1881, %v1883
        %v2124 = vsel %vm1926, %v1883, %v1885
        %v2125 = vsel %vm1926, %v1885, %v1887
        %v2126 = vsel %vm1926, %v1887, %v1889
        %v2127 = vsel %vm1926, %v1891, %v1893
        %v2128 = vsel %vm1926, %v1893, %v1895
        %v2129 = vsel %vm1926, %v1895, %v1897
        %v2130 = vsel %vm1926, %v1897, %v1899
        %v2131 = vsel %vm1926, %v1899, %v1901
        %v2132 = vsel %vm1926, %v1901, %v1903
        %v2133 = vsel %vm1926, %v1903, %v1905
        %v2134 = vsel %vm1926, %v1905, %v1907
        %v2135 = vsel %vm1926, %v1909, %v1911
        %v2136 = vsel %vm1926, %v1911, %v1913
        %v2137 = vsel %vm1926, %v1913, %v1915
        %v2138 = vsel %vm1926, %v1915, %v1917
        %v2139 = vsel %vm1926, %v1917, %v1919
        %v2140 = vsel %vm1926, %v1919, %v1921
        %v2141 = vsel %vm1926, %v1921, %v1923
        %v2142 = vsel %vm1926, %v1923, %v1925
        %vm2359 = vcmask 392192
        %v2361 = vsel %vm2359, %v1436, 0
        %2363 = vmatprep.subr.bf16.mxu0 %v1928
        %2364 = vmatpush1.bf16.msra.mxu0 %v1927
        %2365 = vmatprep.subr.bf16.mxu0 %v1936
        %2366 = vmatpush1.bf16.msra.mxu0 %v1935
        %2367 = vmatprep.subr.bf16.mxu0 %v1944
        %2368 = vmatpush1.bf16.msra.mxu0 %v1943
        %2369 = vmatprep.subr.bf16.mxu0 %v1952
        %2370 = vmatpush1.bf16.msra.mxu0 %v1951
        %2371 = vmatprep.subr.bf16.mxu0 %v1960
        %2372 = vmatpush1.bf16.msra.mxu0 %v1959
        %2373 = vmatprep.subr.bf16.mxu0 %v1968
        %2374 = vmatpush1.bf16.msra.mxu0 %v1967
        %2375 = vmatprep.subr.bf16.mxu0 %v1976
        %2376 = vmatpush1.bf16.msra.mxu0 %v1975
        %2377 = vmatprep.subr.bf16.mxu0 %v1984
        %2378 = vmatpush1.bf16.msra.mxu0 %v1983
        %2379 = vmatprep.subr.bf16.mxu0 %v1992
        %2380 = vmatpush1.bf16.msra.mxu0 %v1991
        %2381 = vmatprep.subr.bf16.mxu0 %v2000
        %2382 = vmatpush1.bf16.msra.mxu0 %v1999
        %2383 = vmatprep.subr.bf16.mxu0 %v2008
        %2384 = vmatpush1.bf16.msra.mxu0 %v2007
        %2385 = vmatprep.subr.bf16.mxu0 %v2016
        %2386 = vmatpush1.bf16.msra.mxu0 %v2015
        %2387 = vmatprep.subr.bf16.mxu0 %v2024
        %2388 = vmatpush1.bf16.msra.mxu0 %v2023
        %2389 = vmatprep.subr.bf16.mxu0 %v2032
        %2390 = vmatpush1.bf16.msra.mxu0 %v2031
        %2391 = vmatprep.subr.bf16.mxu0 %v2040
        %2392 = vmatpush1.bf16.msra.mxu0 %v2039
        %2393 = vmatprep.subr.bf16.mxu0 %v2048
        %2394 = vmatpush1.bf16.msra.mxu0 %v2047
        %2395 = vmatprep.mubr.bf16.mxu0 %v1434
        %2396 = vmatmul.mubr.bf16.gmra.mrb[0].mxu0 %v1433
        %v2397 = vpop.f32.mrb[0].mxu0
        %v2398 = vadd.f32 0.0, %v2397
        %v2399 = vpop.f32.mrb[0].mxu0
        %v2400 = vadd.f32 0.0, %v2399
        %v2401 = vpop.f32.mrb[0].mxu0
        %v2402 = vadd.f32 0.0, %v2401
        %v2403 = vpop.f32.mrb[0].mxu0
        %v2404 = vadd.f32 0.0, %v2403
        %2405 = vdwg.mxu0
        %2406 = vmatprep.subr.bf16.mxu0 %v2056
        %2407 = vmatpush1.bf16.msra.mxu0 %v2055
        %2408 = vmatprep.subr.bf16.mxu0 %v2064
        %2409 = vmatpush1.bf16.msra.mxu0 %v2063
        %2410 = vmatprep.subr.bf16.mxu0 %v2072
        %2411 = vmatpush1.bf16.msra.mxu0 %v2071
        %2412 = vmatprep.subr.bf16.mxu0 %v2080
        %2413 = vmatpush1.bf16.msra.mxu0 %v2079
        %2414 = vmatprep.subr.bf16.mxu0 %v2088
        %2415 = vmatpush1.bf16.msra.mxu0 %v2087
        %2416 = vmatprep.subr.bf16.mxu0 %v2096
        %2417 = vmatpush1.bf16.msra.mxu0 %v2095
        %2418 = vmatprep.subr.bf16.mxu0 %v2104
        %2419 = vmatpush1.bf16.msra.mxu0 %v2103
        %2420 = vmatprep.subr.bf16.mxu0 %v2112
        %2421 = vmatpush1.bf16.msra.mxu0 %v2111
        %2422 = vmatprep.subr.bf16.mxu0 %v2120
        %2423 = vmatpush1.bf16.msra.mxu0 %v2119
        %2424 = vmatprep.subr.bf16.mxu0 %v2128
        %2425 = vmatpush1.bf16.msra.mxu0 %v2127
        %2426 = vmatprep.subr.bf16.mxu0 %v2136
        %2427 = vmatpush1.bf16.msra.mxu0 %v2135
        %2428 = vmatprep.subr.bf16.mxu0 0
        %2429 = vmatpush1.bf16.msra.mxu0 0
        %2430 = vmatprep.subr.bf16.mxu0 0
        %2431 = vmatpush1.bf16.msra.mxu0 0
        %2432 = vmatprep.subr.bf16.mxu0 0
        %2433 = vmatpush1.bf16.msra.mxu0 0
        %2434 = vmatprep.subr.bf16.mxu0 0
        %2435 = vmatpush1.bf16.msra.mxu0 0
        %2436 = vmatprep.subr.bf16.mxu0 0
        %2437 = vmatpush1.bf16.msra.mxu0 0
        %2438 = vmatprep.mubr.bf16.mxu0 %v2361
        %2439 = vmatmul.mubr.bf16.gmra.mrb[0].mxu0 %v1435
        %v2440 = vpop.f32.mrb[0].mxu0
        %v2441 = vadd.f32 %v2398, %v2440
        %v2442 = vpop.f32.mrb[0].mxu0
        %v2443 = vadd.f32 %v2400, %v2442
        %v2444 = vpop.f32.mrb[0].mxu0
        %v2445 = vadd.f32 %v2402, %v2444
        %v2446 = vpop.f32.mrb[0].mxu0
        %v2447 = vadd.f32 %v2404, %v2446
        %2448 = vdwg.mxu0
        %2449 = vmatprep.subr.bf16.mxu0 %v1930
        %2450 = vmatpush1.bf16.msra.mxu0 %v1929
        %2451 = vmatprep.subr.bf16.mxu0 %v1938
        %2452 = vmatpush1.bf16.msra.mxu0 %v1937
        %2453 = vmatprep.subr.bf16.mxu0 %v1946
        %2454 = vmatpush1.bf16.msra.mxu0 %v1945
        %2455 = vmatprep.subr.bf16.mxu0 %v1954
        %2456 = vmatpush1.bf16.msra.mxu0 %v1953
        %2457 = vmatprep.subr.bf16.mxu0 %v1962
        %2458 = vmatpush1.bf16.msra.mxu0 %v1961
        %2459 = vmatprep.subr.bf16.mxu0 %v1970
        %2460 = vmatpush1.bf16.msra.mxu0 %v1969
        %2461 = vmatprep.subr.bf16.mxu0 %v1978
        %2462 = vmatpush1.bf16.msra.mxu0 %v1977
        %2463 = vmatprep.subr.bf16.mxu0 %v1986
        %2464 = vmatpush1.bf16.msra.mxu0 %v1985
        %2465 = vmatprep.subr.bf16.mxu0 %v1994
        %2466 = vmatpush1.bf16.msra.mxu0 %v1993
        %2467 = vmatprep.subr.bf16.mxu0 %v2002
        %2468 = vmatpush1.bf16.msra.mxu0 %v2001
        %2469 = vmatprep.subr.bf16.mxu0 %v2010
        %2470 = vmatpush1.bf16.msra.mxu0 %v2009
        %2471 = vmatprep.subr.bf16.mxu0 %v2018
        %2472 = vmatpush1.bf16.msra.mxu0 %v2017
        %2473 = vmatprep.subr.bf16.mxu0 %v2026
        %2474 = vmatpush1.bf16.msra.mxu0 %v2025
        %2475 = vmatprep.subr.bf16.mxu0 %v2034
        %2476 = vmatpush1.bf16.msra.mxu0 %v2033
        %2477 = vmatprep.subr.bf16.mxu0 %v2042
        %2478 = vmatpush1.bf16.msra.mxu0 %v2041
        %2479 = vmatprep.subr.bf16.mxu0 %v2050
        %2480 = vmatpush1.bf16.msra.mxu0 %v2049
        %2481 = vmatprep.mubr.bf16.mxu0 %v1434
        %2482 = vmatmul.mubr.bf16.gmra.mrb[0].mxu0 %v1433
        %v2483 = vpop.f32.mrb[0].mxu0
        %v2484 = vadd.f32 0.0, %v2483
        %v2485 = vpop.f32.mrb[0].mxu0
        %v2486 = vadd.f32 0.0, %v2485
        %v2487 = vpop.f32.mrb[0].mxu0
        %v2488 = vadd.f32 0.0, %v2487
        %v2489 = vpop.f32.mrb[0].mxu0
        %v2490 = vadd.f32 0.0, %v2489
        %2491 = vdwg.mxu0
        %2492 = vmatprep.subr.bf16.mxu0 %v2058
        %2493 = vmatpush1.bf16.msra.mxu0 %v2057
        %2494 = vmatprep.subr.bf16.mxu0 %v2066
        %2495 = vmatpush1.bf16.msra.mxu0 %v2065
        %2496 = vmatprep.subr.bf16.mxu0 %v2074
        %2497 = vmatpush1.bf16.msra.mxu0 %v2073
        %2498 = vmatprep.subr.bf16.mxu0 %v2082
        %2499 = vmatpush1.bf16.msra.mxu0 %v2081
        %2500 = vmatprep.subr.bf16.mxu0 %v2090
        %2501 = vmatpush1.bf16.msra.mxu0 %v2089
        %2502 = vmatprep.subr.bf16.mxu0 %v2098
        %2503 = vmatpush1.bf16.msra.mxu0 %v2097
        %2504 = vmatprep.subr.bf16.mxu0 %v2106
        %2505 = vmatpush1.bf16.msra.mxu0 %v2105
        %2506 = vmatprep.subr.bf16.mxu0 %v2114
        %2507 = vmatpush1.bf16.msra.mxu0 %v2113
        %2508 = vmatprep.subr.bf16.mxu0 %v2122
        %2509 = vmatpush1.bf16.msra.mxu0 %v2121
        %2510 = vmatprep.subr.bf16.mxu0 %v2130
        %2511 = vmatpush1.bf16.msra.mxu0 %v2129
        %2512 = vmatprep.subr.bf16.mxu0 %v2138
        %2513 = vmatpush1.bf16.msra.mxu0 %v2137
        %2514 = vmatprep.subr.bf16.mxu0 0
        %2515 = vmatpush1.bf16.msra.mxu0 0
        %2516 = vmatprep.subr.bf16.mxu0 0
        %2517 = vmatpush1.bf16.msra.mxu0 0
        %2518 = vmatprep.subr.bf16.mxu0 0
        %2519 = vmatpush1.bf16.msra.mxu0 0
        %2520 = vmatprep.subr.bf16.mxu0 0
        %2521 = vmatpush1.bf16.msra.mxu0 0
        %2522 = vmatprep.subr.bf16.mxu0 0
        %2523 = vmatpush1.bf16.msra.mxu0 0
        %2524 = vmatprep.mubr.bf16.mxu0 %v2361
        %2525 = vmatmul.mubr.bf16.gmra.mrb[0].mxu0 %v1435
        %v2526 = vpop.f32.mrb[0].mxu0
        %v2527 = vadd.f32 %v2484, %v2526
        %v2528 = vpop.f32.mrb[0].mxu0
        %v2529 = vadd.f32 %v2486, %v2528
        %v2530 = vpop.f32.mrb[0].mxu0
        %v2531 = vadd.f32 %v2488, %v2530
        %v2532 = vpop.f32.mrb[0].mxu0
        %v2533 = vadd.f32 %v2490, %v2532
        %2534 = vdwg.mxu0
        %2535 = vmatprep.subr.bf16.mxu0 %v1932
        %2536 = vmatpush1.bf16.msra.mxu0 %v1931
        %2537 = vmatprep.subr.bf16.mxu0 %v1940
        %2538 = vmatpush1.bf16.msra.mxu0 %v1939
        %2539 = vmatprep.subr.bf16.mxu0 %v1948
        %2540 = vmatpush1.bf16.msra.mxu0 %v1947
        %2541 = vmatprep.subr.bf16.mxu0 %v1956
        %2542 = vmatpush1.bf16.msra.mxu0 %v1955
        %2543 = vmatprep.subr.bf16.mxu0 %v1964
        %2544 = vmatpush1.bf16.msra.mxu0 %v1963
        %2545 = vmatprep.subr.bf16.mxu0 %v1972
        %2546 = vmatpush1.bf16.msra.mxu0 %v1971
        %2547 = vmatprep.subr.bf16.mxu0 %v1980
        %2548 = vmatpush1.bf16.msra.mxu0 %v1979
        %2549 = vmatprep.subr.bf16.mxu0 %v1988
        %2550 = vmatpush1.bf16.msra.mxu0 %v1987
        %2551 = vmatprep.subr.bf16.mxu0 %v1996
        %2552 = vmatpush1.bf16.msra.mxu0 %v1995
        %2553 = vmatprep.subr.bf16.mxu0 %v2004
        %2554 = vmatpush1.bf16.msra.mxu0 %v2003
        %2555 = vmatprep.subr.bf16.mxu0 %v2012
        %2556 = vmatpush1.bf16.msra.mxu0 %v2011
        %2557 = vmatprep.subr.bf16.mxu0 %v2020
        %2558 = vmatpush1.bf16.msra.mxu0 %v2019
        %2559 = vmatprep.subr.bf16.mxu0 %v2028
        %2560 = vmatpush1.bf16.msra.mxu0 %v2027
        %2561 = vmatprep.subr.bf16.mxu0 %v2036
        %2562 = vmatpush1.bf16.msra.mxu0 %v2035
        %2563 = vmatprep.subr.bf16.mxu0 %v2044
        %2564 = vmatpush1.bf16.msra.mxu0 %v2043
        %2565 = vmatprep.subr.bf16.mxu0 %v2052
        %2566 = vmatpush1.bf16.msra.mxu0 %v2051
        %2567 = vmatprep.mubr.bf16.mxu0 %v1434
        %2568 = vmatmul.mubr.bf16.gmra.mrb[0].mxu0 %v1433
        %v2569 = vpop.f32.mrb[0].mxu0
        %v2570 = vadd.f32 0.0, %v2569
        %v2571 = vpop.f32.mrb[0].mxu0
        %v2572 = vadd.f32 0.0, %v2571
        %v2573 = vpop.f32.mrb[0].mxu0
        %v2574 = vadd.f32 0.0, %v2573
        %v2575 = vpop.f32.mrb[0].mxu0
        %v2576 = vadd.f32 0.0, %v2575
        %2577 = vdwg.mxu0
        %2578 = vmatprep.subr.bf16.mxu0 %v2060
        %2579 = vmatpush1.bf16.msra.mxu0 %v2059
        %2580 = vmatprep.subr.bf16.mxu0 %v2068
        %2581 = vmatpush1.bf16.msra.mxu0 %v2067
        %2582 = vmatprep.subr.bf16.mxu0 %v2076
        %2583 = vmatpush1.bf16.msra.mxu0 %v2075
        %2584 = vmatprep.subr.bf16.mxu0 %v2084
        %2585 = vmatpush1.bf16.msra.mxu0 %v2083
        %2586 = vmatprep.subr.bf16.mxu0 %v2092
        %2587 = vmatpush1.bf16.msra.mxu0 %v2091
        %2588 = vmatprep.subr.bf16.mxu0 %v2100
        %2589 = vmatpush1.bf16.msra.mxu0 %v2099
        %2590 = vmatprep.subr.bf16.mxu0 %v2108
        %2591 = vmatpush1.bf16.msra.mxu0 %v2107
        %2592 = vmatprep.subr.bf16.mxu0 %v2116
        %2593 = vmatpush1.bf16.msra.mxu0 %v2115
        %2594 = vmatprep.subr.bf16.mxu0 %v2124
        %2595 = vmatpush1.bf16.msra.mxu0 %v2123
        %2596 = vmatprep.subr.bf16.mxu0 %v2132
        %2597 = vmatpush1.bf16.msra.mxu0 %v2131
        %2598 = vmatprep.subr.bf16.mxu0 %v2140
        %2599 = vmatpush1.bf16.msra.mxu0 %v2139
        %2600 = vmatprep.subr.bf16.mxu0 0
        %2601 = vmatpush1.bf16.msra.mxu0 0
        %2602 = vmatprep.subr.bf16.mxu0 0
        %2603 = vmatpush1.bf16.msra.mxu0 0
        %2604 = vmatprep.subr.bf16.mxu0 0
        %2605 = vmatpush1.bf16.msra.mxu0 0
        %2606 = vmatprep.subr.bf16.mxu0 0
        %2607 = vmatpush1.bf16.msra.mxu0 0
        %2608 = vmatprep.subr.bf16.mxu0 0
        %2609 = vmatpush1.bf16.msra.mxu0 0
        %2610 = vmatprep.mubr.bf16.mxu0 %v2361
        %2611 = vmatmul.mubr.bf16.gmra.mrb[0].mxu0 %v1435
        %v2612 = vpop.f32.mrb[0].mxu0
        %v2613 = vadd.f32 %v2570, %v2612
        %v2614 = vpop.f32.mrb[0].mxu0
        %v2615 = vadd.f32 %v2572, %v2614
        %v2616 = vpop.f32.mrb[0].mxu0
        %v2617 = vadd.f32 %v2574, %v2616
        %v2618 = vpop.f32.mrb[0].mxu0
        %v2619 = vadd.f32 %v2576, %v2618
        %2620 = vdwg.mxu0
        %2621 = vmatprep.subr.bf16.mxu0 %v1934
        %2622 = vmatpush1.bf16.msra.mxu0 %v1933
        %2623 = vmatprep.subr.bf16.mxu0 %v1942
        %2624 = vmatpush1.bf16.msra.mxu0 %v1941
        %2625 = vmatprep.subr.bf16.mxu0 %v1950
        %2626 = vmatpush1.bf16.msra.mxu0 %v1949
        %2627 = vmatprep.subr.bf16.mxu0 %v1958
        %2628 = vmatpush1.bf16.msra.mxu0 %v1957
        %2629 = vmatprep.subr.bf16.mxu0 %v1966
        %2630 = vmatpush1.bf16.msra.mxu0 %v1965
        %2631 = vmatprep.subr.bf16.mxu0 %v1974
        %2632 = vmatpush1.bf16.msra.mxu0 %v1973
        %2633 = vmatprep.subr.bf16.mxu0 %v1982
        %2634 = vmatpush1.bf16.msra.mxu0 %v1981
        %2635 = vmatprep.subr.bf16.mxu0 %v1990
        %2636 = vmatpush1.bf16.msra.mxu0 %v1989
        %2637 = vmatprep.subr.bf16.mxu0 %v1998
        %2638 = vmatpush1.bf16.msra.mxu0 %v1997
        %2639 = vmatprep.subr.bf16.mxu0 %v2006
        %2640 = vmatpush1.bf16.msra.mxu0 %v2005
        %2641 = vmatprep.subr.bf16.mxu0 %v2014
        %2642 = vmatpush1.bf16.msra.mxu0 %v2013
        %2643 = vmatprep.subr.bf16.mxu0 %v2022
        %2644 = vmatpush1.bf16.msra.mxu0 %v2021
        %2645 = vmatprep.subr.bf16.mxu0 %v2030
        %2646 = vmatpush1.bf16.msra.mxu0 %v2029
        %2647 = vmatprep.subr.bf16.mxu0 %v2038
        %2648 = vmatpush1.bf16.msra.mxu0 %v2037
        %2649 = vmatprep.subr.bf16.mxu0 %v2046
        %2650 = vmatpush1.bf16.msra.mxu0 %v2045
        %2651 = vmatprep.subr.bf16.mxu0 %v2054
        %2652 = vmatpush1.bf16.msra.mxu0 %v2053
        %2653 = vmatprep.mubr.bf16.mxu0 %v1434
        %2654 = vmatmul.mubr.bf16.gmra.mrb[0].mxu0 %v1433
        %v2655 = vpop.f32.mrb[0].mxu0
        %v2656 = vadd.f32 0.0, %v2655
        %v2657 = vpop.f32.mrb[0].mxu0
        %v2658 = vadd.f32 0.0, %v2657
        %v2659 = vpop.f32.mrb[0].mxu0
        %v2660 = vadd.f32 0.0, %v2659
        %v2661 = vpop.f32.mrb[0].mxu0
        %v2662 = vadd.f32 0.0, %v2661
        %2663 = vdwg.mxu0
        %2664 = vmatprep.subr.bf16.mxu0 %v2062
        %2665 = vmatpush1.bf16.msra.mxu0 %v2061
        %2666 = vmatprep.subr.bf16.mxu0 %v2070
        %2667 = vmatpush1.bf16.msra.mxu0 %v2069
        %2668 = vmatprep.subr.bf16.mxu0 %v2078
        %2669 = vmatpush1.bf16.msra.mxu0 %v2077
        %2670 = vmatprep.subr.bf16.mxu0 %v2086
        %2671 = vmatpush1.bf16.msra.mxu0 %v2085
        %2672 = vmatprep.subr.bf16.mxu0 %v2094
        %2673 = vmatpush1.bf16.msra.mxu0 %v2093
        %2674 = vmatprep.subr.bf16.mxu0 %v2102
        %2675 = vmatpush1.bf16.msra.mxu0 %v2101
        %2676 = vmatprep.subr.bf16.mxu0 %v2110
        %2677 = vmatpush1.bf16.msra.mxu0 %v2109
        %2678 = vmatprep.subr.bf16.mxu0 %v2118
        %2679 = vmatpush1.bf16.msra.mxu0 %v2117
        %2680 = vmatprep.subr.bf16.mxu0 %v2126
        %2681 = vmatpush1.bf16.msra.mxu0 %v2125
        %2682 = vmatprep.subr.bf16.mxu0 %v2134
        %2683 = vmatpush1.bf16.msra.mxu0 %v2133
        %2684 = vmatprep.subr.bf16.mxu0 %v2142
        %2685 = vmatpush1.bf16.msra.mxu0 %v2141
        %2686 = vmatprep.subr.bf16.mxu0 0
        %2687 = vmatpush1.bf16.msra.mxu0 0
        %2688 = vmatprep.subr.bf16.mxu0 0
        %2689 = vmatpush1.bf16.msra.mxu0 0
        %2690 = vmatprep.subr.bf16.mxu0 0
        %2691 = vmatpush1.bf16.msra.mxu0 0
        %2692 = vmatprep.subr.bf16.mxu0 0
        %2693 = vmatpush1.bf16.msra.mxu0 0
        %2694 = vmatprep.subr.bf16.mxu0 0
        %2695 = vmatpush1.bf16.msra.mxu0 0
        %2696 = vmatprep.mubr.bf16.mxu0 %v2361
        %2697 = vmatmul.mubr.bf16.gmra.mrb[0].mxu0 %v1435
        %v2698 = vpop.f32.mrb[0].mxu0
        %v2699 = vadd.f32 %v2656, %v2698
        %v2700 = vpop.f32.mrb[0].mxu0
        %v2701 = vadd.f32 %v2658, %v2700
        %v2702 = vpop.f32.mrb[0].mxu0
        %v2703 = vadd.f32 %v2660, %v2702
        %v2704 = vpop.f32.mrb[0].mxu0
        %v2705 = vadd.f32 %v2662, %v2704
        %2706 = vdwg.mxu0
        %v2707 = vld [vmem:[%s472] sm:$0xff]
        %v2709 = vlaneseq
        %v2710 = vshrl.u32 %v2709, 7
        %v2711 = vsub.s32 0, %v2710
        %v2712 = vrot.slane %v2707, %v2711
        %v2713 = vlaneseq
        %v2714 = vshrl.u32 %v2713, 7
        %v2715 = vsub.s32 1, %v2714
        %v2716 = vrot.slane %v2707, %v2715
        %v2717 = vlaneseq
        %v2718 = vshrl.u32 %v2717, 7
        %v2719 = vsub.s32 2, %v2718
        %v2720 = vrot.slane %v2707, %v2719
        %v2721 = vlaneseq
        %v2722 = vshrl.u32 %v2721, 7
        %v2723 = vsub.s32 3, %v2722
        %v2724 = vrot.slane %v2707, %v2723
        %v2725 = vlaneseq
        %v2726 = vshrl.u32 %v2725, 7
        %v2727 = vsub.s32 4, %v2726
        %v2728 = vrot.slane %v2707, %v2727
        %v2729 = vlaneseq
        %v2730 = vshrl.u32 %v2729, 7
        %v2731 = vsub.s32 5, %v2730
        %v2732 = vrot.slane %v2707, %v2731
        %v2733 = vlaneseq
        %v2734 = vshrl.u32 %v2733, 7
        %v2735 = vsub.s32 6, %v2734
        %v2736 = vrot.slane %v2707, %v2735
        %v2737 = vlaneseq
        %v2738 = vshrl.u32 %v2737, 7
        %v2739 = vsub.s32 7, %v2738
        %v2740 = vrot.slane %v2707, %v2739
        %v2749 = vmul.f32 %v2441, %v2712
        %v2750 = vmul.f32 %v2443, %v2716
        %v2751 = vmul.f32 %v2527, %v2720
        %v2752 = vmul.f32 %v2529, %v2724
        %v2753 = vmul.f32 %v2613, %v2728
        %v2754 = vmul.f32 %v2615, %v2732
        %v2755 = vmul.f32 %v2699, %v2736
        %v2756 = vmul.f32 %v2701, %v2740
        %v2757 = vmul.f32 %v2445, %v2712
        %v2758 = vmul.f32 %v2447, %v2716
        %v2759 = vmul.f32 %v2531, %v2720
        %v2760 = vmul.f32 %v2533, %v2724
        %v2761 = vmul.f32 %v2617, %v2728
        %v2762 = vmul.f32 %v2619, %v2732
        %v2763 = vmul.f32 %v2703, %v2736
        %v2764 = vmul.f32 %v2705, %v2740
        %v2765 = vpack.c.bf16 %v2757, %v2749
        %v2766 = vpack.c.bf16 %v2758, %v2750
        %v2767 = vpack.c.bf16 %v2759, %v2751
        %v2768 = vpack.c.bf16 %v2760, %v2752
        %v2769 = vpack.c.bf16 %v2761, %v2753
        %v2770 = vpack.c.bf16 %v2762, %v2754
        %v2771 = vpack.c.bf16 %v2763, %v2755
        %v2772 = vpack.c.bf16 %v2764, %v2756
        %v2781 = vunpack.c.l.b16 %v2765
        %v2782 = vunpack.c.l.b16 %v2766
        %v2783 = vunpack.c.l.b16 %v2767
        %v2784 = vunpack.c.l.b16 %v2768
        %v2785 = vunpack.c.l.b16 %v2769
        %v2786 = vunpack.c.l.b16 %v2770
        %v2787 = vunpack.c.l.b16 %v2771
        %v2788 = vunpack.c.l.b16 %v2772
        %v2789 = vunpack.c.h.b16 %v2765
        %v2790 = vunpack.c.h.b16 %v2766
        %v2791 = vunpack.c.h.b16 %v2767
        %v2792 = vunpack.c.h.b16 %v2768
        %v2793 = vunpack.c.h.b16 %v2769
        %v2794 = vunpack.c.h.b16 %v2770
        %v2795 = vunpack.c.h.b16 %v2771
        %v2796 = vunpack.c.h.b16 %v2772
        %v2797 = vpack.c.b16 %v2782, %v2781
        %v2798 = vpack.c.b16 %v2784, %v2783
        %v2799 = vpack.c.b16 %v2786, %v2785
        %v2800 = vpack.c.b16 %v2788, %v2787
        %v2801 = vpack.c.b16 %v2790, %v2789
        %v2802 = vpack.c.b16 %v2792, %v2791
        %v2803 = vpack.c.b16 %v2794, %v2793
        %v2804 = vpack.c.b16 %v2796, %v2795
        %2813 = vst [vmem:[%s447] sm:$0xff] %v2797
        %2814 = vst [vmem:[%s447 + $0x8] sm:$0xff] %v2798
        %2815 = vst [vmem:[%s447 + $0x10] sm:$0xff] %v2799
        %2816 = vst [vmem:[%s447 + $0x18] sm:$0xff] %v2800
        %2817 = vst [vmem:[%s447 + $0x20] sm:$0xff] %v2801
        %2818 = vst [vmem:[%s447 + $0x28] sm:$0xff] %v2802
        %2819 = vst [vmem:[%s447 + $0x30] sm:$0xff] %v2803
        %2820 = vst [vmem:[%s447 + $0x38] sm:$0xff] %v2804
        %v2821 = vadd.f32 %v2749, %v2750
        %v2822 = vadd.f32 %v2821, %v2751
        %v2823 = vadd.f32 %v2822, %v2752
        %v2824 = vadd.f32 %v2823, %v2753
        %v2825 = vadd.f32 %v2824, %v2754
        %v2826 = vadd.f32 %v2825, %v2755
        %v2827 = vadd.f32 %v2826, %v2756
        %2828 = vadd.xlane.f32.xlu0 %v2827
        %v2829 = vpop.xlane.xlu0 %2828
        %v2830 = vadd.f32 %v2757, %v2758
        %v2831 = vadd.f32 %v2830, %v2759
        %v2832 = vadd.f32 %v2831, %v2760
        %v2833 = vadd.f32 %v2832, %v2761
        %v2834 = vadd.f32 %v2833, %v2762
        %v2835 = vadd.f32 %v2834, %v2763
        %v2836 = vadd.f32 %v2835, %v2764
        %2837 = vadd.xlane.f32.xlu0 %v2836
        %v2838 = vpop.xlane.xlu0 %2837
        %2839 = vst [vmem:[%s453] sm:$0xff] %v2829
        %2840 = vst [vmem:[%s453 + $0x8] sm:$0xff] %v2838
        %v2841 = vmul.f32 %v2749, %v2749
        %v2842 = vmul.f32 %v2750, %v2750
        %v2843 = vmul.f32 %v2751, %v2751
        %v2844 = vmul.f32 %v2752, %v2752
        %v2845 = vmul.f32 %v2753, %v2753
        %v2846 = vmul.f32 %v2754, %v2754
        %v2847 = vmul.f32 %v2755, %v2755
        %v2848 = vmul.f32 %v2756, %v2756
        %v2849 = vmul.f32 %v2757, %v2757
        %v2850 = vmul.f32 %v2758, %v2758
        %v2851 = vmul.f32 %v2759, %v2759
        %v2852 = vmul.f32 %v2760, %v2760
        %v2853 = vmul.f32 %v2761, %v2761
        %v2854 = vmul.f32 %v2762, %v2762
        %v2855 = vmul.f32 %v2763, %v2763
        %v2856 = vmul.f32 %v2764, %v2764
        %v2857 = vadd.f32 %v2841, %v2842
        %v2858 = vadd.f32 %v2857, %v2843
        %v2859 = vadd.f32 %v2858, %v2844
        %v2860 = vadd.f32 %v2859, %v2845
        %v2861 = vadd.f32 %v2860, %v2846
        %v2862 = vadd.f32 %v2861, %v2847
        %v2863 = vadd.f32 %v2862, %v2848
        %2864 = vadd.xlane.f32.xlu0 %v2863
        %v2865 = vpop.xlane.xlu0 %2864
        %v2866 = vadd.f32 %v2849, %v2850
        %v2867 = vadd.f32 %v2866, %v2851
        %v2868 = vadd.f32 %v2867, %v2852
        %v2869 = vadd.f32 %v2868, %v2853
        %v2870 = vadd.f32 %v2869, %v2854
        %v2871 = vadd.f32 %v2870, %v2855
        %v2872 = vadd.f32 %v2871, %v2856
        %2873 = vadd.xlane.f32.xlu0 %v2872
        %v2874 = vpop.xlane.xlu0 %2873
        %2875 = vst [vmem:[%s459] sm:$0xff] %v2865
        %2876 = vst [vmem:[%s459 + $0x8] sm:$0xff] %v2874
        %s2877 = sand.u32 %s164, 1
        %s2878 = sand.u32 %s164, 1
        %s2879 = smul.addr %s2878, 64
        %s2880 = scalar_lea.vmem [#allocation5], %s2879
        %s2881 = sand.u32 %s190, 1
        %s2882 = sand.u32 %s190, 1
        %s2883 = smul.addr %s2882, 16
        %s2884 = scalar_lea.vmem [#allocation6], %s2883
        %s2885 = sand.u32 %s216, 1
        %s2886 = sand.u32 %s216, 1
        %s2887 = smul.addr %s2886, 16
        %s2888 = scalar_lea.vmem [#allocation7], %s2887
        // Predicated region
        $region110: #{multi_up_forward.4} parent=96 // pred_check
          %p2889 = pneg %p174
        $region111: #{multi_up_forward.4} parent=96 // pred_check_branch
          %2891 = sbr.rel (%p2889) target = $region113
        $region112: #{multi_up_forward.4} parent=96 // pred_region
          %s2892 = smul.u32 8, %s19
          %s2893 = smul.addr %s2892, 4
          %s2894 = scalar_lea.vmem %s5, %s2893
          // Predicated region
          $region114: #{multi_up_forward.4} parent=112 // pred_check
            _
          $region115: #{multi_up_forward.4} parent=112 // pred_check_branch
            %2896 = sbr.rel (0) target = $region117
          $region116: #{multi_up_forward.4} parent=112 // pred_region
            // Predicated region
            $region118: #{multi_up_forward.4} parent=116 // pred_check
              _
            $region119: #{multi_up_forward.4} parent=116 // pred_check_branch
              %2898 = sbr.rel (0) target = $region121
            $region120: #{multi_up_forward.4} parent=116 // pred_region
              loop: start=0, step=1, limit=1
              $region122: #{multi_up_forward.4} parent=120 // loop_pre_header
                _
              $region123: #{multi_up_forward.4} parent=120 // loop_header
                %s2900 = sphi 0, %s2904
                %p2901 = scmp.ge.s32.totalorder %s2900, 1
                %s2905 = sphi %s2880, %s2880
                %s2906 = sphi %s2894, %s2894
              $region124: #{multi_up_forward.4} parent=120 // loop_header_branch
                %2903 = sbr.rel (%p2901) target = $region128
              $region125: #{multi_up_forward.4} parent=120 // loop_body
                %v2907 = vld [vmem:[%s2905] sm:$0xff]
                %2908 = vst [vmem:[%s2906] sm:$0xff] %v2907
                %v2909 = vld [vmem:[%s2905 + $0x8] sm:$0xff]
                %2910 = vst [vmem:[%s2906 + $0x8] sm:$0xff] %v2909
                %v2911 = vld [vmem:[%s2905 + $0x10] sm:$0xff]
                %2912 = vst [vmem:[%s2906 + $0x10] sm:$0xff] %v2911
                %v2913 = vld [vmem:[%s2905 + $0x18] sm:$0xff]
                %2914 = vst [vmem:[%s2906 + $0x18] sm:$0xff] %v2913
                %v2915 = vld [vmem:[%s2905 + $0x20] sm:$0xff]
                %2916 = vst [vmem:[%s2906 + $0x40] sm:$0xff] %v2915
                %v2917 = vld [vmem:[%s2905 + $0x28] sm:$0xff]
                %2918 = vst [vmem:[%s2906 + $0x48] sm:$0xff] %v2917
                %v2919 = vld [vmem:[%s2905 + $0x30] sm:$0xff]
                %2920 = vst [vmem:[%s2906 + $0x50] sm:$0xff] %v2919
                %v2921 = vld [vmem:[%s2905 + $0x38] sm:$0xff]
                %2922 = vst [vmem:[%s2906 + $0x58] sm:$0xff] %v2921
              $region126: #{multi_up_forward.4} parent=120 // loop_footer
                %s2904 = sadd.s32 1, %s2900
              $region127: #{multi_up_forward.4} parent=120 // loop_footer_branch
                %2899 = sbr.rel target = $region123
              $region128: #{multi_up_forward.4} parent=120 // loop_exit
                _
            $region121: #{multi_up_forward.4} parent=116 // pred_fallthru
              _
            // Predicated region
            $region129: #{multi_up_forward.4} parent=116 // pred_check
              _
            $region130: #{multi_up_forward.4} parent=116 // pred_check_branch
              %2924 = sbr.rel target = $region132
            $region131: #{multi_up_forward.4} parent=116 // pred_region
              _
            $region132: #{multi_up_forward.4} parent=116 // pred_fallthru
              _
          $region117: #{multi_up_forward.4} parent=112 // pred_fallthru
            _
          %2925 = vnop
        $region113: #{multi_up_forward.4} parent=96 // pred_fallthru
          _
        // Predicated region
        $region133: #{multi_up_forward.4} parent=96 // pred_check
          %p2926 = pneg %p200
        $region134: #{multi_up_forward.4} parent=96 // pred_check_branch
          %2928 = sbr.rel (%p2926) target = $region136
        $region135: #{multi_up_forward.4} parent=96 // pred_region
          %s2929 = smul.addr %s19, 8
          %s2930 = scalar_lea.vmem %s6, %s2929
          // Predicated region
          $region137: #{multi_up_forward.4} parent=135 // pred_check
            _
          $region138: #{multi_up_forward.4} parent=135 // pred_check_branch
            %2932 = sbr.rel (0) target = $region140
          $region139: #{multi_up_forward.4} parent=135 // pred_region
            // Predicated region
            $region141: #{multi_up_forward.4} parent=139 // pred_check
              _
            $region142: #{multi_up_forward.4} parent=139 // pred_check_branch
              %2934 = sbr.rel (0) target = $region144
            $region143: #{multi_up_forward.4} parent=139 // pred_region
              // Predicated region
              $region156: #{multi_up_forward.4} parent=143 // pred_check
                _
              $region157: #{multi_up_forward.4} parent=143 // pred_check_branch
                %2951 = sbr.rel (0) target = $region159
              $region158: #{multi_up_forward.4} parent=143 // pred_region
                loop: start=0, step=1, limit=1
                $region160: #{multi_up_forward.4} parent=158 // loop_pre_header
                  _
                $region161: #{multi_up_forward.4} parent=158 // loop_header
                  %s2953 = sphi 0, %s2957
                  %p2954 = scmp.ge.s32.totalorder %s2953, 1
                  %s2958 = sphi %s2884, %s2884
                  %s2959 = sphi %s2930, %s2930
                $region162: #{multi_up_forward.4} parent=158 // loop_header_branch
                  %2956 = sbr.rel (%p2954) target = $region166
                $region163: #{multi_up_forward.4} parent=158 // loop_body
                  %v2960 = vld [vmem:[%s2958] sm:$0xff]
                  %2961 = vst [vmem:[%s2959] sm:$0xff] %v2960
                  %v2962 = vld [vmem:[%s2958 + $0x8] sm:$0xff]
                  %2963 = vst [vmem:[%s2959 + $0x10] sm:$0xff] %v2962
                $region164: #{multi_up_forward.4} parent=158 // loop_footer
                  %s2957 = sadd.s32 1, %s2953
                $region165: #{multi_up_forward.4} parent=158 // loop_footer_branch
                  %2952 = sbr.rel target = $region161
                $region166: #{multi_up_forward.4} parent=158 // loop_exit
                  _
              $region159: #{multi_up_forward.4} parent=143 // pred_fallthru
                _
              // Predicated region
              $region167: #{multi_up_forward.4} parent=143 // pred_check
                _
              $region168: #{multi_up_forward.4} parent=143 // pred_check_branch
                %2965 = sbr.rel target = $region170
              $region169: #{multi_up_forward.4} parent=143 // pred_region
                _
              $region170: #{multi_up_forward.4} parent=143 // pred_fallthru
                _
            $region144: #{multi_up_forward.4} parent=139 // pred_fallthru
              _
            // Predicated region
            $region145: #{multi_up_forward.4} parent=139 // pred_check
              _
            $region146: #{multi_up_forward.4} parent=139 // pred_check_branch
              %2936 = sbr.rel target = $region148
            $region147: #{multi_up_forward.4} parent=139 // pred_region
              loop: start=0, step=1, limit=1
              $region149: #{multi_up_forward.4} parent=147 // loop_pre_header
                _
              $region150: #{multi_up_forward.4} parent=147 // loop_header
                %s2939 = sphi 0, %s2943
                %p2940 = scmp.ge.s32.totalorder %s2939, 1
                %s2944 = sphi %s2884, %s2884
                %s2945 = sphi %s2930, %s2930
              $region151: #{multi_up_forward.4} parent=147 // loop_header_branch
                %2942 = sbr.rel (%p2940) target = $region155
              $region152: #{multi_up_forward.4} parent=147 // loop_body
                %v2946 = vld [vmem:[%s2944] sm:$0xff]
                %2947 = vst [vmem:[%s2945] sm:$0xff] %v2946
                %v2948 = vld [vmem:[%s2944 + $0x8] sm:$0xff]
                %2949 = vst [vmem:[%s2945 + $0x10] sm:$0xff] %v2948
              $region153: #{multi_up_forward.4} parent=147 // loop_footer
                %s2943 = sadd.s32 1, %s2939
              $region154: #{multi_up_forward.4} parent=147 // loop_footer_branch
                %2938 = sbr.rel target = $region150
              $region155: #{multi_up_forward.4} parent=147 // loop_exit
                _
            $region148: #{multi_up_forward.4} parent=139 // pred_fallthru
              _
          $region140: #{multi_up_forward.4} parent=135 // pred_fallthru
            _
          %2966 = vnop
        $region136: #{multi_up_forward.4} parent=96 // pred_fallthru
          _
        // Predicated region
        $region171: #{multi_up_forward.4} parent=96 // pred_check
          %p2967 = pneg %p226
        $region172: #{multi_up_forward.4} parent=96 // pred_check_branch
          %2969 = sbr.rel (%p2967) target = $region174
        $region173: #{multi_up_forward.4} parent=96 // pred_region
          %s2970 = smul.addr %s19, 8
          %s2971 = scalar_lea.vmem %s7, %s2970
          // Predicated region
          $region175: #{multi_up_forward.4} parent=173 // pred_check
            _
          $region176: #{multi_up_forward.4} parent=173 // pred_check_branch
            %2973 = sbr.rel (0) target = $region178
          $region177: #{multi_up_forward.4} parent=173 // pred_region
            // Predicated region
            $region179: #{multi_up_forward.4} parent=177 // pred_check
              _
            $region180: #{multi_up_forward.4} parent=177 // pred_check_branch
              %2975 = sbr.rel (0) target = $region182
            $region181: #{multi_up_forward.4} parent=177 // pred_region
              // Predicated region
              $region194: #{multi_up_forward.4} parent=181 // pred_check
                _
              $region195: #{multi_up_forward.4} parent=181 // pred_check_branch
                %2992 = sbr.rel (0) target = $region197
              $region196: #{multi_up_forward.4} parent=181 // pred_region
                loop: start=0, step=1, limit=1
                $region198: #{multi_up_forward.4} parent=196 // loop_pre_header
                  _
                $region199: #{multi_up_forward.4} parent=196 // loop_header
                  %s2994 = sphi 0, %s2998
                  %p2995 = scmp.ge.s32.totalorder %s2994, 1
                  %s2999 = sphi %s2888, %s2888
                  %s3000 = sphi %s2971, %s2971
                $region200: #{multi_up_forward.4} parent=196 // loop_header_branch
                  %2997 = sbr.rel (%p2995) target = $region204
                $region201: #{multi_up_forward.4} parent=196 // loop_body
                  %v3001 = vld [vmem:[%s2999] sm:$0xff]
                  %3002 = vst [vmem:[%s3000] sm:$0xff] %v3001
                  %v3003 = vld [vmem:[%s2999 + $0x8] sm:$0xff]
                  %3004 = vst [vmem:[%s3000 + $0x10] sm:$0xff] %v3003
                $region202: #{multi_up_forward.4} parent=196 // loop_footer
                  %s2998 = sadd.s32 1, %s2994
                $region203: #{multi_up_forward.4} parent=196 // loop_footer_branch
                  %2993 = sbr.rel target = $region199
                $region204: #{multi_up_forward.4} parent=196 // loop_exit
                  _
              $region197: #{multi_up_forward.4} parent=181 // pred_fallthru
                _
              // Predicated region
              $region205: #{multi_up_forward.4} parent=181 // pred_check
                _
              $region206: #{multi_up_forward.4} parent=181 // pred_check_branch
                %3006 = sbr.rel target = $region208
              $region207: #{multi_up_forward.4} parent=181 // pred_region
                _
              $region208: #{multi_up_forward.4} parent=181 // pred_fallthru
                _
            $region182: #{multi_up_forward.4} parent=177 // pred_fallthru
              _
            // Predicated region
            $region183: #{multi_up_forward.4} parent=177 // pred_check
              _
            $region184: #{multi_up_forward.4} parent=177 // pred_check_branch
              %2977 = sbr.rel target = $region186
            $region185: #{multi_up_forward.4} parent=177 // pred_region
              loop: start=0, step=1, limit=1
              $region187: #{multi_up_forward.4} parent=185 // loop_pre_header
                _
              $region188: #{multi_up_forward.4} parent=185 // loop_header
                %s2980 = sphi 0, %s2984
                %p2981 = scmp.ge.s32.totalorder %s2980, 1
                %s2985 = sphi %s2888, %s2888
                %s2986 = sphi %s2971, %s2971
              $region189: #{multi_up_forward.4} parent=185 // loop_header_branch
                %2983 = sbr.rel (%p2981) target = $region193
              $region190: #{multi_up_forward.4} parent=185 // loop_body
                %v2987 = vld [vmem:[%s2985] sm:$0xff]
                %2988 = vst [vmem:[%s2986] sm:$0xff] %v2987
                %v2989 = vld [vmem:[%s2985 + $0x8] sm:$0xff]
                %2990 = vst [vmem:[%s2986 + $0x10] sm:$0xff] %v2989
              $region191: #{multi_up_forward.4} parent=185 // loop_footer
                %s2984 = sadd.s32 1, %s2980
              $region192: #{multi_up_forward.4} parent=185 // loop_footer_branch
                %2979 = sbr.rel target = $region188
              $region193: #{multi_up_forward.4} parent=185 // loop_exit
                _
            $region186: #{multi_up_forward.4} parent=177 // pred_fallthru
              _
          $region178: #{multi_up_forward.4} parent=173 // pred_fallthru
            _
          %3007 = vnop
        $region174: #{multi_up_forward.4} parent=96 // pred_fallthru
          _
      $region97: #{multi_up_forward.4} parent=5 // pred_fallthru
        _
      %p3008 = scmp.le.s32.totalorder 2, %s14
      // Predicated region
      $region209: #{multi_up_forward.4} parent=5 // pred_check
        %p3009 = pneg %p3008
      $region210: #{multi_up_forward.4} parent=5 // pred_check_branch
        %3011 = sbr.rel (%p3009) target = $region212
      $region211: #{multi_up_forward.4} parent=5 // pred_region
        %s3012 = ssub.s32 %s14, 2
        // Predicated region
        $region213: #{multi_up_forward.4} parent=211 // pred_check
          %p3013 = pneg %p180
        $region214: #{multi_up_forward.4} parent=211 // pred_check_branch
          %3015 = sbr.rel (%p3013) target = $region216
        $region215: #{multi_up_forward.4} parent=211 // pred_region
          %s3016 = sand.u32 %s165, 1
          %s3017 = sand.u32 %s165, 1
          %s3018 = smul.addr %s3017, 64
          %s3019 = scalar_lea.vmem [#allocation5], %s3018
        $region216: #{multi_up_forward.4} parent=211 // pred_fallthru
          _
        // Predicated region
        $region217: #{multi_up_forward.4} parent=211 // pred_check
          %p3020 = pneg %p206
        $region218: #{multi_up_forward.4} parent=211 // pred_check_branch
          %3022 = sbr.rel (%p3020) target = $region220
        $region219: #{multi_up_forward.4} parent=211 // pred_region
          %s3023 = sand.u32 %s191, 1
          %s3024 = sand.u32 %s191, 1
          %s3025 = smul.addr %s3024, 16
          %s3026 = scalar_lea.vmem [#allocation6], %s3025
        $region220: #{multi_up_forward.4} parent=211 // pred_fallthru
          _
        // Predicated region
        $region221: #{multi_up_forward.4} parent=211 // pred_check
          %p3027 = pneg %p232
        $region222: #{multi_up_forward.4} parent=211 // pred_check_branch
          %3029 = sbr.rel (%p3027) target = $region224
        $region223: #{multi_up_forward.4} parent=211 // pred_region
          %s3030 = sand.u32 %s217, 1
          %s3031 = sand.u32 %s217, 1
          %s3032 = smul.addr %s3031, 16
          %s3033 = scalar_lea.vmem [#allocation7], %s3032
        $region224: #{multi_up_forward.4} parent=211 // pred_fallthru
          _
      $region212: #{multi_up_forward.4} parent=5 // pred_fallthru
        _
    $region6: #{multi_up_forward.4} parent=1 // loop_footer
      %s18 = sadd.s32 1, %s14
    $region7: #{multi_up_forward.4} parent=1 // loop_footer_branch
      %13 = sbr.rel target = $region3
    $region8: #{multi_up_forward.4} parent=1 // loop_exit
      _

</llo_original>
